<compile_context>
chip_gen: v6e
topology: v6e:2x2x1
jax: 0.10.0
libtpu: 0.0.40
codegen_flags: <defaults>
</compile_context>

<pallas_src>
import jax
import jax.numpy as jnp
from jax.experimental import pallas as pl
from jax.experimental.pallas import tpu as pltpu

LATENT_DIM = 128     # stand-in for 2048 (ResNeXt feature width) at small scale
HIDDEN_DIM = 128     # stand-in for 2048 (LSTM hidden)
NUM_CLASSES = 2
# Safe on all of v5e/v6e/v7x at these shapes.  TODO(synk): at production scale
# re-budget per generation (raise toward ~96 MiB on v5e/v6e; on v7x keep
# 2*K*S*4H*dtype + W_hh well under 64 MiB).
VMEM_LIMIT_BYTES = 32 * 1024 * 1024


def _largest_divisor_tile(n, cap):
    """Largest t <= cap with n % t == 0 and t a sublane multiple (or t == n)."""
    for t in range(min(n, cap), 0, -1):
        if n % t == 0 and (t % 8 == 0 or t == n):
            return t
    return n


# ---------------- backbone + avgpool + hoisted LSTM input projection ----------------
def backbone_gates_kernel(x_ref, ws_ref, bs_ref, wih_ref, bl_ref, out_ref):
    # TODO(synk): the pretrained ResNeXt50-32x4d backbone is not reproduced; it is
    # replaced by a deterministic pointwise C->D projection fused with the
    # AdaptiveAvgPool2d(1) that immediately follows it in the original forward.
    x = x_ref[...]                                       # (TN, C*HW), dense lane axis
    C = ws_ref.shape[0]
    HW = x.shape[-1] // C
    # AdaptiveAvgPool2d(1) + C-term stem projection on the VPU/XLU: per-channel
    # spatial mean (lane reduction) then one broadcast FMA per channel.  A
    # (TN,3)@(3,D) dot would use only 3 MXU rows, so the MXU is skipped here.
    feats = bs_ref[...]                                  # (1, D), broadcasts below
    for c in range(C):                                   # C == 3, static unroll
        pooled_c = jnp.mean(x[:, c * HW:(c + 1) * HW], axis=-1, keepdims=True)  # (TN, 1)
        feats = feats + pooled_c * ws_ref[c:c + 1, :]    # (TN,1)*(1,D) -> (TN,D)
    # Hoisted LSTM input projection (time-parallel, off the serial recurrence):
    # bf16 MXU operands, f32 accumulation, bf16 store of the (TN, 4H) block.
    # TODO(synk): at production scale (H=2048) tile the 4H axis as well
    # (grid=(N//TN, G//TG), W_ih block (D, TG)) so weight blocks fit v7x VMEM.
    gates = jnp.dot(feats.astype(jnp.bfloat16), wih_ref[...],
                    preferred_element_type=jnp.float32) + bl_ref[...]
    out_ref[...] = gates.astype(out_ref.dtype)


def backbone_gates_forward(x2d, w_stem, b_stem, w_ih, b_lstm, *, row_cap=512):
    N, CHW = x2d.shape
    C, D = w_stem.shape
    G = w_ih.shape[1]                                    # 4 * hidden
    # Largest row tile that divides N while keeping the grid length >= 2 so the
    # "parallel" axis can shard across v7x's two TensorCores.
    TN = _largest_divisor_tile(N, min(row_cap, max(N // 2, 1))) if N >= 16 else N
    return pl.pallas_call(
        backbone_gates_kernel,
        out_shape=jax.ShapeDtypeStruct((N, G), jnp.bfloat16),
        grid=(N // TN,),
        in_specs=[
            pl.BlockSpec((TN, CHW), lambda i: (i, 0)),
            pl.BlockSpec((C, D), lambda i: (0, 0)),
            pl.BlockSpec((1, D), lambda i: (0, 0)),
            pl.BlockSpec((D, G), lambda i: (0, 0)),
            pl.BlockSpec((1, G), lambda i: (0, 0)),
        ],
        out_specs=pl.BlockSpec((TN, G), lambda i: (i, 0)),
        compiler_params=pltpu.CompilerParams(
            dimension_semantics=("parallel",),
            vmem_limit_bytes=VMEM_LIMIT_BYTES,
        ),
    )(x2d, w_stem, b_stem, w_ih.astype(jnp.bfloat16), b_lstm)


# ------------------- LSTM recurrence (h @ W_hh only) + fused mean-pool --------------
def lstm_pool_kernel(gx_ref, whh_hbm, out_ref, h_scr, c_scr, whh_vmem, dma_sem):
    t = pl.program_id(1)                                 # time-block axis (inner)
    K = out_ref.shape[1]                                 # timesteps per grid step
    Hd = h_scr.shape[-1]

    def gate_update(gates, c):
        # PyTorch gate order i, f, g, o.  Elementwise math stays f32 (v5e's
        # VPU/EUP have no bf16 path); only the MXU operands are bf16.
        i_g = jax.nn.sigmoid(gates[:, 0:Hd])
        f_g = jax.nn.sigmoid(gates[:, Hd:2 * Hd])
        g_g = jnp.tanh(gates[:, 2 * Hd:3 * Hd])
        o_g = jax.nn.sigmoid(gates[:, 3 * Hd:4 * Hd])
        c = f_g * c + i_g * g_g
        h = o_g * jnp.tanh(c)
        return h, c

    def run_block(h, c, *, hide_dma):
        # Static unroll over K timesteps: amortizes per-grid-step overhead and lets
        # the scheduler overlap step-k EUP/VPU gate math with step-(k+1) MXU work.
        # TODO(synk): at production H (2048) chunk the 4H gate axis per dot and use
        # lax.fori_loop(unroll=True) to bound vreg live ranges.
        rows = []
        for k in range(K):
            gx = gx_ref[k].astype(jnp.float32)           # (S_c, 4H), bf16 -> f32
            if hide_dma and k == 0:
                gates = gx                               # h == 0 on the very first step
            else:
                if hide_dma and k == 1:
                    # W_hh DMA was issued at block entry; its latency hides behind
                    # the dot-free step-0 gate math above.
                    pltpu.make_async_copy(whh_hbm, whh_vmem, dma_sem).wait()
                gates = gx + jnp.dot(h.astype(jnp.bfloat16), whh_vmem[...],
                                     preferred_element_type=jnp.float32)
            h, c = gate_update(gates, c)
            # Fused torch.mean(lstm_out, dim=1): partial SUM over this core's S rows;
            # the wrapper divides by the full S.
            rows.append(jnp.sum(h, axis=0, keepdims=True))
        if hide_dma and K == 1:
            pltpu.make_async_copy(whh_hbm, whh_vmem, dma_sem).wait()
        h_scr[...] = h
        c_scr[...] = c
        # ONE dense (1, K, H) store per block instead of K sublane-masked row stores.
        out_ref[...] = jnp.concatenate(rows, axis=0)[None]

    @pl.when(t == 0)
    def _first_block():
        # Resident-weight scheme: DMA W_hh once per core into a single bf16 VMEM
        # buffer (no pipeline double-buffering of a constant block) and overlap the
        # transfer with the dot-free first timestep.
        pltpu.make_async_copy(whh_hbm, whh_vmem, dma_sem).start()
        z = jnp.zeros(h_scr.shape, jnp.float32)
        run_block(z, z, hide_dma=True)

    @pl.when(t != 0)
    def _later_blocks():
        run_block(h_scr[...], c_scr[...], hide_dma=False)


def lstm_pool_forward(gates_x, w_hh, *, steps_per_block=8):
    # gates_x: (T, S, 4H).  T is the LSTM time axis (== the module's batch_size),
    # S is the LSTM batch axis (== seq_length) -- the seq-first nn.LSTM quirk.
    T, S, G = gates_x.shape
    Hd = w_hh.shape[0]
    K = _largest_divisor_tile(T, steps_per_block)
    # Split the independent LSTM batch axis S across TensorCores (v7x megacore);
    # on single-TC chips the leading "parallel" axis just iterates serially.
    ncores = 2 if (S % 2 == 0 and (S // 2) % 8 == 0) else 1
    Sc = S // ncores
    parts = pl.pallas_call(
        lstm_pool_kernel,
        out_shape=jax.ShapeDtypeStruct((ncores, T, Hd), jnp.float32),
        grid=(ncores, T // K),
        in_specs=[
            pl.BlockSpec((K, Sc, G), lambda s, t: (t, s, 0)),
            pl.BlockSpec(memory_space=pl.ANY),           # W_hh stays in HBM; DMA once
        ],
        out_specs=pl.BlockSpec((1, K, Hd), lambda s, t: (s, t, 0)),
        scratch_shapes=[
            pltpu.VMEM((Sc, Hd), jnp.float32),           # h state (carried over time blocks)
            pltpu.VMEM((Sc, Hd), jnp.float32),           # c state
            pltpu.VMEM((Hd, G), jnp.bfloat16),           # resident W_hh (single copy)
            pltpu.SemaphoreType.DMA(()),
        ],
        compiler_params=pltpu.CompilerParams(
            dimension_semantics=("parallel", "arbitrary"),  # recurrence axis is serial
            vmem_limit_bytes=VMEM_LIMIT_BYTES,
        ),
    )(gates_x, w_hh.astype(jnp.bfloat16))
    # Combine per-core partial sums -> mean over the full S batch rows.
    return parts.sum(axis=0) / S


# --------------------------------- full forward -------------------------------------
def deepfake_detector_forward(x, params):
    B, S, C, H, W = x.shape
    N = B * S
    # x.view(B*S, C, H, W) flattened to (N, C*HW): a pure reshape of NCHW, so the
    # dense C*HW axis maps to lanes with no padding and no transpose pass.
    x2d = x.reshape(N, C * H * W)
    gates_x = backbone_gates_forward(
        x2d, params["w_stem"], params["b_stem"], params["w_ih"], params["b_lstm"])
    gates_x = gates_x.reshape(B, S, 4 * HIDDEN_DIM)      # == features.view(B,S,.) @ W_ih + b
    hbar = lstm_pool_forward(gates_x, params["w_hh"])    # (B, H) = mean_s lstm_out[b, s]
    # Final nn.Linear(hidden, num_classes): trivial (B,H)@(H,2); a 2-wide kernel
    # output would be lane-masked partial stores, so it is left to XLA.
    # TODO(synk): nn.Dropout(0.4) is stochastic only in train mode; eval-mode
    # (identity) semantics are implemented here.
    return hbar @ params["w_lin"] + params["b_lin"]


def init_params(key):
    ks = jax.random.split(key, 6)
    scale = 0.05
    return {
        # pointwise-conv backbone stand-in: C -> LATENT_DIM
        "w_stem": scale * jax.random.normal(ks[0], (3, LATENT_DIM), jnp.float32),
        "b_stem": scale * jax.random.normal(ks[1], (1, LATENT_DIM), jnp.float32),
        # LSTM params, stored transposed for (x @ W) matmuls; gate order i,f,g,o;
        # b_lstm stands for the combined b_ih + b_hh.
        "w_ih": scale * jax.random.normal(ks[2], (LATENT_DIM, 4 * HIDDEN_DIM), jnp.float32),
        "w_hh": scale * jax.random.normal(ks[3], (HIDDEN_DIM, 4 * HIDDEN_DIM), jnp.float32),
        "b_lstm": scale * jax.random.normal(ks[4], (1, 4 * HIDDEN_DIM), jnp.float32),
        # final classifier
        "w_lin": scale * jax.random.normal(ks[5], (HIDDEN_DIM, NUM_CLASSES), jnp.float32),
        "b_lin": jnp.zeros((1, NUM_CLASSES), jnp.float32),
    }


if __name__ == "__main__":
    key = jax.random.PRNGKey(0)
    k_x, k_p = jax.random.split(key)
    # Small shapes consistent with the module: batch=16, seq=16, 3x16x16 frames.
    # (batch is the LSTM time axis here due to the seq-first quirk; 16 gives the
    # recurrence a 2-block time grid with 8 unrolled steps per block, and seq=16
    # lets the S axis split cleanly across two TensorCores.)
    B, S, C, Himg, Wimg = 16, 16, 3, 16, 16
    x = jax.random.normal(k_x, (B, S, C, Himg, Wimg), jnp.float32)
    params = init_params(k_p)

    fwd = jax.jit(deepfake_detector_forward)
    out = jax.block_until_ready(fwd(x, params))
    assert out.shape == (B, NUM_CLASSES), out.shape
    assert bool(jnp.all(jnp.isfinite(out)))
    print("KERNEL_OK")
</pallas_src>

<mosaic_0001>
module attributes {stable_mosaic.version = 11 : i64} {
  func.func @backbone_gates_kernel(%arg0: i32, %arg1: memref<128x768xf32, #tpu.memory_space<vmem>>, %arg2: memref<3x128xf32, #tpu.memory_space<vmem>>, %arg3: memref<1x128xf32, #tpu.memory_space<vmem>>, %arg4: memref<128x512xbf16, #tpu.memory_space<vmem>>, %arg5: memref<1x512xf32, #tpu.memory_space<vmem>>, %arg6: memref<128x512xbf16, #tpu.memory_space<vmem>>) attributes {dimension_semantics = [#tpu.dimension_semantics<parallel>], iteration_bounds = array<i64: 2>, scalar_prefetch = 0 : i64, scratch_operands = 0 : i64, tpu.core_type = #tpu.core_type<tc>, window_params = [{transform_indices = @transform_0, window_bounds = array<i64: 128, 768>}, {pipeline_mode = #tpu.pipeline_mode<synchronous>, transform_indices = @transform_1, window_bounds = array<i64: 3, 128>}, {pipeline_mode = #tpu.pipeline_mode<synchronous>, transform_indices = @transform_2, window_bounds = array<i64: 1, 128>}, {pipeline_mode = #tpu.pipeline_mode<synchronous>, transform_indices = @transform_3, window_bounds = array<i64: 128, 512>}, {pipeline_mode = #tpu.pipeline_mode<synchronous>, transform_indices = @transform_4, window_bounds = array<i64: 1, 512>}, {transform_indices = @transform_5, window_bounds = array<i64: 128, 512>}]} {
    %c0 = arith.constant 0 : index
    %c0_0 = arith.constant 0 : index
    %0 = vector.load %arg1[%c0, %c0_0] : memref<128x768xf32, #tpu.memory_space<vmem>>, vector<128x768xf32>
    %c0_1 = arith.constant 0 : index
    %c0_2 = arith.constant 0 : index
    %1 = vector.load %arg3[%c0_1, %c0_2] : memref<1x128xf32, #tpu.memory_space<vmem>>, vector<1x128xf32>
    %2 = vector.extract_strided_slice %0 {offsets = [0, 0], sizes = [128, 256], strides = [1, 1]} : vector<128x768xf32> to vector<128x256xf32>
    %cst = arith.constant dense<0.000000e+00> : vector<128xf32>
    %3 = vector.multi_reduction <add>, %2, %cst [1] : vector<128x256xf32> to vector<128xf32>
    %4 = vector.shape_cast %3 : vector<128xf32> to vector<128x1xf32>
    %cst_3 = arith.constant 2.560000e+02 : f32
    %5 = vector.broadcast %cst_3 : f32 to vector<128x1xf32>
    %6 = arith.divf %4, %5 : vector<128x1xf32>
    %c0_4 = arith.constant 0 : index
    %c0_5 = arith.constant 0 : index
    %7 = vector.load %arg2[%c0_4, %c0_5] : memref<3x128xf32, #tpu.memory_space<vmem>>, vector<1x128xf32>
    %8 = vector.broadcast %6 : vector<128x1xf32> to vector<128x128xf32>
    %9 = vector.broadcast %7 : vector<1x128xf32> to vector<128x128xf32>
    %10 = arith.mulf %8, %9 : vector<128x128xf32>
    %11 = vector.broadcast %1 : vector<1x128xf32> to vector<128x128xf32>
    %12 = arith.addf %11, %10 : vector<128x128xf32>
    %13 = vector.extract_strided_slice %0 {offsets = [0, 256], sizes = [128, 256], strides = [1, 1]} : vector<128x768xf32> to vector<128x256xf32>
    %cst_6 = arith.constant dense<0.000000e+00> : vector<128xf32>
    %14 = vector.multi_reduction <add>, %13, %cst_6 [1] : vector<128x256xf32> to vector<128xf32>
    %15 = vector.shape_cast %14 : vector<128xf32> to vector<128x1xf32>
    %cst_7 = arith.constant 2.560000e+02 : f32
    %16 = vector.broadcast %cst_7 : f32 to vector<128x1xf32>
    %17 = arith.divf %15, %16 : vector<128x1xf32>
    %c1 = arith.constant 1 : index
    %c0_8 = arith.constant 0 : index
    %18 = vector.load %arg2[%c1, %c0_8] : memref<3x128xf32, #tpu.memory_space<vmem>>, vector<1x128xf32>
    %19 = vector.broadcast %17 : vector<128x1xf32> to vector<128x128xf32>
    %20 = vector.broadcast %18 : vector<1x128xf32> to vector<128x128xf32>
    %21 = arith.mulf %19, %20 : vector<128x128xf32>
    %22 = arith.addf %12, %21 : vector<128x128xf32>
    %23 = vector.extract_strided_slice %0 {offsets = [0, 512], sizes = [128, 256], strides = [1, 1]} : vector<128x768xf32> to vector<128x256xf32>
    %cst_9 = arith.constant dense<0.000000e+00> : vector<128xf32>
    %24 = vector.multi_reduction <add>, %23, %cst_9 [1] : vector<128x256xf32> to vector<128xf32>
    %25 = vector.shape_cast %24 : vector<128xf32> to vector<128x1xf32>
    %cst_10 = arith.constant 2.560000e+02 : f32
    %26 = vector.broadcast %cst_10 : f32 to vector<128x1xf32>
    %27 = arith.divf %25, %26 : vector<128x1xf32>
    %c2 = arith.constant 2 : index
    %c0_11 = arith.constant 0 : index
    %28 = vector.load %arg2[%c2, %c0_11] : memref<3x128xf32, #tpu.memory_space<vmem>>, vector<1x128xf32>
    %29 = vector.broadcast %27 : vector<128x1xf32> to vector<128x128xf32>
    %30 = vector.broadcast %28 : vector<1x128xf32> to vector<128x128xf32>
    %31 = arith.mulf %29, %30 : vector<128x128xf32>
    %32 = arith.addf %22, %31 : vector<128x128xf32>
    %33 = arith.truncf %32 : vector<128x128xf32> to vector<128x128xbf16>
    %c0_12 = arith.constant 0 : index
    %c0_13 = arith.constant 0 : index
    %34 = vector.load %arg4[%c0_12, %c0_13] : memref<128x512xbf16, #tpu.memory_space<vmem>>, vector<128x512xbf16>
    %cst_14 = arith.constant dense<0.000000e+00> : vector<128x512xf32>
    %35 = tpu.matmul %33, %34, %cst_14 {dimension_numbers = #tpu.dot_dimension_numbers<[1], [0], [0], [1], [0, 0, 1, 1], [], []>} : vector<128x128xbf16>, vector<128x512xbf16>, vector<128x512xf32> -> vector<128x512xf32>
    %c0_15 = arith.constant 0 : index
    %c0_16 = arith.constant 0 : index
    %36 = vector.load %arg5[%c0_15, %c0_16] : memref<1x512xf32, #tpu.memory_space<vmem>>, vector<1x512xf32>
    %37 = vector.broadcast %36 : vector<1x512xf32> to vector<128x512xf32>
    %38 = arith.addf %35, %37 : vector<128x512xf32>
    %39 = arith.truncf %38 : vector<128x512xf32> to vector<128x512xbf16>
    %c0_17 = arith.constant 0 : index
    %c0_18 = arith.constant 0 : index
    %40 = vector.load %arg6[%c0_17, %c0_18] : memref<128x512xbf16, #tpu.memory_space<vmem>>, vector<128x512xbf16>
    tpu.vector_store %arg6[%c0_17, %c0_18], %39 {strides = array<i32>} : memref<128x512xbf16, #tpu.memory_space<vmem>>, vector<128x512xbf16>,
    return
  }
  func.func @transform_0(%arg0: i32) -> (i32, i32) {
    %c0_i32 = arith.constant 0 : i32
    %c0_i32_0 = arith.constant 0 : i32
    return %arg0, %c0_i32 : i32, i32
  }
  func.func @transform_1(%arg0: i32) -> (i32, i32) {
    %c0_i32 = arith.constant 0 : i32
    %c0_i32_0 = arith.constant 0 : i32
    %c0_i32_1 = arith.constant 0 : i32
    return %c0_i32, %c0_i32_0 : i32, i32
  }
  func.func @transform_2(%arg0: i32) -> (i32, i32) {
    %c0_i32 = arith.constant 0 : i32
    %c0_i32_0 = arith.constant 0 : i32
    %c0_i32_1 = arith.constant 0 : i32
    return %c0_i32, %c0_i32_0 : i32, i32
  }
  func.func @transform_3(%arg0: i32) -> (i32, i32) {
    %c0_i32 = arith.constant 0 : i32
    %c0_i32_0 = arith.constant 0 : i32
    %c0_i32_1 = arith.constant 0 : i32
    return %c0_i32, %c0_i32_0 : i32, i32
  }
  func.func @transform_4(%arg0: i32) -> (i32, i32) {
    %c0_i32 = arith.constant 0 : i32
    %c0_i32_0 = arith.constant 0 : i32
    %c0_i32_1 = arith.constant 0 : i32
    return %c0_i32, %c0_i32_0 : i32, i32
  }
  func.func @transform_5(%arg0: i32) -> (i32, i32) {
    %c0_i32 = arith.constant 0 : i32
    %c0_i32_0 = arith.constant 0 : i32
    return %arg0, %c0_i32 : i32, i32
  }
}

module attributes {stable_mosaic.version = 11 : i64} {
  func.func @lstm_pool_kernel(%arg0: i32, %arg1: i32, %arg2: memref<8x8x512xbf16, #tpu.memory_space<vmem>>, %arg3: memref<128x512xbf16, #tpu.memory_space<any>>, %arg4: memref<1x8x128xf32, #tpu.memory_space<vmem>>, %arg5: memref<8x128xf32, #tpu.memory_space<vmem>>, %arg6: memref<8x128xf32, #tpu.memory_space<vmem>>, %arg7: memref<128x512xbf16, #tpu.memory_space<vmem>>, %arg8: memref<!tpu.dma_semaphore, #tpu.memory_space<semaphore_mem>>) attributes {dimension_semantics = [#tpu.dimension_semantics<parallel>, #tpu.dimension_semantics<arbitrary>], iteration_bounds = array<i64: 2, 2>, scalar_prefetch = 0 : i64, scratch_operands = 4 : i64, tpu.core_type = #tpu.core_type<tc>, window_params = [{transform_indices = @transform_0, window_bounds = array<i64: 8, 8, 512>}, {}, {transform_indices = @transform_2, window_bounds = array<i64: 1, 8, 128>}]} {
    %c0_i32 = arith.constant 0 : i32
    %0 = arith.cmpi eq, %arg1, %c0_i32 : i32
    %1 = arith.extui %0 : i1 to i32
    %c0_i32_0 = arith.constant 0 : i32
    %2 = arith.cmpi ne, %1, %c0_i32_0 : i32
    scf.if %2 {
      tpu.enqueue_dma source(%arg3 : memref<128x512xbf16, #tpu.memory_space<any>>) target(%arg7 : memref<128x512xbf16, #tpu.memory_space<vmem>>) target_semaphore(%arg8 : memref<!tpu.dma_semaphore, #tpu.memory_space<semaphore_mem>>)
      %cst = arith.constant 0.000000e+00 : f32
      %6 = vector.broadcast %cst : f32 to vector<8x128xf32>
      %c0 = arith.constant 0 : index
      %c0_3 = arith.constant 0 : index
      %c0_4 = arith.constant 0 : index
      %7 = vector.load %arg2[%c0, %c0_3, %c0_4] : memref<8x8x512xbf16, #tpu.memory_space<vmem>>, vector<1x8x512xbf16>
      %8 = vector.shape_cast %7 : vector<1x8x512xbf16> to vector<8x512xbf16>
      %9 = arith.extf %8 : vector<8x512xbf16> to vector<8x512xf32>
      %10 = vector.extract_strided_slice %9 {offsets = [0, 0], sizes = [8, 128], strides = [1, 1]} : vector<8x512xf32> to vector<8x128xf32>
      %11 = arith.negf %10 : vector<8x128xf32>
      %12 = math.exp %11 : vector<8x128xf32>
      %cst_5 = arith.constant 1.000000e+00 : f32
      %13 = vector.broadcast %cst_5 : f32 to vector<8x128xf32>
      %14 = arith.addf %13, %12 : vector<8x128xf32>
      %15 = arith.divf %13, %14 : vector<8x128xf32>
      %16 = vector.extract_strided_slice %9 {offsets = [0, 128], sizes = [8, 128], strides = [1, 1]} : vector<8x512xf32> to vector<8x128xf32>
      %17 = arith.negf %16 : vector<8x128xf32>
      %18 = math.exp %17 : vector<8x128xf32>
      %cst_6 = arith.constant 1.000000e+00 : f32
      %19 = vector.broadcast %cst_6 : f32 to vector<8x128xf32>
      %20 = arith.addf %19, %18 : vector<8x128xf32>
      %21 = arith.divf %19, %20 : vector<8x128xf32>
      %22 = vector.extract_strided_slice %9 {offsets = [0, 256], sizes = [8, 128], strides = [1, 1]} : vector<8x512xf32> to vector<8x128xf32>
      %23 = math.tanh %22 : vector<8x128xf32>
      %24 = vector.extract_strided_slice %9 {offsets = [0, 384], sizes = [8, 128], strides = [1, 1]} : vector<8x512xf32> to vector<8x128xf32>
      %25 = arith.negf %24 : vector<8x128xf32>
      %26 = math.exp %25 : vector<8x128xf32>
      %cst_7 = arith.constant 1.000000e+00 : f32
      %27 = vector.broadcast %cst_7 : f32 to vector<8x128xf32>
      %28 = arith.addf %27, %26 : vector<8x128xf32>
      %29 = arith.divf %27, %28 : vector<8x128xf32>
      %30 = arith.mulf %21, %6 : vector<8x128xf32>
      %31 = arith.mulf %15, %23 : vector<8x128xf32>
      %32 = arith.addf %30, %31 : vector<8x128xf32>
      %33 = math.tanh %32 : vector<8x128xf32>
      %34 = arith.mulf %29, %33 : vector<8x128xf32>
      %cst_8 = arith.constant dense<0.000000e+00> : vector<128xf32>
      %35 = vector.multi_reduction <add>, %34, %cst_8 [0] : vector<8x128xf32> to vector<128xf32>
      %36 = vector.shape_cast %35 : vector<128xf32> to vector<1x128xf32>
      %c1 = arith.constant 1 : index
      %c0_9 = arith.constant 0 : index
      %c0_10 = arith.constant 0 : index
      %37 = vector.load %arg2[%c1, %c0_9, %c0_10] : memref<8x8x512xbf16, #tpu.memory_space<vmem>>, vector<1x8x512xbf16>
      %38 = vector.shape_cast %37 : vector<1x8x512xbf16> to vector<8x512xbf16>
      %39 = arith.extf %38 : vector<8x512xbf16> to vector<8x512xf32>
      tpu.wait_dma2 semaphore(%arg8 : memref<!tpu.dma_semaphore, #tpu.memory_space<semaphore_mem>>) src(%arg3 : memref<128x512xbf16, #tpu.memory_space<any>>) dst(%arg7 : memref<128x512xbf16, #tpu.memory_space<vmem>>)
      %40 = arith.truncf %34 : vector<8x128xf32> to vector<8x128xbf16>
      %c0_11 = arith.constant 0 : index
      %c0_12 = arith.constant 0 : index
      %41 = vector.load %arg7[%c0_11, %c0_12] : memref<128x512xbf16, #tpu.memory_space<vmem>>, vector<128x512xbf16>
      %cst_13 = arith.constant dense<0.000000e+00> : vector<8x512xf32>
      %42 = tpu.matmul %40, %41, %cst_13 {dimension_numbers = #tpu.dot_dimension_numbers<[1], [0], [0], [1], [0, 0, 1, 1], [], []>} : vector<8x128xbf16>, vector<128x512xbf16>, vector<8x512xf32> -> vector<8x512xf32>
      %43 = arith.addf %39, %42 : vector<8x512xf32>
      %44 = vector.extract_strided_slice %43 {offsets = [0, 0], sizes = [8, 128], strides = [1, 1]} : vector<8x512xf32> to vector<8x128xf32>
      %45 = arith.negf %44 : vector<8x128xf32>
      %46 = math.exp %45 : vector<8x128xf32>
      %cst_14 = arith.constant 1.000000e+00 : f32
      %47 = vector.broadcast %cst_14 : f32 to vector<8x128xf32>
      %48 = arith.addf %47, %46 : vector<8x128xf32>
      %49 = arith.divf %47, %48 : vector<8x128xf32>
      %50 = vector.extract_strided_slice %43 {offsets = [0, 128], sizes = [8, 128], strides = [1, 1]} : vector<8x512xf32> to vector<8x128xf32>
      %51 = arith.negf %50 : vector<8x128xf32>
      %52 = math.exp %51 : vector<8x128xf32>
      %cst_15 = arith.constant 1.000000e+00 : f32
      %53 = vector.broadcast %cst_15 : f32 to vector<8x128xf32>
      %54 = arith.addf %53, %52 : vector<8x128xf32>
      %55 = arith.divf %53, %54 : vector<8x128xf32>
      %56 = vector.extract_strided_slice %43 {offsets = [0, 256], sizes = [8, 128], strides = [1, 1]} : vector<8x512xf32> to vector<8x128xf32>
      %57 = math.tanh %56 : vector<8x128xf32>
      %58 = vector.extract_strided_slice %43 {offsets = [0, 384], sizes = [8, 128], strides = [1, 1]} : vector<8x512xf32> to vector<8x128xf32>
      %59 = arith.negf %58 : vector<8x128xf32>
      %60 = math.exp %59 : vector<8x128xf32>
      %cst_16 = arith.constant 1.000000e+00 : f32
      %61 = vector.broadcast %cst_16 : f32 to vector<8x128xf32>
      %62 = arith.addf %61, %60 : vector<8x128xf32>
      %63 = arith.divf %61, %62 : vector<8x128xf32>
      %64 = arith.mulf %55, %32 : vector<8x128xf32>
      %65 = arith.mulf %49, %57 : vector<8x128xf32>
      %66 = arith.addf %64, %65 : vector<8x128xf32>
      %67 = math.tanh %66 : vector<8x128xf32>
      %68 = arith.mulf %63, %67 : vector<8x128xf32>
      %cst_17 = arith.constant dense<0.000000e+00> : vector<128xf32>
      %69 = vector.multi_reduction <add>, %68, %cst_17 [0] : vector<8x128xf32> to vector<128xf32>
      %70 = vector.shape_cast %69 : vector<128xf32> to vector<1x128xf32>
      %c2 = arith.constant 2 : index
      %c0_18 = arith.constant 0 : index
      %c0_19 = arith.constant 0 : index
      %71 = vector.load %arg2[%c2, %c0_18, %c0_19] : memref<8x8x512xbf16, #tpu.memory_space<vmem>>, vector<1x8x512xbf16>
      %72 = vector.shape_cast %71 : vector<1x8x512xbf16> to vector<8x512xbf16>
      %73 = arith.extf %72 : vector<8x512xbf16> to vector<8x512xf32>
      %74 = arith.truncf %68 : vector<8x128xf32> to vector<8x128xbf16>
      %c0_20 = arith.constant 0 : index
      %c0_21 = arith.constant 0 : index
      %75 = vector.load %arg7[%c0_20, %c0_21] : memref<128x512xbf16, #tpu.memory_space<vmem>>, vector<128x512xbf16>
      %cst_22 = arith.constant dense<0.000000e+00> : vector<8x512xf32>
      %76 = tpu.matmul %74, %75, %cst_22 {dimension_numbers = #tpu.dot_dimension_numbers<[1], [0], [0], [1], [0, 0, 1, 1], [], []>} : vector<8x128xbf16>, vector<128x512xbf16>, vector<8x512xf32> -> vector<8x512xf32>
      %77 = arith.addf %73, %76 : vector<8x512xf32>
      %78 = vector.extract_strided_slice %77 {offsets = [0, 0], sizes = [8, 128], strides = [1, 1]} : vector<8x512xf32> to vector<8x128xf32>
      %79 = arith.negf %78 : vector<8x128xf32>
      %80 = math.exp %79 : vector<8x128xf32>
      %cst_23 = arith.constant 1.000000e+00 : f32
      %81 = vector.broadcast %cst_23 : f32 to vector<8x128xf32>
      %82 = arith.addf %81, %80 : vector<8x128xf32>
      %83 = arith.divf %81, %82 : vector<8x128xf32>
      %84 = vector.extract_strided_slice %77 {offsets = [0, 128], sizes = [8, 128], strides = [1, 1]} : vector<8x512xf32> to vector<8x128xf32>
      %85 = arith.negf %84 : vector<8x128xf32>
      %86 = math.exp %85 : vector<8x128xf32>
      %cst_24 = arith.constant 1.000000e+00 : f32
      %87 = vector.broadcast %cst_24 : f32 to vector<8x128xf32>
      %88 = arith.addf %87, %86 : vector<8x128xf32>
      %89 = arith.divf %87, %88 : vector<8x128xf32>
      %90 = vector.extract_strided_slice %77 {offsets = [0, 256], sizes = [8, 128], strides = [1, 1]} : vector<8x512xf32> to vector<8x128xf32>
      %91 = math.tanh %90 : vector<8x128xf32>
      %92 = vector.extract_strided_slice %77 {offsets = [0, 384], sizes = [8, 128], strides = [1, 1]} : vector<8x512xf32> to vector<8x128xf32>
      %93 = arith.negf %92 : vector<8x128xf32>
      %94 = math.exp %93 : vector<8x128xf32>
      %cst_25 = arith.constant 1.000000e+00 : f32
      %95 = vector.broadcast %cst_25 : f32 to vector<8x128xf32>
      %96 = arith.addf %95, %94 : vector<8x128xf32>
      %97 = arith.divf %95, %96 : vector<8x128xf32>
      %98 = arith.mulf %89, %66 : vector<8x128xf32>
      %99 = arith.mulf %83, %91 : vector<8x128xf32>
      %100 = arith.addf %98, %99 : vector<8x128xf32>
      %101 = math.tanh %100 : vector<8x128xf32>
      %102 = arith.mulf %97, %101 : vector<8x128xf32>
      %cst_26 = arith.constant dense<0.000000e+00> : vector<128xf32>
      %103 = vector.multi_reduction <add>, %102, %cst_26 [0] : vector<8x128xf32> to vector<128xf32>
      %104 = vector.shape_cast %103 : vector<128xf32> to vector<1x128xf32>
      %c3 = arith.constant 3 : index
      %c0_27 = arith.constant 0 : index
      %c0_28 = arith.constant 0 : index
      %105 = vector.load %arg2[%c3, %c0_27, %c0_28] : memref<8x8x512xbf16, #tpu.memory_space<vmem>>, vector<1x8x512xbf16>
      %106 = vector.shape_cast %105 : vector<1x8x512xbf16> to vector<8x512xbf16>
      %107 = arith.extf %106 : vector<8x512xbf16> to vector<8x512xf32>
      %108 = arith.truncf %102 : vector<8x128xf32> to vector<8x128xbf16>
      %c0_29 = arith.constant 0 : index
      %c0_30 = arith.constant 0 : index
      %109 = vector.load %arg7[%c0_29, %c0_30] : memref<128x512xbf16, #tpu.memory_space<vmem>>, vector<128x512xbf16>
      %cst_31 = arith.constant dense<0.000000e+00> : vector<8x512xf32>
      %110 = tpu.matmul %108, %109, %cst_31 {dimension_numbers = #tpu.dot_dimension_numbers<[1], [0], [0], [1], [0, 0, 1, 1], [], []>} : vector<8x128xbf16>, vector<128x512xbf16>, vector<8x512xf32> -> vector<8x512xf32>
      %111 = arith.addf %107, %110 : vector<8x512xf32>
      %112 = vector.extract_strided_slice %111 {offsets = [0, 0], sizes = [8, 128], strides = [1, 1]} : vector<8x512xf32> to vector<8x128xf32>
      %113 = arith.negf %112 : vector<8x128xf32>
      %114 = math.exp %113 : vector<8x128xf32>
      %cst_32 = arith.constant 1.000000e+00 : f32
      %115 = vector.broadcast %cst_32 : f32 to vector<8x128xf32>
      %116 = arith.addf %115, %114 : vector<8x128xf32>
      %117 = arith.divf %115, %116 : vector<8x128xf32>
      %118 = vector.extract_strided_slice %111 {offsets = [0, 128], sizes = [8, 128], strides = [1, 1]} : vector<8x512xf32> to vector<8x128xf32>
      %119 = arith.negf %118 : vector<8x128xf32>
      %120 = math.exp %119 : vector<8x128xf32>
      %cst_33 = arith.constant 1.000000e+00 : f32
      %121 = vector.broadcast %cst_33 : f32 to vector<8x128xf32>
      %122 = arith.addf %121, %120 : vector<8x128xf32>
      %123 = arith.divf %121, %122 : vector<8x128xf32>
      %124 = vector.extract_strided_slice %111 {offsets = [0, 256], sizes = [8, 128], strides = [1, 1]} : vector<8x512xf32> to vector<8x128xf32>
      %125 = math.tanh %124 : vector<8x128xf32>
      %126 = vector.extract_strided_slice %111 {offsets = [0, 384], sizes = [8, 128], strides = [1, 1]} : vector<8x512xf32> to vector<8x128xf32>
      %127 = arith.negf %126 : vector<8x128xf32>
      %128 = math.exp %127 : vector<8x128xf32>
      %cst_34 = arith.constant 1.000000e+00 : f32
      %129 = vector.broadcast %cst_34 : f32 to vector<8x128xf32>
      %130 = arith.addf %129, %128 : vector<8x128xf32>
      %131 = arith.divf %129, %130 : vector<8x128xf32>
      %132 = arith.mulf %123, %100 : vector<8x128xf32>
      %133 = arith.mulf %117, %125 : vector<8x128xf32>
      %134 = arith.addf %132, %133 : vector<8x128xf32>
      %135 = math.tanh %134 : vector<8x128xf32>
      %136 = arith.mulf %131, %135 : vector<8x128xf32>
      %cst_35 = arith.constant dense<0.000000e+00> : vector<128xf32>
      %137 = vector.multi_reduction <add>, %136, %cst_35 [0] : vector<8x128xf32> to vector<128xf32>
      %138 = vector.shape_cast %137 : vector<128xf32> to vector<1x128xf32>
      %c4 = arith.constant 4 : index
      %c0_36 = arith.constant 0 : index
      %c0_37 = arith.constant 0 : index
      %139 = vector.load %arg2[%c4, %c0_36, %c0_37] : memref<8x8x512xbf16, #tpu.memory_space<vmem>>, vector<1x8x512xbf16>
      %140 = vector.shape_cast %139 : vector<1x8x512xbf16> to vector<8x512xbf16>
      %141 = arith.extf %140 : vector<8x512xbf16> to vector<8x512xf32>
      %142 = arith.truncf %136 : vector<8x128xf32> to vector<8x128xbf16>
      %c0_38 = arith.constant 0 : index
      %c0_39 = arith.constant 0 : index
      %143 = vector.load %arg7[%c0_38, %c0_39] : memref<128x512xbf16, #tpu.memory_space<vmem>>, vector<128x512xbf16>
      %cst_40 = arith.constant dense<0.000000e+00> : vector<8x512xf32>
      %144 = tpu.matmul %142, %143, %cst_40 {dimension_numbers = #tpu.dot_dimension_numbers<[1], [0], [0], [1], [0, 0, 1, 1], [], []>} : vector<8x128xbf16>, vector<128x512xbf16>, vector<8x512xf32> -> vector<8x512xf32>
      %145 = arith.addf %141, %144 : vector<8x512xf32>
      %146 = vector.extract_strided_slice %145 {offsets = [0, 0], sizes = [8, 128], strides = [1, 1]} : vector<8x512xf32> to vector<8x128xf32>
      %147 = arith.negf %146 : vector<8x128xf32>
      %148 = math.exp %147 : vector<8x128xf32>
      %cst_41 = arith.constant 1.000000e+00 : f32
      %149 = vector.broadcast %cst_41 : f32 to vector<8x128xf32>
      %150 = arith.addf %149, %148 : vector<8x128xf32>
      %151 = arith.divf %149, %150 : vector<8x128xf32>
      %152 = vector.extract_strided_slice %145 {offsets = [0, 128], sizes = [8, 128], strides = [1, 1]} : vector<8x512xf32> to vector<8x128xf32>
      %153 = arith.negf %152 : vector<8x128xf32>
      %154 = math.exp %153 : vector<8x128xf32>
      %cst_42 = arith.constant 1.000000e+00 : f32
      %155 = vector.broadcast %cst_42 : f32 to vector<8x128xf32>
      %156 = arith.addf %155, %154 : vector<8x128xf32>
      %157 = arith.divf %155, %156 : vector<8x128xf32>
      %158 = vector.extract_strided_slice %145 {offsets = [0, 256], sizes = [8, 128], strides = [1, 1]} : vector<8x512xf32> to vector<8x128xf32>
      %159 = math.tanh %158 : vector<8x128xf32>
      %160 = vector.extract_strided_slice %145 {offsets = [0, 384], sizes = [8, 128], strides = [1, 1]} : vector<8x512xf32> to vector<8x128xf32>
      %161 = arith.negf %160 : vector<8x128xf32>
      %162 = math.exp %161 : vector<8x128xf32>
      %cst_43 = arith.constant 1.000000e+00 : f32
      %163 = vector.broadcast %cst_43 : f32 to vector<8x128xf32>
      %164 = arith.addf %163, %162 : vector<8x128xf32>
      %165 = arith.divf %163, %164 : vector<8x128xf32>
      %166 = arith.mulf %157, %134 : vector<8x128xf32>
      %167 = arith.mulf %151, %159 : vector<8x128xf32>
      %168 = arith.addf %166, %167 : vector<8x128xf32>
      %169 = math.tanh %168 : vector<8x128xf32>
      %170 = arith.mulf %165, %169 : vector<8x128xf32>
      %cst_44 = arith.constant dense<0.000000e+00> : vector<128xf32>
      %171 = vector.multi_reduction <add>, %170, %cst_44 [0] : vector<8x128xf32> to vector<128xf32>
      %172 = vector.shape_cast %171 : vector<128xf32> to vector<1x128xf32>
      %c5 = arith.constant 5 : index
      %c0_45 = arith.constant 0 : index
      %c0_46 = arith.constant 0 : index
      %173 = vector.load %arg2[%c5, %c0_45, %c0_46] : memref<8x8x512xbf16, #tpu.memory_space<vmem>>, vector<1x8x512xbf16>
      %174 = vector.shape_cast %173 : vector<1x8x512xbf16> to vector<8x512xbf16>
      %175 = arith.extf %174 : vector<8x512xbf16> to vector<8x512xf32>
      %176 = arith.truncf %170 : vector<8x128xf32> to vector<8x128xbf16>
      %c0_47 = arith.constant 0 : index
      %c0_48 = arith.constant 0 : index
      %177 = vector.load %arg7[%c0_47, %c0_48] : memref<128x512xbf16, #tpu.memory_space<vmem>>, vector<128x512xbf16>
      %cst_49 = arith.constant dense<0.000000e+00> : vector<8x512xf32>
      %178 = tpu.matmul %176, %177, %cst_49 {dimension_numbers = #tpu.dot_dimension_numbers<[1], [0], [0], [1], [0, 0, 1, 1], [], []>} : vector<8x128xbf16>, vector<128x512xbf16>, vector<8x512xf32> -> vector<8x512xf32>
      %179 = arith.addf %175, %178 : vector<8x512xf32>
      %180 = vector.extract_strided_slice %179 {offsets = [0, 0], sizes = [8, 128], strides = [1, 1]} : vector<8x512xf32> to vector<8x128xf32>
      %181 = arith.negf %180 : vector<8x128xf32>
      %182 = math.exp %181 : vector<8x128xf32>
      %cst_50 = arith.constant 1.000000e+00 : f32
      %183 = vector.broadcast %cst_50 : f32 to vector<8x128xf32>
      %184 = arith.addf %183, %182 : vector<8x128xf32>
      %185 = arith.divf %183, %184 : vector<8x128xf32>
      %186 = vector.extract_strided_slice %179 {offsets = [0, 128], sizes = [8, 128], strides = [1, 1]} : vector<8x512xf32> to vector<8x128xf32>
      %187 = arith.negf %186 : vector<8x128xf32>
      %188 = math.exp %187 : vector<8x128xf32>
      %cst_51 = arith.constant 1.000000e+00 : f32
      %189 = vector.broadcast %cst_51 : f32 to vector<8x128xf32>
      %190 = arith.addf %189, %188 : vector<8x128xf32>
      %191 = arith.divf %189, %190 : vector<8x128xf32>
      %192 = vector.extract_strided_slice %179 {offsets = [0, 256], sizes = [8, 128], strides = [1, 1]} : vector<8x512xf32> to vector<8x128xf32>
      %193 = math.tanh %192 : vector<8x128xf32>
      %194 = vector.extract_strided_slice %179 {offsets = [0, 384], sizes = [8, 128], strides = [1, 1]} : vector<8x512xf32> to vector<8x128xf32>
      %195 = arith.negf %194 : vector<8x128xf32>
      %196 = math.exp %195 : vector<8x128xf32>
      %cst_52 = arith.constant 1.000000e+00 : f32
      %197 = vector.broadcast %cst_52 : f32 to vector<8x128xf32>
      %198 = arith.addf %197, %196 : vector<8x128xf32>
      %199 = arith.divf %197, %198 : vector<8x128xf32>
      %200 = arith.mulf %191, %168 : vector<8x128xf32>
      %201 = arith.mulf %185, %193 : vector<8x128xf32>
      %202 = arith.addf %200, %201 : vector<8x128xf32>
      %203 = math.tanh %202 : vector<8x128xf32>
      %204 = arith.mulf %199, %203 : vector<8x128xf32>
      %cst_53 = arith.constant dense<0.000000e+00> : vector<128xf32>
      %205 = vector.multi_reduction <add>, %204, %cst_53 [0] : vector<8x128xf32> to vector<128xf32>
      %206 = vector.shape_cast %205 : vector<128xf32> to vector<1x128xf32>
      %c6 = arith.constant 6 : index
      %c0_54 = arith.constant 0 : index
      %c0_55 = arith.constant 0 : index
      %207 = vector.load %arg2[%c6, %c0_54, %c0_55] : memref<8x8x512xbf16, #tpu.memory_space<vmem>>, vector<1x8x512xbf16>
      %208 = vector.shape_cast %207 : vector<1x8x512xbf16> to vector<8x512xbf16>
      %209 = arith.extf %208 : vector<8x512xbf16> to vector<8x512xf32>
      %210 = arith.truncf %204 : vector<8x128xf32> to vector<8x128xbf16>
      %c0_56 = arith.constant 0 : index
      %c0_57 = arith.constant 0 : index
      %211 = vector.load %arg7[%c0_56, %c0_57] : memref<128x512xbf16, #tpu.memory_space<vmem>>, vector<128x512xbf16>
      %cst_58 = arith.constant dense<0.000000e+00> : vector<8x512xf32>
      %212 = tpu.matmul %210, %211, %cst_58 {dimension_numbers = #tpu.dot_dimension_numbers<[1], [0], [0], [1], [0, 0, 1, 1], [], []>} : vector<8x128xbf16>, vector<128x512xbf16>, vector<8x512xf32> -> vector<8x512xf32>
      %213 = arith.addf %209, %212 : vector<8x512xf32>
      %214 = vector.extract_strided_slice %213 {offsets = [0, 0], sizes = [8, 128], strides = [1, 1]} : vector<8x512xf32> to vector<8x128xf32>
      %215 = arith.negf %214 : vector<8x128xf32>
      %216 = math.exp %215 : vector<8x128xf32>
      %cst_59 = arith.constant 1.000000e+00 : f32
      %217 = vector.broadcast %cst_59 : f32 to vector<8x128xf32>
      %218 = arith.addf %217, %216 : vector<8x128xf32>
      %219 = arith.divf %217, %218 : vector<8x128xf32>
      %220 = vector.extract_strided_slice %213 {offsets = [0, 128], sizes = [8, 128], strides = [1, 1]} : vector<8x512xf32> to vector<8x128xf32>
      %221 = arith.negf %220 : vector<8x128xf32>
      %222 = math.exp %221 : vector<8x128xf32>
      %cst_60 = arith.constant 1.000000e+00 : f32
      %223 = vector.broadcast %cst_60 : f32 to vector<8x128xf32>
      %224 = arith.addf %223, %222 : vector<8x128xf32>
      %225 = arith.divf %223, %224 : vector<8x128xf32>
      %226 = vector.extract_strided_slice %213 {offsets = [0, 256], sizes = [8, 128], strides = [1, 1]} : vector<8x512xf32> to vector<8x128xf32>
      %227 = math.tanh %226 : vector<8x128xf32>
      %228 = vector.extract_strided_slice %213 {offsets = [0, 384], sizes = [8, 128], strides = [1, 1]} : vector<8x512xf32> to vector<8x128xf32>
      %229 = arith.negf %228 : vector<8x128xf32>
      %230 = math.exp %229 : vector<8x128xf32>
      %cst_61 = arith.constant 1.000000e+00 : f32
      %231 = vector.broadcast %cst_61 : f32 to vector<8x128xf32>
      %232 = arith.addf %231, %230 : vector<8x128xf32>
      %233 = arith.divf %231, %232 : vector<8x128xf32>
      %234 = arith.mulf %225, %202 : vector<8x128xf32>
      %235 = arith.mulf %219, %227 : vector<8x128xf32>
      %236 = arith.addf %234, %235 : vector<8x128xf32>
      %237 = math.tanh %236 : vector<8x128xf32>
      %238 = arith.mulf %233, %237 : vector<8x128xf32>
      %cst_62 = arith.constant dense<0.000000e+00> : vector<128xf32>
      %239 = vector.multi_reduction <add>, %238, %cst_62 [0] : vector<8x128xf32> to vector<128xf32>
      %240 = vector.shape_cast %239 : vector<128xf32> to vector<1x128xf32>
      %c7 = arith.constant 7 : index
      %c0_63 = arith.constant 0 : index
      %c0_64 = arith.constant 0 : index
      %241 = vector.load %arg2[%c7, %c0_63, %c0_64] : memref<8x8x512xbf16, #tpu.memory_space<vmem>>, vector<1x8x512xbf16>
      %242 = vector.shape_cast %241 : vector<1x8x512xbf16> to vector<8x512xbf16>
      %243 = arith.extf %242 : vector<8x512xbf16> to vector<8x512xf32>
      %244 = arith.truncf %238 : vector<8x128xf32> to vector<8x128xbf16>
      %c0_65 = arith.constant 0 : index
      %c0_66 = arith.constant 0 : index
      %245 = vector.load %arg7[%c0_65, %c0_66] : memref<128x512xbf16, #tpu.memory_space<vmem>>, vector<128x512xbf16>
      %cst_67 = arith.constant dense<0.000000e+00> : vector<8x512xf32>
      %246 = tpu.matmul %244, %245, %cst_67 {dimension_numbers = #tpu.dot_dimension_numbers<[1], [0], [0], [1], [0, 0, 1, 1], [], []>} : vector<8x128xbf16>, vector<128x512xbf16>, vector<8x512xf32> -> vector<8x512xf32>
      %247 = arith.addf %243, %246 : vector<8x512xf32>
      %248 = vector.extract_strided_slice %247 {offsets = [0, 0], sizes = [8, 128], strides = [1, 1]} : vector<8x512xf32> to vector<8x128xf32>
      %249 = arith.negf %248 : vector<8x128xf32>
      %250 = math.exp %249 : vector<8x128xf32>
      %cst_68 = arith.constant 1.000000e+00 : f32
      %251 = vector.broadcast %cst_68 : f32 to vector<8x128xf32>
      %252 = arith.addf %251, %250 : vector<8x128xf32>
      %253 = arith.divf %251, %252 : vector<8x128xf32>
      %254 = vector.extract_strided_slice %247 {offsets = [0, 128], sizes = [8, 128], strides = [1, 1]} : vector<8x512xf32> to vector<8x128xf32>
      %255 = arith.negf %254 : vector<8x128xf32>
      %256 = math.exp %255 : vector<8x128xf32>
      %cst_69 = arith.constant 1.000000e+00 : f32
      %257 = vector.broadcast %cst_69 : f32 to vector<8x128xf32>
      %258 = arith.addf %257, %256 : vector<8x128xf32>
      %259 = arith.divf %257, %258 : vector<8x128xf32>
      %260 = vector.extract_strided_slice %247 {offsets = [0, 256], sizes = [8, 128], strides = [1, 1]} : vector<8x512xf32> to vector<8x128xf32>
      %261 = math.tanh %260 : vector<8x128xf32>
      %262 = vector.extract_strided_slice %247 {offsets = [0, 384], sizes = [8, 128], strides = [1, 1]} : vector<8x512xf32> to vector<8x128xf32>
      %263 = arith.negf %262 : vector<8x128xf32>
      %264 = math.exp %263 : vector<8x128xf32>
      %cst_70 = arith.constant 1.000000e+00 : f32
      %265 = vector.broadcast %cst_70 : f32 to vector<8x128xf32>
      %266 = arith.addf %265, %264 : vector<8x128xf32>
      %267 = arith.divf %265, %266 : vector<8x128xf32>
      %268 = arith.mulf %259, %236 : vector<8x128xf32>
      %269 = arith.mulf %253, %261 : vector<8x128xf32>
      %270 = arith.addf %268, %269 : vector<8x128xf32>
      %271 = math.tanh %270 : vector<8x128xf32>
      %272 = arith.mulf %267, %271 : vector<8x128xf32>
      %cst_71 = arith.constant dense<0.000000e+00> : vector<128xf32>
      %273 = vector.multi_reduction <add>, %272, %cst_71 [0] : vector<8x128xf32> to vector<128xf32>
      %274 = vector.shape_cast %273 : vector<128xf32> to vector<1x128xf32>
      %c0_72 = arith.constant 0 : index
      %c0_73 = arith.constant 0 : index
      %275 = vector.load %arg5[%c0_72, %c0_73] : memref<8x128xf32, #tpu.memory_space<vmem>>, vector<8x128xf32>
      tpu.vector_store %arg5[%c0_72, %c0_73], %272 {strides = array<i32>} : memref<8x128xf32, #tpu.memory_space<vmem>>, vector<8x128xf32>,
      %c0_74 = arith.constant 0 : index
      %c0_75 = arith.constant 0 : index
      %276 = vector.load %arg6[%c0_74, %c0_75] : memref<8x128xf32, #tpu.memory_space<vmem>>, vector<8x128xf32>
      tpu.vector_store %arg6[%c0_74, %c0_75], %270 {strides = array<i32>} : memref<8x128xf32, #tpu.memory_space<vmem>>, vector<8x128xf32>,
      %277 = tpu.concatenate %36, %70, %104, %138, %172, %206, %240, %274 in 0 : vector<1x128xf32>, vector<1x128xf32>, vector<1x128xf32>, vector<1x128xf32>, vector<1x128xf32>, vector<1x128xf32>, vector<1x128xf32>, vector<1x128xf32> -> vector<8x128xf32>
      %278 = vector.shape_cast %277 : vector<8x128xf32> to vector<1x8x128xf32>
      %c0_76 = arith.constant 0 : index
      %c0_77 = arith.constant 0 : index
      %c0_78 = arith.constant 0 : index
      %279 = vector.load %arg4[%c0_76, %c0_77, %c0_78] : memref<1x8x128xf32, #tpu.memory_space<vmem>>, vector<1x8x128xf32>
      tpu.vector_store %arg4[%c0_76, %c0_77, %c0_78], %278 {strides = array<i32>} : memref<1x8x128xf32, #tpu.memory_space<vmem>>, vector<1x8x128xf32>,
    } else {
    }
    %c0_i32_1 = arith.constant 0 : i32
    %3 = arith.cmpi ne, %arg1, %c0_i32_1 : i32
    %4 = arith.extui %3 : i1 to i32
    %c0_i32_2 = arith.constant 0 : i32
    %5 = arith.cmpi ne, %4, %c0_i32_2 : i32
    scf.if %5 {
      %c0 = arith.constant 0 : index
      %c0_3 = arith.constant 0 : index
      %6 = vector.load %arg5[%c0, %c0_3] : memref<8x128xf32, #tpu.memory_space<vmem>>, vector<8x128xf32>
      %c0_4 = arith.constant 0 : index
      %c0_5 = arith.constant 0 : index
      %7 = vector.load %arg6[%c0_4, %c0_5] : memref<8x128xf32, #tpu.memory_space<vmem>>, vector<8x128xf32>
      %c0_6 = arith.constant 0 : index
      %c0_7 = arith.constant 0 : index
      %c0_8 = arith.constant 0 : index
      %8 = vector.load %arg2[%c0_6, %c0_7, %c0_8] : memref<8x8x512xbf16, #tpu.memory_space<vmem>>, vector<1x8x512xbf16>
      %9 = vector.shape_cast %8 : vector<1x8x512xbf16> to vector<8x512xbf16>
      %10 = arith.extf %9 : vector<8x512xbf16> to vector<8x512xf32>
      %11 = arith.truncf %6 : vector<8x128xf32> to vector<8x128xbf16>
      %c0_9 = arith.constant 0 : index
      %c0_10 = arith.constant 0 : index
      %12 = vector.load %arg7[%c0_9, %c0_10] : memref<128x512xbf16, #tpu.memory_space<vmem>>, vector<128x512xbf16>
      %cst = arith.constant dense<0.000000e+00> : vector<8x512xf32>
      %13 = tpu.matmul %11, %12, %cst {dimension_numbers = #tpu.dot_dimension_numbers<[1], [0], [0], [1], [0, 0, 1, 1], [], []>} : vector<8x128xbf16>, vector<128x512xbf16>, vector<8x512xf32> -> vector<8x512xf32>
      %14 = arith.addf %10, %13 : vector<8x512xf32>
      %15 = vector.extract_strided_slice %14 {offsets = [0, 0], sizes = [8, 128], strides = [1, 1]} : vector<8x512xf32> to vector<8x128xf32>
      %16 = arith.negf %15 : vector<8x128xf32>
      %17 = math.exp %16 : vector<8x128xf32>
      %cst_11 = arith.constant 1.000000e+00 : f32
      %18 = vector.broadcast %cst_11 : f32 to vector<8x128xf32>
      %19 = arith.addf %18, %17 : vector<8x128xf32>
      %20 = arith.divf %18, %19 : vector<8x128xf32>
      %21 = vector.extract_strided_slice %14 {offsets = [0, 128], sizes = [8, 128], strides = [1, 1]} : vector<8x512xf32> to vector<8x128xf32>
      %22 = arith.negf %21 : vector<8x128xf32>
      %23 = math.exp %22 : vector<8x128xf32>
      %cst_12 = arith.constant 1.000000e+00 : f32
      %24 = vector.broadcast %cst_12 : f32 to vector<8x128xf32>
      %25 = arith.addf %24, %23 : vector<8x128xf32>
      %26 = arith.divf %24, %25 : vector<8x128xf32>
      %27 = vector.extract_strided_slice %14 {offsets = [0, 256], sizes = [8, 128], strides = [1, 1]} : vector<8x512xf32> to vector<8x128xf32>
      %28 = math.tanh %27 : vector<8x128xf32>
      %29 = vector.extract_strided_slice %14 {offsets = [0, 384], sizes = [8, 128], strides = [1, 1]} : vector<8x512xf32> to vector<8x128xf32>
      %30 = arith.negf %29 : vector<8x128xf32>
      %31 = math.exp %30 : vector<8x128xf32>
      %cst_13 = arith.constant 1.000000e+00 : f32
      %32 = vector.broadcast %cst_13 : f32 to vector<8x128xf32>
      %33 = arith.addf %32, %31 : vector<8x128xf32>
      %34 = arith.divf %32, %33 : vector<8x128xf32>
      %35 = arith.mulf %26, %7 : vector<8x128xf32>
      %36 = arith.mulf %20, %28 : vector<8x128xf32>
      %37 = arith.addf %35, %36 : vector<8x128xf32>
      %38 = math.tanh %37 : vector<8x128xf32>
      %39 = arith.mulf %34, %38 : vector<8x128xf32>
      %cst_14 = arith.constant dense<0.000000e+00> : vector<128xf32>
      %40 = vector.multi_reduction <add>, %39, %cst_14 [0] : vector<8x128xf32> to vector<128xf32>
      %41 = vector.shape_cast %40 : vector<128xf32> to vector<1x128xf32>
      %c1 = arith.constant 1 : index
      %c0_15 = arith.constant 0 : index
      %c0_16 = arith.constant 0 : index
      %42 = vector.load %arg2[%c1, %c0_15, %c0_16] : memref<8x8x512xbf16, #tpu.memory_space<vmem>>, vector<1x8x512xbf16>
      %43 = vector.shape_cast %42 : vector<1x8x512xbf16> to vector<8x512xbf16>
      %44 = arith.extf %43 : vector<8x512xbf16> to vector<8x512xf32>
      %45 = arith.truncf %39 : vector<8x128xf32> to vector<8x128xbf16>
      %c0_17 = arith.constant 0 : index
      %c0_18 = arith.constant 0 : index
      %46 = vector.load %arg7[%c0_17, %c0_18] : memref<128x512xbf16, #tpu.memory_space<vmem>>, vector<128x512xbf16>
      %cst_19 = arith.constant dense<0.000000e+00> : vector<8x512xf32>
      %47 = tpu.matmul %45, %46, %cst_19 {dimension_numbers = #tpu.dot_dimension_numbers<[1], [0], [0], [1], [0, 0, 1, 1], [], []>} : vector<8x128xbf16>, vector<128x512xbf16>, vector<8x512xf32> -> vector<8x512xf32>
      %48 = arith.addf %44, %47 : vector<8x512xf32>
      %49 = vector.extract_strided_slice %48 {offsets = [0, 0], sizes = [8, 128], strides = [1, 1]} : vector<8x512xf32> to vector<8x128xf32>
      %50 = arith.negf %49 : vector<8x128xf32>
      %51 = math.exp %50 : vector<8x128xf32>
      %cst_20 = arith.constant 1.000000e+00 : f32
      %52 = vector.broadcast %cst_20 : f32 to vector<8x128xf32>
      %53 = arith.addf %52, %51 : vector<8x128xf32>
      %54 = arith.divf %52, %53 : vector<8x128xf32>
      %55 = vector.extract_strided_slice %48 {offsets = [0, 128], sizes = [8, 128], strides = [1, 1]} : vector<8x512xf32> to vector<8x128xf32>
      %56 = arith.negf %55 : vector<8x128xf32>
      %57 = math.exp %56 : vector<8x128xf32>
      %cst_21 = arith.constant 1.000000e+00 : f32
      %58 = vector.broadcast %cst_21 : f32 to vector<8x128xf32>
      %59 = arith.addf %58, %57 : vector<8x128xf32>
      %60 = arith.divf %58, %59 : vector<8x128xf32>
      %61 = vector.extract_strided_slice %48 {offsets = [0, 256], sizes = [8, 128], strides = [1, 1]} : vector<8x512xf32> to vector<8x128xf32>
      %62 = math.tanh %61 : vector<8x128xf32>
      %63 = vector.extract_strided_slice %48 {offsets = [0, 384], sizes = [8, 128], strides = [1, 1]} : vector<8x512xf32> to vector<8x128xf32>
      %64 = arith.negf %63 : vector<8x128xf32>
      %65 = math.exp %64 : vector<8x128xf32>
      %cst_22 = arith.constant 1.000000e+00 : f32
      %66 = vector.broadcast %cst_22 : f32 to vector<8x128xf32>
      %67 = arith.addf %66, %65 : vector<8x128xf32>
      %68 = arith.divf %66, %67 : vector<8x128xf32>
      %69 = arith.mulf %60, %37 : vector<8x128xf32>
      %70 = arith.mulf %54, %62 : vector<8x128xf32>
      %71 = arith.addf %69, %70 : vector<8x128xf32>
      %72 = math.tanh %71 : vector<8x128xf32>
      %73 = arith.mulf %68, %72 : vector<8x128xf32>
      %cst_23 = arith.constant dense<0.000000e+00> : vector<128xf32>
      %74 = vector.multi_reduction <add>, %73, %cst_23 [0] : vector<8x128xf32> to vector<128xf32>
      %75 = vector.shape_cast %74 : vector<128xf32> to vector<1x128xf32>
      %c2 = arith.constant 2 : index
      %c0_24 = arith.constant 0 : index
      %c0_25 = arith.constant 0 : index
      %76 = vector.load %arg2[%c2, %c0_24, %c0_25] : memref<8x8x512xbf16, #tpu.memory_space<vmem>>, vector<1x8x512xbf16>
      %77 = vector.shape_cast %76 : vector<1x8x512xbf16> to vector<8x512xbf16>
      %78 = arith.extf %77 : vector<8x512xbf16> to vector<8x512xf32>
      %79 = arith.truncf %73 : vector<8x128xf32> to vector<8x128xbf16>
      %c0_26 = arith.constant 0 : index
      %c0_27 = arith.constant 0 : index
      %80 = vector.load %arg7[%c0_26, %c0_27] : memref<128x512xbf16, #tpu.memory_space<vmem>>, vector<128x512xbf16>
      %cst_28 = arith.constant dense<0.000000e+00> : vector<8x512xf32>
      %81 = tpu.matmul %79, %80, %cst_28 {dimension_numbers = #tpu.dot_dimension_numbers<[1], [0], [0], [1], [0, 0, 1, 1], [], []>} : vector<8x128xbf16>, vector<128x512xbf16>, vector<8x512xf32> -> vector<8x512xf32>
      %82 = arith.addf %78, %81 : vector<8x512xf32>
      %83 = vector.extract_strided_slice %82 {offsets = [0, 0], sizes = [8, 128], strides = [1, 1]} : vector<8x512xf32> to vector<8x128xf32>
      %84 = arith.negf %83 : vector<8x128xf32>
      %85 = math.exp %84 : vector<8x128xf32>
      %cst_29 = arith.constant 1.000000e+00 : f32
      %86 = vector.broadcast %cst_29 : f32 to vector<8x128xf32>
      %87 = arith.addf %86, %85 : vector<8x128xf32>
      %88 = arith.divf %86, %87 : vector<8x128xf32>
      %89 = vector.extract_strided_slice %82 {offsets = [0, 128], sizes = [8, 128], strides = [1, 1]} : vector<8x512xf32> to vector<8x128xf32>
      %90 = arith.negf %89 : vector<8x128xf32>
      %91 = math.exp %90 : vector<8x128xf32>
      %cst_30 = arith.constant 1.000000e+00 : f32
      %92 = vector.broadcast %cst_30 : f32 to vector<8x128xf32>
      %93 = arith.addf %92, %91 : vector<8x128xf32>
      %94 = arith.divf %92, %93 : vector<8x128xf32>
      %95 = vector.extract_strided_slice %82 {offsets = [0, 256], sizes = [8, 128], strides = [1, 1]} : vector<8x512xf32> to vector<8x128xf32>
      %96 = math.tanh %95 : vector<8x128xf32>
      %97 = vector.extract_strided_slice %82 {offsets = [0, 384], sizes = [8, 128], strides = [1, 1]} : vector<8x512xf32> to vector<8x128xf32>
      %98 = arith.negf %97 : vector<8x128xf32>
      %99 = math.exp %98 : vector<8x128xf32>
      %cst_31 = arith.constant 1.000000e+00 : f32
      %100 = vector.broadcast %cst_31 : f32 to vector<8x128xf32>
      %101 = arith.addf %100, %99 : vector<8x128xf32>
      %102 = arith.divf %100, %101 : vector<8x128xf32>
      %103 = arith.mulf %94, %71 : vector<8x128xf32>
      %104 = arith.mulf %88, %96 : vector<8x128xf32>
      %105 = arith.addf %103, %104 : vector<8x128xf32>
      %106 = math.tanh %105 : vector<8x128xf32>
      %107 = arith.mulf %102, %106 : vector<8x128xf32>
      %cst_32 = arith.constant dense<0.000000e+00> : vector<128xf32>
      %108 = vector.multi_reduction <add>, %107, %cst_32 [0] : vector<8x128xf32> to vector<128xf32>
      %109 = vector.shape_cast %108 : vector<128xf32> to vector<1x128xf32>
      %c3 = arith.constant 3 : index
      %c0_33 = arith.constant 0 : index
      %c0_34 = arith.constant 0 : index
      %110 = vector.load %arg2[%c3, %c0_33, %c0_34] : memref<8x8x512xbf16, #tpu.memory_space<vmem>>, vector<1x8x512xbf16>
      %111 = vector.shape_cast %110 : vector<1x8x512xbf16> to vector<8x512xbf16>
      %112 = arith.extf %111 : vector<8x512xbf16> to vector<8x512xf32>
      %113 = arith.truncf %107 : vector<8x128xf32> to vector<8x128xbf16>
      %c0_35 = arith.constant 0 : index
      %c0_36 = arith.constant 0 : index
      %114 = vector.load %arg7[%c0_35, %c0_36] : memref<128x512xbf16, #tpu.memory_space<vmem>>, vector<128x512xbf16>
      %cst_37 = arith.constant dense<0.000000e+00> : vector<8x512xf32>
      %115 = tpu.matmul %113, %114, %cst_37 {dimension_numbers = #tpu.dot_dimension_numbers<[1], [0], [0], [1], [0, 0, 1, 1], [], []>} : vector<8x128xbf16>, vector<128x512xbf16>, vector<8x512xf32> -> vector<8x512xf32>
      %116 = arith.addf %112, %115 : vector<8x512xf32>
      %117 = vector.extract_strided_slice %116 {offsets = [0, 0], sizes = [8, 128], strides = [1, 1]} : vector<8x512xf32> to vector<8x128xf32>
      %118 = arith.negf %117 : vector<8x128xf32>
      %119 = math.exp %118 : vector<8x128xf32>
      %cst_38 = arith.constant 1.000000e+00 : f32
      %120 = vector.broadcast %cst_38 : f32 to vector<8x128xf32>
      %121 = arith.addf %120, %119 : vector<8x128xf32>
      %122 = arith.divf %120, %121 : vector<8x128xf32>
      %123 = vector.extract_strided_slice %116 {offsets = [0, 128], sizes = [8, 128], strides = [1, 1]} : vector<8x512xf32> to vector<8x128xf32>
      %124 = arith.negf %123 : vector<8x128xf32>
      %125 = math.exp %124 : vector<8x128xf32>
      %cst_39 = arith.constant 1.000000e+00 : f32
      %126 = vector.broadcast %cst_39 : f32 to vector<8x128xf32>
      %127 = arith.addf %126, %125 : vector<8x128xf32>
      %128 = arith.divf %126, %127 : vector<8x128xf32>
      %129 = vector.extract_strided_slice %116 {offsets = [0, 256], sizes = [8, 128], strides = [1, 1]} : vector<8x512xf32> to vector<8x128xf32>
      %130 = math.tanh %129 : vector<8x128xf32>
      %131 = vector.extract_strided_slice %116 {offsets = [0, 384], sizes = [8, 128], strides = [1, 1]} : vector<8x512xf32> to vector<8x128xf32>
      %132 = arith.negf %131 : vector<8x128xf32>
      %133 = math.exp %132 : vector<8x128xf32>
      %cst_40 = arith.constant 1.000000e+00 : f32
      %134 = vector.broadcast %cst_40 : f32 to vector<8x128xf32>
      %135 = arith.addf %134, %133 : vector<8x128xf32>
      %136 = arith.divf %134, %135 : vector<8x128xf32>
      %137 = arith.mulf %128, %105 : vector<8x128xf32>
      %138 = arith.mulf %122, %130 : vector<8x128xf32>
      %139 = arith.addf %137, %138 : vector<8x128xf32>
      %140 = math.tanh %139 : vector<8x128xf32>
      %141 = arith.mulf %136, %140 : vector<8x128xf32>
      %cst_41 = arith.constant dense<0.000000e+00> : vector<128xf32>
      %142 = vector.multi_reduction <add>, %141, %cst_41 [0] : vector<8x128xf32> to vector<128xf32>
      %143 = vector.shape_cast %142 : vector<128xf32> to vector<1x128xf32>
      %c4 = arith.constant 4 : index
      %c0_42 = arith.constant 0 : index
      %c0_43 = arith.constant 0 : index
      %144 = vector.load %arg2[%c4, %c0_42, %c0_43] : memref<8x8x512xbf16, #tpu.memory_space<vmem>>, vector<1x8x512xbf16>
      %145 = vector.shape_cast %144 : vector<1x8x512xbf16> to vector<8x512xbf16>
      %146 = arith.extf %145 : vector<8x512xbf16> to vector<8x512xf32>
      %147 = arith.truncf %141 : vector<8x128xf32> to vector<8x128xbf16>
      %c0_44 = arith.constant 0 : index
      %c0_45 = arith.constant 0 : index
      %148 = vector.load %arg7[%c0_44, %c0_45] : memref<128x512xbf16, #tpu.memory_space<vmem>>, vector<128x512xbf16>
      %cst_46 = arith.constant dense<0.000000e+00> : vector<8x512xf32>
      %149 = tpu.matmul %147, %148, %cst_46 {dimension_numbers = #tpu.dot_dimension_numbers<[1], [0], [0], [1], [0, 0, 1, 1], [], []>} : vector<8x128xbf16>, vector<128x512xbf16>, vector<8x512xf32> -> vector<8x512xf32>
      %150 = arith.addf %146, %149 : vector<8x512xf32>
      %151 = vector.extract_strided_slice %150 {offsets = [0, 0], sizes = [8, 128], strides = [1, 1]} : vector<8x512xf32> to vector<8x128xf32>
      %152 = arith.negf %151 : vector<8x128xf32>
      %153 = math.exp %152 : vector<8x128xf32>
      %cst_47 = arith.constant 1.000000e+00 : f32
      %154 = vector.broadcast %cst_47 : f32 to vector<8x128xf32>
      %155 = arith.addf %154, %153 : vector<8x128xf32>
      %156 = arith.divf %154, %155 : vector<8x128xf32>
      %157 = vector.extract_strided_slice %150 {offsets = [0, 128], sizes = [8, 128], strides = [1, 1]} : vector<8x512xf32> to vector<8x128xf32>
      %158 = arith.negf %157 : vector<8x128xf32>
      %159 = math.exp %158 : vector<8x128xf32>
      %cst_48 = arith.constant 1.000000e+00 : f32
      %160 = vector.broadcast %cst_48 : f32 to vector<8x128xf32>
      %161 = arith.addf %160, %159 : vector<8x128xf32>
      %162 = arith.divf %160, %161 : vector<8x128xf32>
      %163 = vector.extract_strided_slice %150 {offsets = [0, 256], sizes = [8, 128], strides = [1, 1]} : vector<8x512xf32> to vector<8x128xf32>
      %164 = math.tanh %163 : vector<8x128xf32>
      %165 = vector.extract_strided_slice %150 {offsets = [0, 384], sizes = [8, 128], strides = [1, 1]} : vector<8x512xf32> to vector<8x128xf32>
      %166 = arith.negf %165 : vector<8x128xf32>
      %167 = math.exp %166 : vector<8x128xf32>
      %cst_49 = arith.constant 1.000000e+00 : f32
      %168 = vector.broadcast %cst_49 : f32 to vector<8x128xf32>
      %169 = arith.addf %168, %167 : vector<8x128xf32>
      %170 = arith.divf %168, %169 : vector<8x128xf32>
      %171 = arith.mulf %162, %139 : vector<8x128xf32>
      %172 = arith.mulf %156, %164 : vector<8x128xf32>
      %173 = arith.addf %171, %172 : vector<8x128xf32>
      %174 = math.tanh %173 : vector<8x128xf32>
      %175 = arith.mulf %170, %174 : vector<8x128xf32>
      %cst_50 = arith.constant dense<0.000000e+00> : vector<128xf32>
      %176 = vector.multi_reduction <add>, %175, %cst_50 [0] : vector<8x128xf32> to vector<128xf32>
      %177 = vector.shape_cast %176 : vector<128xf32> to vector<1x128xf32>
      %c5 = arith.constant 5 : index
      %c0_51 = arith.constant 0 : index
      %c0_52 = arith.constant 0 : index
      %178 = vector.load %arg2[%c5, %c0_51, %c0_52] : memref<8x8x512xbf16, #tpu.memory_space<vmem>>, vector<1x8x512xbf16>
      %179 = vector.shape_cast %178 : vector<1x8x512xbf16> to vector<8x512xbf16>
      %180 = arith.extf %179 : vector<8x512xbf16> to vector<8x512xf32>
      %181 = arith.truncf %175 : vector<8x128xf32> to vector<8x128xbf16>
      %c0_53 = arith.constant 0 : index
      %c0_54 = arith.constant 0 : index
      %182 = vector.load %arg7[%c0_53, %c0_54] : memref<128x512xbf16, #tpu.memory_space<vmem>>, vector<128x512xbf16>
      %cst_55 = arith.constant dense<0.000000e+00> : vector<8x512xf32>
      %183 = tpu.matmul %181, %182, %cst_55 {dimension_numbers = #tpu.dot_dimension_numbers<[1], [0], [0], [1], [0, 0, 1, 1], [], []>} : vector<8x128xbf16>, vector<128x512xbf16>, vector<8x512xf32> -> vector<8x512xf32>
      %184 = arith.addf %180, %183 : vector<8x512xf32>
      %185 = vector.extract_strided_slice %184 {offsets = [0, 0], sizes = [8, 128], strides = [1, 1]} : vector<8x512xf32> to vector<8x128xf32>
      %186 = arith.negf %185 : vector<8x128xf32>
      %187 = math.exp %186 : vector<8x128xf32>
      %cst_56 = arith.constant 1.000000e+00 : f32
      %188 = vector.broadcast %cst_56 : f32 to vector<8x128xf32>
      %189 = arith.addf %188, %187 : vector<8x128xf32>
      %190 = arith.divf %188, %189 : vector<8x128xf32>
      %191 = vector.extract_strided_slice %184 {offsets = [0, 128], sizes = [8, 128], strides = [1, 1]} : vector<8x512xf32> to vector<8x128xf32>
      %192 = arith.negf %191 : vector<8x128xf32>
      %193 = math.exp %192 : vector<8x128xf32>
      %cst_57 = arith.constant 1.000000e+00 : f32
      %194 = vector.broadcast %cst_57 : f32 to vector<8x128xf32>
      %195 = arith.addf %194, %193 : vector<8x128xf32>
      %196 = arith.divf %194, %195 : vector<8x128xf32>
      %197 = vector.extract_strided_slice %184 {offsets = [0, 256], sizes = [8, 128], strides = [1, 1]} : vector<8x512xf32> to vector<8x128xf32>
      %198 = math.tanh %197 : vector<8x128xf32>
      %199 = vector.extract_strided_slice %184 {offsets = [0, 384], sizes = [8, 128], strides = [1, 1]} : vector<8x512xf32> to vector<8x128xf32>
      %200 = arith.negf %199 : vector<8x128xf32>
      %201 = math.exp %200 : vector<8x128xf32>
      %cst_58 = arith.constant 1.000000e+00 : f32
      %202 = vector.broadcast %cst_58 : f32 to vector<8x128xf32>
      %203 = arith.addf %202, %201 : vector<8x128xf32>
      %204 = arith.divf %202, %203 : vector<8x128xf32>
      %205 = arith.mulf %196, %173 : vector<8x128xf32>
      %206 = arith.mulf %190, %198 : vector<8x128xf32>
      %207 = arith.addf %205, %206 : vector<8x128xf32>
      %208 = math.tanh %207 : vector<8x128xf32>
      %209 = arith.mulf %204, %208 : vector<8x128xf32>
      %cst_59 = arith.constant dense<0.000000e+00> : vector<128xf32>
      %210 = vector.multi_reduction <add>, %209, %cst_59 [0] : vector<8x128xf32> to vector<128xf32>
      %211 = vector.shape_cast %210 : vector<128xf32> to vector<1x128xf32>
      %c6 = arith.constant 6 : index
      %c0_60 = arith.constant 0 : index
      %c0_61 = arith.constant 0 : index
      %212 = vector.load %arg2[%c6, %c0_60, %c0_61] : memref<8x8x512xbf16, #tpu.memory_space<vmem>>, vector<1x8x512xbf16>
      %213 = vector.shape_cast %212 : vector<1x8x512xbf16> to vector<8x512xbf16>
      %214 = arith.extf %213 : vector<8x512xbf16> to vector<8x512xf32>
      %215 = arith.truncf %209 : vector<8x128xf32> to vector<8x128xbf16>
      %c0_62 = arith.constant 0 : index
      %c0_63 = arith.constant 0 : index
      %216 = vector.load %arg7[%c0_62, %c0_63] : memref<128x512xbf16, #tpu.memory_space<vmem>>, vector<128x512xbf16>
      %cst_64 = arith.constant dense<0.000000e+00> : vector<8x512xf32>
      %217 = tpu.matmul %215, %216, %cst_64 {dimension_numbers = #tpu.dot_dimension_numbers<[1], [0], [0], [1], [0, 0, 1, 1], [], []>} : vector<8x128xbf16>, vector<128x512xbf16>, vector<8x512xf32> -> vector<8x512xf32>
      %218 = arith.addf %214, %217 : vector<8x512xf32>
      %219 = vector.extract_strided_slice %218 {offsets = [0, 0], sizes = [8, 128], strides = [1, 1]} : vector<8x512xf32> to vector<8x128xf32>
      %220 = arith.negf %219 : vector<8x128xf32>
      %221 = math.exp %220 : vector<8x128xf32>
      %cst_65 = arith.constant 1.000000e+00 : f32
      %222 = vector.broadcast %cst_65 : f32 to vector<8x128xf32>
      %223 = arith.addf %222, %221 : vector<8x128xf32>
      %224 = arith.divf %222, %223 : vector<8x128xf32>
      %225 = vector.extract_strided_slice %218 {offsets = [0, 128], sizes = [8, 128], strides = [1, 1]} : vector<8x512xf32> to vector<8x128xf32>
      %226 = arith.negf %225 : vector<8x128xf32>
      %227 = math.exp %226 : vector<8x128xf32>
      %cst_66 = arith.constant 1.000000e+00 : f32
      %228 = vector.broadcast %cst_66 : f32 to vector<8x128xf32>
      %229 = arith.addf %228, %227 : vector<8x128xf32>
      %230 = arith.divf %228, %229 : vector<8x128xf32>
      %231 = vector.extract_strided_slice %218 {offsets = [0, 256], sizes = [8, 128], strides = [1, 1]} : vector<8x512xf32> to vector<8x128xf32>
      %232 = math.tanh %231 : vector<8x128xf32>
      %233 = vector.extract_strided_slice %218 {offsets = [0, 384], sizes = [8, 128], strides = [1, 1]} : vector<8x512xf32> to vector<8x128xf32>
      %234 = arith.negf %233 : vector<8x128xf32>
      %235 = math.exp %234 : vector<8x128xf32>
      %cst_67 = arith.constant 1.000000e+00 : f32
      %236 = vector.broadcast %cst_67 : f32 to vector<8x128xf32>
      %237 = arith.addf %236, %235 : vector<8x128xf32>
      %238 = arith.divf %236, %237 : vector<8x128xf32>
      %239 = arith.mulf %230, %207 : vector<8x128xf32>
      %240 = arith.mulf %224, %232 : vector<8x128xf32>
      %241 = arith.addf %239, %240 : vector<8x128xf32>
      %242 = math.tanh %241 : vector<8x128xf32>
      %243 = arith.mulf %238, %242 : vector<8x128xf32>
      %cst_68 = arith.constant dense<0.000000e+00> : vector<128xf32>
      %244 = vector.multi_reduction <add>, %243, %cst_68 [0] : vector<8x128xf32> to vector<128xf32>
      %245 = vector.shape_cast %244 : vector<128xf32> to vector<1x128xf32>
      %c7 = arith.constant 7 : index
      %c0_69 = arith.constant 0 : index
      %c0_70 = arith.constant 0 : index
      %246 = vector.load %arg2[%c7, %c0_69, %c0_70] : memref<8x8x512xbf16, #tpu.memory_space<vmem>>, vector<1x8x512xbf16>
      %247 = vector.shape_cast %246 : vector<1x8x512xbf16> to vector<8x512xbf16>
      %248 = arith.extf %247 : vector<8x512xbf16> to vector<8x512xf32>
      %249 = arith.truncf %243 : vector<8x128xf32> to vector<8x128xbf16>
      %c0_71 = arith.constant 0 : index
      %c0_72 = arith.constant 0 : index
      %250 = vector.load %arg7[%c0_71, %c0_72] : memref<128x512xbf16, #tpu.memory_space<vmem>>, vector<128x512xbf16>
      %cst_73 = arith.constant dense<0.000000e+00> : vector<8x512xf32>
      %251 = tpu.matmul %249, %250, %cst_73 {dimension_numbers = #tpu.dot_dimension_numbers<[1], [0], [0], [1], [0, 0, 1, 1], [], []>} : vector<8x128xbf16>, vector<128x512xbf16>, vector<8x512xf32> -> vector<8x512xf32>
      %252 = arith.addf %248, %251 : vector<8x512xf32>
      %253 = vector.extract_strided_slice %252 {offsets = [0, 0], sizes = [8, 128], strides = [1, 1]} : vector<8x512xf32> to vector<8x128xf32>
      %254 = arith.negf %253 : vector<8x128xf32>
      %255 = math.exp %254 : vector<8x128xf32>
      %cst_74 = arith.constant 1.000000e+00 : f32
      %256 = vector.broadcast %cst_74 : f32 to vector<8x128xf32>
      %257 = arith.addf %256, %255 : vector<8x128xf32>
      %258 = arith.divf %256, %257 : vector<8x128xf32>
      %259 = vector.extract_strided_slice %252 {offsets = [0, 128], sizes = [8, 128], strides = [1, 1]} : vector<8x512xf32> to vector<8x128xf32>
      %260 = arith.negf %259 : vector<8x128xf32>
      %261 = math.exp %260 : vector<8x128xf32>
      %cst_75 = arith.constant 1.000000e+00 : f32
      %262 = vector.broadcast %cst_75 : f32 to vector<8x128xf32>
      %263 = arith.addf %262, %261 : vector<8x128xf32>
      %264 = arith.divf %262, %263 : vector<8x128xf32>
      %265 = vector.extract_strided_slice %252 {offsets = [0, 256], sizes = [8, 128], strides = [1, 1]} : vector<8x512xf32> to vector<8x128xf32>
      %266 = math.tanh %265 : vector<8x128xf32>
      %267 = vector.extract_strided_slice %252 {offsets = [0, 384], sizes = [8, 128], strides = [1, 1]} : vector<8x512xf32> to vector<8x128xf32>
      %268 = arith.negf %267 : vector<8x128xf32>
      %269 = math.exp %268 : vector<8x128xf32>
      %cst_76 = arith.constant 1.000000e+00 : f32
      %270 = vector.broadcast %cst_76 : f32 to vector<8x128xf32>
      %271 = arith.addf %270, %269 : vector<8x128xf32>
      %272 = arith.divf %270, %271 : vector<8x128xf32>
      %273 = arith.mulf %264, %241 : vector<8x128xf32>
      %274 = arith.mulf %258, %266 : vector<8x128xf32>
      %275 = arith.addf %273, %274 : vector<8x128xf32>
      %276 = math.tanh %275 : vector<8x128xf32>
      %277 = arith.mulf %272, %276 : vector<8x128xf32>
      %cst_77 = arith.constant dense<0.000000e+00> : vector<128xf32>
      %278 = vector.multi_reduction <add>, %277, %cst_77 [0] : vector<8x128xf32> to vector<128xf32>
      %279 = vector.shape_cast %278 : vector<128xf32> to vector<1x128xf32>
      %c0_78 = arith.constant 0 : index
      %c0_79 = arith.constant 0 : index
      %280 = vector.load %arg5[%c0_78, %c0_79] : memref<8x128xf32, #tpu.memory_space<vmem>>, vector<8x128xf32>
      tpu.vector_store %arg5[%c0_78, %c0_79], %277 {strides = array<i32>} : memref<8x128xf32, #tpu.memory_space<vmem>>, vector<8x128xf32>,
      %c0_80 = arith.constant 0 : index
      %c0_81 = arith.constant 0 : index
      %281 = vector.load %arg6[%c0_80, %c0_81] : memref<8x128xf32, #tpu.memory_space<vmem>>, vector<8x128xf32>
      tpu.vector_store %arg6[%c0_80, %c0_81], %275 {strides = array<i32>} : memref<8x128xf32, #tpu.memory_space<vmem>>, vector<8x128xf32>,
      %282 = tpu.concatenate %41, %75, %109, %143, %177, %211, %245, %279 in 0 : vector<1x128xf32>, vector<1x128xf32>, vector<1x128xf32>, vector<1x128xf32>, vector<1x128xf32>, vector<1x128xf32>, vector<1x128xf32>, vector<1x128xf32> -> vector<8x128xf32>
      %283 = vector.shape_cast %282 : vector<8x128xf32> to vector<1x8x128xf32>
      %c0_82 = arith.constant 0 : index
      %c0_83 = arith.constant 0 : index
      %c0_84 = arith.constant 0 : index
      %284 = vector.load %arg4[%c0_82, %c0_83, %c0_84] : memref<1x8x128xf32, #tpu.memory_space<vmem>>, vector<1x8x128xf32>
      tpu.vector_store %arg4[%c0_82, %c0_83, %c0_84], %283 {strides = array<i32>} : memref<1x8x128xf32, #tpu.memory_space<vmem>>, vector<1x8x128xf32>,
    } else {
    }
    return
  }
  func.func @transform_0(%arg0: i32, %arg1: i32) -> (i32, i32, i32) {
    %c0_i32 = arith.constant 0 : i32
    %c0_i32_0 = arith.constant 0 : i32
    return %arg1, %arg0, %c0_i32 : i32, i32, i32
  }
  func.func @transform_2(%arg0: i32, %arg1: i32) -> (i32, i32, i32) {
    %c0_i32 = arith.constant 0 : i32
    %c0_i32_0 = arith.constant 0 : i32
    return %arg0, %arg1, %c0_i32 : i32, i32, i32
  }
}

</mosaic_0001>

<llo_original>
// kernel: deepfake_detector_forward.2
$region0: #{deepfake_detector_forward.2}
  #allocation0 [shape = 'u32[]', space=smem, size = 0x4, offset = 0x4, fixed_abs, tag = 'smem constant byte address 0x4 - core index']
  #allocation1 [shape = 'u32[144,128]{1,0:T(1,128)}', space=vmem, size = 0x12000, scoped, tag = 'internal scratch']
  %s0 = inlined_call_operand.vmem [shape: f32[256,768], index: 0, kind: input, shape index: {}]
  %s1 = inlined_call_operand.vmem [shape: f32[3,128], index: 1, kind: input, shape index: {}]
  %s2 = inlined_call_operand.vmem [shape: f32[1,128], index: 2, kind: input, shape index: {}]
  %s3 = inlined_call_operand.vmem [shape: bf16[128,512], index: 3, kind: input, shape index: {}]
  %s4 = inlined_call_operand.vmem [shape: f32[1,512], index: 4, kind: input, shape index: {}]
  %s5 = inlined_call_operand.vmem [shape: bf16[256,512], index: 5, kind: output, shape index: {}]
  %s6 = sld [smem:[#allocation0]]
  $region53: #{deepfake_detector_forward.2} parent=0
    _
  %s8 = ssub.s32 1, %s6
  %s9 = scalar_select 0, %s8, %s6
  loop: start=0, step=1, limit=4
  $region2: #{deepfake_detector_forward.2} parent=0 // loop_pre_header
    _
  $region3: #{deepfake_detector_forward.2} parent=0 // loop_header
    %s11 = sphi 0, %s15
    %p12 = scmp.ge.s32.totalorder %s11, 4
    %s21 = sphi 0, %s23
    %s24 = sphi 0, %s21
    %s25 = sphi 0, %s24
    %s41 = sphi 0, %s25
    %s45 = sphi 0, %s45
    %s47 = sphi 0, %s45
    %s48 = sphi 0, %s47
    %s62 = sphi 0, %s48
    %s66 = sphi 0, %s66
    %s68 = sphi 0, %s66
    %s69 = sphi 0, %s68
    %s83 = sphi 0, %s69
    %s87 = sphi 0, %s87
    %s89 = sphi 0, %s87
    %s90 = sphi 0, %s89
    %s104 = sphi 0, %s90
    %s108 = sphi 0, %s108
    %s110 = sphi 0, %s108
    %s111 = sphi 0, %s110
    %s125 = sphi 0, %s111
    %s131 = sphi 0, %s133
    %s134 = sphi 0, %s131
    %s135 = sphi 0, %s134
    %s151 = sphi 0, %s135
  $region4: #{deepfake_detector_forward.2} parent=0 // loop_header_branch
    %14 = sbr.rel (%p12) target = $region8
  $region5: #{deepfake_detector_forward.2} parent=0 // loop_body
    %s16 = ssub.s32 %s11, 1
    %s17 = ssub.s32 %s11, 2
    %s18 = sadd.s32 %s11, 1
    %s19 = ssub.s32 %s11, %s18
    %p20 = scmp.eq.s32.totalorder %s19, 0
    %s22 = sadd.s32 %s21, 1
    %s23 = scalar_select %p20, %s21, %s22
    %p26 = pneg %p20
    %p27 = scmp.eq.s32.totalorder %s11, 1
    %p28 = por %p26, %p27
    %p29 = scmp.ne.s32.totalorder %s21, %s24
    %p30 = scmp.eq.s32.totalorder %s11, 0
    %p31 = por %p29, %p30
    %p32 = scmp.ne.s32.totalorder %s21, %s24
    %p33 = scmp.eq.s32.totalorder %s16, 1
    %p34 = por %p32, %p33
    %p35 = scmp.ne.s32.totalorder %s24, %s25
    %p36 = scmp.eq.s32.totalorder %s16, 0
    %p37 = por %p35, %p36
    %p38 = scmp.ne.s32.totalorder %s24, %s25
    %p39 = scmp.eq.s32.totalorder %s17, 1
    %p40 = por %p38, %p39
    %p42 = scmp.ne.s32.totalorder %s25, %s41
    %p43 = scmp.eq.s32.totalorder %s17, 0
    %p44 = por %p42, %p43
    %s46 = sadd.s32 %s45, 1
    %p49 = scmp.eq.s32.totalorder %s11, 1
    %p50 = scmp.ne.s32.totalorder %s45, %s47
    %p51 = scmp.eq.s32.totalorder %s11, 0
    %p52 = por %p50, %p51
    %p53 = scmp.ne.s32.totalorder %s45, %s47
    %p54 = scmp.eq.s32.totalorder %s16, 1
    %p55 = por %p53, %p54
    %p56 = scmp.ne.s32.totalorder %s47, %s48
    %p57 = scmp.eq.s32.totalorder %s16, 0
    %p58 = por %p56, %p57
    %p59 = scmp.ne.s32.totalorder %s47, %s48
    %p60 = scmp.eq.s32.totalorder %s17, 1
    %p61 = por %p59, %p60
    %p63 = scmp.ne.s32.totalorder %s48, %s62
    %p64 = scmp.eq.s32.totalorder %s17, 0
    %p65 = por %p63, %p64
    %s67 = sadd.s32 %s66, 1
    %p70 = scmp.eq.s32.totalorder %s11, 1
    %p71 = scmp.ne.s32.totalorder %s66, %s68
    %p72 = scmp.eq.s32.totalorder %s11, 0
    %p73 = por %p71, %p72
    %p74 = scmp.ne.s32.totalorder %s66, %s68
    %p75 = scmp.eq.s32.totalorder %s16, 1
    %p76 = por %p74, %p75
    %p77 = scmp.ne.s32.totalorder %s68, %s69
    %p78 = scmp.eq.s32.totalorder %s16, 0
    %p79 = por %p77, %p78
    %p80 = scmp.ne.s32.totalorder %s68, %s69
    %p81 = scmp.eq.s32.totalorder %s17, 1
    %p82 = por %p80, %p81
    %p84 = scmp.ne.s32.totalorder %s69, %s83
    %p85 = scmp.eq.s32.totalorder %s17, 0
    %p86 = por %p84, %p85
    %s88 = sadd.s32 %s87, 1
    %p91 = scmp.eq.s32.totalorder %s11, 1
    %p92 = scmp.ne.s32.totalorder %s87, %s89
    %p93 = scmp.eq.s32.totalorder %s11, 0
    %p94 = por %p92, %p93
    %p95 = scmp.ne.s32.totalorder %s87, %s89
    %p96 = scmp.eq.s32.totalorder %s16, 1
    %p97 = por %p95, %p96
    %p98 = scmp.ne.s32.totalorder %s89, %s90
    %p99 = scmp.eq.s32.totalorder %s16, 0
    %p100 = por %p98, %p99
    %p101 = scmp.ne.s32.totalorder %s89, %s90
    %p102 = scmp.eq.s32.totalorder %s17, 1
    %p103 = por %p101, %p102
    %p105 = scmp.ne.s32.totalorder %s90, %s104
    %p106 = scmp.eq.s32.totalorder %s17, 0
    %p107 = por %p105, %p106
    %s109 = sadd.s32 %s108, 1
    %p112 = scmp.eq.s32.totalorder %s11, 1
    %p113 = scmp.ne.s32.totalorder %s108, %s110
    %p114 = scmp.eq.s32.totalorder %s11, 0
    %p115 = por %p113, %p114
    %p116 = scmp.ne.s32.totalorder %s108, %s110
    %p117 = scmp.eq.s32.totalorder %s16, 1
    %p118 = por %p116, %p117
    %p119 = scmp.ne.s32.totalorder %s110, %s111
    %p120 = scmp.eq.s32.totalorder %s16, 0
    %p121 = por %p119, %p120
    %p122 = scmp.ne.s32.totalorder %s110, %s111
    %p123 = scmp.eq.s32.totalorder %s17, 1
    %p124 = por %p122, %p123
    %p126 = scmp.ne.s32.totalorder %s111, %s125
    %p127 = scmp.eq.s32.totalorder %s17, 0
    %p128 = por %p126, %p127
    %s129 = ssub.s32 %s11, %s18
    %p130 = scmp.eq.s32.totalorder %s129, 0
    %s132 = sadd.s32 %s131, 1
    %s133 = scalar_select %p130, %s131, %s132
    %p136 = pneg %p130
    %p137 = scmp.eq.s32.totalorder %s11, 1
    %p138 = por %p136, %p137
    %p139 = scmp.ne.s32.totalorder %s131, %s134
    %p140 = scmp.eq.s32.totalorder %s11, 0
    %p141 = por %p139, %p140
    %p142 = scmp.ne.s32.totalorder %s131, %s134
    %p143 = scmp.eq.s32.totalorder %s16, 1
    %p144 = por %p142, %p143
    %p145 = scmp.ne.s32.totalorder %s134, %s135
    %p146 = scmp.eq.s32.totalorder %s16, 0
    %p147 = por %p145, %p146
    %p148 = scmp.ne.s32.totalorder %s134, %s135
    %p149 = scmp.eq.s32.totalorder %s17, 1
    %p150 = por %p148, %p149
    %p152 = scmp.ne.s32.totalorder %s135, %s151
    %p153 = scmp.eq.s32.totalorder %s17, 0
    %p154 = por %p152, %p153
    %p155 = scmp.le.s32.totalorder 1, %s11
    %p156 = scmp.lt.s32.totalorder %s11, 3
    %p157 = pnand %p155, %p156
    %p158 = pneg %p157
    // Predicated region
    $region9: #{deepfake_detector_forward.2} parent=5 // pred_check
      _
    $region10: #{deepfake_detector_forward.2} parent=5 // pred_check_branch
      %160 = sbr.rel (%p157) target = $region12
    $region11: #{deepfake_detector_forward.2} parent=5 // pred_region
      %s161 = ssub.s32 %s11, 1
      // Predicated region
      $region13: #{deepfake_detector_forward.2} parent=11 // pred_check
        %p162 = pneg %p58
      $region14: #{deepfake_detector_forward.2} parent=11 // pred_check_branch
        %164 = sbr.rel (%p162) target = $region16
      $region15: #{deepfake_detector_forward.2} parent=11 // pred_region
        _
      $region16: #{deepfake_detector_forward.2} parent=11 // pred_fallthru
        _
      // Predicated region
      $region17: #{deepfake_detector_forward.2} parent=11 // pred_check
        %p165 = pneg %p79
      $region18: #{deepfake_detector_forward.2} parent=11 // pred_check_branch
        %167 = sbr.rel (%p165) target = $region20
      $region19: #{deepfake_detector_forward.2} parent=11 // pred_region
        _
      $region20: #{deepfake_detector_forward.2} parent=11 // pred_fallthru
        _
      // Predicated region
      $region21: #{deepfake_detector_forward.2} parent=11 // pred_check
        %p168 = pneg %p100
      $region22: #{deepfake_detector_forward.2} parent=11 // pred_check_branch
        %170 = sbr.rel (%p168) target = $region24
      $region23: #{deepfake_detector_forward.2} parent=11 // pred_region
        _
      $region24: #{deepfake_detector_forward.2} parent=11 // pred_fallthru
        _
      // Predicated region
      $region25: #{deepfake_detector_forward.2} parent=11 // pred_check
        %p171 = pneg %p121
      $region26: #{deepfake_detector_forward.2} parent=11 // pred_check_branch
        %173 = sbr.rel (%p171) target = $region28
      $region27: #{deepfake_detector_forward.2} parent=11 // pred_region
        _
      $region28: #{deepfake_detector_forward.2} parent=11 // pred_fallthru
        _
    $region12: #{deepfake_detector_forward.2} parent=5 // pred_fallthru
      _
    %p174 = scmp.lt.s32.totalorder %s11, 2
    // Predicated region
    $region29: #{deepfake_detector_forward.2} parent=5 // pred_check
      %p175 = pneg %p174
    $region30: #{deepfake_detector_forward.2} parent=5 // pred_check_branch
      %177 = sbr.rel (%p175) target = $region32
    $region31: #{deepfake_detector_forward.2} parent=5 // pred_region
      // Predicated region
      $region33: #{deepfake_detector_forward.2} parent=31 // pred_check
        %p178 = pneg %p31
      $region34: #{deepfake_detector_forward.2} parent=31 // pred_check_branch
        %180 = sbr.rel (%p178) target = $region36
      $region35: #{deepfake_detector_forward.2} parent=31 // pred_region
        %s181 = smul.u32 16, %s11
        %p182 = scmp.lt.s32.totalorder %s181, 31
        %s183 = scalar_select %p182, %s181, 31
        %s184 = smul.addr %s183, 6
        %s185 = smul.addr %s184, 8
        %s186 = scalar_lea.vmem %s0, %s185
        %s187 = smul.u32 16, %s11
      $region36: #{deepfake_detector_forward.2} parent=31 // pred_fallthru
        _
    $region32: #{deepfake_detector_forward.2} parent=5 // pred_fallthru
      _
    %p188 = scmp.le.s32.totalorder 1, %s11
    %p189 = scmp.lt.s32.totalorder %s11, 3
    %p190 = pnand %p188, %p189
    %p191 = pneg %p190
    // Predicated region
    $region37: #{deepfake_detector_forward.2} parent=5 // pred_check
      _
    $region38: #{deepfake_detector_forward.2} parent=5 // pred_check_branch
      %193 = sbr.rel (%p190) target = $region40
    $region39: #{deepfake_detector_forward.2} parent=5 // pred_region
      %s194 = ssub.s32 %s11, 1
      %s195 = smul.u32 16, %s16
      %p196 = scmp.lt.s32.totalorder %s195, 31
      %s197 = scalar_select %p196, %s195, 31
      %s198 = smul.addr %s197, 6
      %s199 = smul.addr %s198, 8
      %s200 = scalar_lea.vmem %s0, %s199
      %p201 = pneg %p37
      %p202 = pneg %p34
      %p203 = pneg %p58
      %p204 = pneg %p55
      %p205 = pneg %p79
      %p206 = pneg %p76
      %p207 = pneg %p100
      %p208 = pneg %p97
      %p209 = pneg %p121
      %p210 = pneg %p118
      %p211 = pneg %p147
      %p212 = pneg %p144
      %s213 = smul.u32 16, %s16
      %p214 = scmp.lt.s32.totalorder %s213, 31
      %s215 = scalar_select %p214, %s213, 31
      %s216 = smul.addr %s215, 4
      %s217 = smul.addr %s216, 4
      %s218 = scalar_lea.vmem %s5, %s217
      %s219 = smul.u32 16, %s16
      %p220 = scmp.lt.s32.totalorder %s219, 31
      %s221 = scalar_select %p220, %s219, 31
      %s222 = smul.addr %s221, 6
      %s223 = smul.addr %s222, 8
      %s224 = scalar_lea.vmem %s0, %s223
      %s225 = smul.u32 16, %s16
      %s226 = smul.u32 16, %s16
      %p227 = scmp.lt.s32.totalorder %s226, 31
      %s228 = scalar_select %p227, %s226, 31
      %s229 = smul.addr %s228, 4
      %s230 = smul.addr %s229, 4
      %s231 = scalar_lea.vmem %s5, %s230
      %s232 = smul.u32 16, %s16
      %v234 = vld [vmem:[%s224] sm:$0xff]
      %v235 = vld [vmem:[%s224 + $0x8] sm:$0xff]
      %v236 = vld [vmem:[%s224 + $0x10] sm:$0xff]
      %v237 = vld [vmem:[%s224 + $0x18] sm:$0xff]
      %v238 = vld [vmem:[%s224 + $0x20] sm:$0xff]
      %v239 = vld [vmem:[%s224 + $0x28] sm:$0xff]
      %v240 = vld [vmem:[%s224 + $0x30] sm:$0xff]
      %v241 = vld [vmem:[%s224 + $0x38] sm:$0xff]
      %v242 = vld [vmem:[%s224 + $0x40] sm:$0xff]
      %v243 = vld [vmem:[%s224 + $0x48] sm:$0xff]
      %v244 = vld [vmem:[%s224 + $0x50] sm:$0xff]
      %v245 = vld [vmem:[%s224 + $0x58] sm:$0xff]
      %v246 = vld [vmem:[%s224 + $0x60] sm:$0xff]
      %v247 = vld [vmem:[%s224 + $0x68] sm:$0xff]
      %v248 = vld [vmem:[%s224 + $0x70] sm:$0xff]
      %v249 = vld [vmem:[%s224 + $0x78] sm:$0xff]
      %v250 = vld [vmem:[%s224 + $0x80] sm:$0xff]
      %v251 = vld [vmem:[%s224 + $0x88] sm:$0xff]
      %v252 = vld [vmem:[%s224 + $0x90] sm:$0xff]
      %v253 = vld [vmem:[%s224 + $0x98] sm:$0xff]
      %v254 = vld [vmem:[%s224 + $0xa0] sm:$0xff]
      %v255 = vld [vmem:[%s224 + $0xa8] sm:$0xff]
      %v256 = vld [vmem:[%s224 + $0xb0] sm:$0xff]
      %v257 = vld [vmem:[%s224 + $0xb8] sm:$0xff]
      %v258 = vld [vmem:[%s224 + $0xc0] sm:$0xff]
      %v259 = vld [vmem:[%s224 + $0xc8] sm:$0xff]
      %v260 = vld [vmem:[%s224 + $0xd0] sm:$0xff]
      %v261 = vld [vmem:[%s224 + $0xd8] sm:$0xff]
      %v262 = vld [vmem:[%s224 + $0xe0] sm:$0xff]
      %v263 = vld [vmem:[%s224 + $0xe8] sm:$0xff]
      %v264 = vld [vmem:[%s224 + $0xf0] sm:$0xff]
      %v265 = vld [vmem:[%s224 + $0xf8] sm:$0xff]
      %v266 = vld [vmem:[%s224 + $0x100] sm:$0xff]
      %v267 = vld [vmem:[%s224 + $0x108] sm:$0xff]
      %v268 = vld [vmem:[%s224 + $0x110] sm:$0xff]
      %v269 = vld [vmem:[%s224 + $0x118] sm:$0xff]
      %v270 = vld [vmem:[%s224 + $0x120] sm:$0xff]
      %v271 = vld [vmem:[%s224 + $0x128] sm:$0xff]
      %v272 = vld [vmem:[%s224 + $0x130] sm:$0xff]
      %v273 = vld [vmem:[%s224 + $0x138] sm:$0xff]
      %v274 = vld [vmem:[%s224 + $0x140] sm:$0xff]
      %v275 = vld [vmem:[%s224 + $0x148] sm:$0xff]
      %v276 = vld [vmem:[%s224 + $0x150] sm:$0xff]
      %v277 = vld [vmem:[%s224 + $0x158] sm:$0xff]
      %v278 = vld [vmem:[%s224 + $0x160] sm:$0xff]
      %v279 = vld [vmem:[%s224 + $0x168] sm:$0xff]
      %v280 = vld [vmem:[%s224 + $0x170] sm:$0xff]
      %v281 = vld [vmem:[%s224 + $0x178] sm:$0xff]
      %v282 = vld [vmem:[%s224 + $0x180] sm:$0xff]
      %v283 = vld [vmem:[%s224 + $0x188] sm:$0xff]
      %v284 = vld [vmem:[%s224 + $0x190] sm:$0xff]
      %v285 = vld [vmem:[%s224 + $0x198] sm:$0xff]
      %v286 = vld [vmem:[%s224 + $0x1a0] sm:$0xff]
      %v287 = vld [vmem:[%s224 + $0x1a8] sm:$0xff]
      %v288 = vld [vmem:[%s224 + $0x1b0] sm:$0xff]
      %v289 = vld [vmem:[%s224 + $0x1b8] sm:$0xff]
      %v290 = vld [vmem:[%s224 + $0x1c0] sm:$0xff]
      %v291 = vld [vmem:[%s224 + $0x1c8] sm:$0xff]
      %v292 = vld [vmem:[%s224 + $0x1d0] sm:$0xff]
      %v293 = vld [vmem:[%s224 + $0x1d8] sm:$0xff]
      %v294 = vld [vmem:[%s224 + $0x1e0] sm:$0xff]
      %v295 = vld [vmem:[%s224 + $0x1e8] sm:$0xff]
      %v296 = vld [vmem:[%s224 + $0x1f0] sm:$0xff]
      %v297 = vld [vmem:[%s224 + $0x1f8] sm:$0xff]
      %v298 = vld [vmem:[%s224 + $0x200] sm:$0xff]
      %v299 = vld [vmem:[%s224 + $0x208] sm:$0xff]
      %v300 = vld [vmem:[%s224 + $0x210] sm:$0xff]
      %v301 = vld [vmem:[%s224 + $0x218] sm:$0xff]
      %v302 = vld [vmem:[%s224 + $0x220] sm:$0xff]
      %v303 = vld [vmem:[%s224 + $0x228] sm:$0xff]
      %v304 = vld [vmem:[%s224 + $0x230] sm:$0xff]
      %v305 = vld [vmem:[%s224 + $0x238] sm:$0xff]
      %v306 = vld [vmem:[%s224 + $0x240] sm:$0xff]
      %v307 = vld [vmem:[%s224 + $0x248] sm:$0xff]
      %v308 = vld [vmem:[%s224 + $0x250] sm:$0xff]
      %v309 = vld [vmem:[%s224 + $0x258] sm:$0xff]
      %v310 = vld [vmem:[%s224 + $0x260] sm:$0xff]
      %v311 = vld [vmem:[%s224 + $0x268] sm:$0xff]
      %v312 = vld [vmem:[%s224 + $0x270] sm:$0xff]
      %v313 = vld [vmem:[%s224 + $0x278] sm:$0xff]
      %v314 = vld [vmem:[%s224 + $0x280] sm:$0xff]
      %v315 = vld [vmem:[%s224 + $0x288] sm:$0xff]
      %v316 = vld [vmem:[%s224 + $0x290] sm:$0xff]
      %v317 = vld [vmem:[%s224 + $0x298] sm:$0xff]
      %v318 = vld [vmem:[%s224 + $0x2a0] sm:$0xff]
      %v319 = vld [vmem:[%s224 + $0x2a8] sm:$0xff]
      %v320 = vld [vmem:[%s224 + $0x2b0] sm:$0xff]
      %v321 = vld [vmem:[%s224 + $0x2b8] sm:$0xff]
      %v322 = vld [vmem:[%s224 + $0x2c0] sm:$0xff]
      %v323 = vld [vmem:[%s224 + $0x2c8] sm:$0xff]
      %v324 = vld [vmem:[%s224 + $0x2d0] sm:$0xff]
      %v325 = vld [vmem:[%s224 + $0x2d8] sm:$0xff]
      %v326 = vld [vmem:[%s224 + $0x2e0] sm:$0xff]
      %v327 = vld [vmem:[%s224 + $0x2e8] sm:$0xff]
      %v328 = vld [vmem:[%s224 + $0x2f0] sm:$0xff]
      %v329 = vld [vmem:[%s224 + $0x2f8] sm:$0xff]
      %v330 = vld [vmem:[%s2] sm:$0x1]
      %v331 = vadd.f32 %v234, %v235
      %332 = vadd.xlane.f32.xlu0 %v331
      %v333 = vpop.xlane.xlu0 %332
      %v334 = vadd.f32 %v240, %v241
      %335 = vadd.xlane.f32.xlu0 %v334
      %v336 = vpop.xlane.xlu0 %335
      %v337 = vadd.f32 %v246, %v247
      %338 = vadd.xlane.f32.xlu0 %v337
      %v339 = vpop.xlane.xlu0 %338
      %v340 = vadd.f32 %v252, %v253
      %341 = vadd.xlane.f32.xlu0 %v340
      %v342 = vpop.xlane.xlu0 %341
      %v343 = vadd.f32 %v258, %v259
      %344 = vadd.xlane.f32.xlu0 %v343
      %v345 = vpop.xlane.xlu0 %344
      %v346 = vadd.f32 %v264, %v265
      %347 = vadd.xlane.f32.xlu0 %v346
      %v348 = vpop.xlane.xlu0 %347
      %v349 = vadd.f32 %v270, %v271
      %350 = vadd.xlane.f32.xlu0 %v349
      %v351 = vpop.xlane.xlu0 %350
      %v352 = vadd.f32 %v276, %v277
      %353 = vadd.xlane.f32.xlu0 %v352
      %v354 = vpop.xlane.xlu0 %353
      %v355 = vadd.f32 %v282, %v283
      %356 = vadd.xlane.f32.xlu0 %v355
      %v357 = vpop.xlane.xlu0 %356
      %v358 = vadd.f32 %v288, %v289
      %359 = vadd.xlane.f32.xlu0 %v358
      %v360 = vpop.xlane.xlu0 %359
      %v361 = vadd.f32 %v294, %v295
      %362 = vadd.xlane.f32.xlu0 %v361
      %v363 = vpop.xlane.xlu0 %362
      %v364 = vadd.f32 %v300, %v301
      %365 = vadd.xlane.f32.xlu0 %v364
      %v366 = vpop.xlane.xlu0 %365
      %v367 = vadd.f32 %v306, %v307
      %368 = vadd.xlane.f32.xlu0 %v367
      %v369 = vpop.xlane.xlu0 %368
      %v370 = vadd.f32 %v312, %v313
      %371 = vadd.xlane.f32.xlu0 %v370
      %v372 = vpop.xlane.xlu0 %371
      %v373 = vadd.f32 %v318, %v319
      %374 = vadd.xlane.f32.xlu0 %v373
      %v375 = vpop.xlane.xlu0 %374
      %v376 = vadd.f32 %v324, %v325
      %377 = vadd.xlane.f32.xlu0 %v376
      %v378 = vpop.xlane.xlu0 %377
      %v379 = vrcp.pop 256.0
      %v380 = vmul.f32 %v333, %v379
      %v381 = vmul.f32 %v336, %v379
      %v382 = vmul.f32 %v339, %v379
      %v383 = vmul.f32 %v342, %v379
      %v384 = vmul.f32 %v345, %v379
      %v385 = vmul.f32 %v348, %v379
      %v386 = vmul.f32 %v351, %v379
      %v387 = vmul.f32 %v354, %v379
      %v388 = vmul.f32 %v357, %v379
      %v389 = vmul.f32 %v360, %v379
      %v390 = vmul.f32 %v363, %v379
      %v391 = vmul.f32 %v366, %v379
      %v392 = vmul.f32 %v369, %v379
      %v393 = vmul.f32 %v372, %v379
      %v394 = vmul.f32 %v375, %v379
      %v395 = vmul.f32 %v378, %v379
      %v396 = vld [vmem:[%s1] sm:$0x1]
      %v397 = vlaneseq
      %v398 = vshrl.u32 %v397, 7
      %v399 = vsub.s32 0, %v398
      %v400 = vrot.slane %v396, %v399
      %v401 = vmul.f32 %v380, %v400
      %v402 = vmul.f32 %v381, %v400
      %v403 = vmul.f32 %v382, %v400
      %v404 = vmul.f32 %v383, %v400
      %v405 = vmul.f32 %v384, %v400
      %v406 = vmul.f32 %v385, %v400
      %v407 = vmul.f32 %v386, %v400
      %v408 = vmul.f32 %v387, %v400
      %v409 = vmul.f32 %v388, %v400
      %v410 = vmul.f32 %v389, %v400
      %v411 = vmul.f32 %v390, %v400
      %v412 = vmul.f32 %v391, %v400
      %v413 = vmul.f32 %v392, %v400
      %v414 = vmul.f32 %v393, %v400
      %v415 = vmul.f32 %v394, %v400
      %v416 = vmul.f32 %v395, %v400
      %v418 = vlaneseq
      %v419 = vshrl.u32 %v418, 7
      %v420 = vsub.s32 0, %v419
      %v421 = vrot.slane %v330, %v420
      %v423 = vadd.f32 %v421, %v401
      %v424 = vadd.f32 %v421, %v402
      %v425 = vadd.f32 %v421, %v403
      %v426 = vadd.f32 %v421, %v404
      %v427 = vadd.f32 %v421, %v405
      %v428 = vadd.f32 %v421, %v406
      %v429 = vadd.f32 %v421, %v407
      %v430 = vadd.f32 %v421, %v408
      %v431 = vadd.f32 %v421, %v409
      %v432 = vadd.f32 %v421, %v410
      %v433 = vadd.f32 %v421, %v411
      %v434 = vadd.f32 %v421, %v412
      %v435 = vadd.f32 %v421, %v413
      %v436 = vadd.f32 %v421, %v414
      %v437 = vadd.f32 %v421, %v415
      %v438 = vadd.f32 %v421, %v416
      %v439 = vadd.f32 %v236, %v237
      %440 = vadd.xlane.f32.xlu0 %v439
      %v441 = vpop.xlane.xlu0 %440
      %v442 = vadd.f32 %v242, %v243
      %443 = vadd.xlane.f32.xlu0 %v442
      %v444 = vpop.xlane.xlu0 %443
      %v445 = vadd.f32 %v248, %v249
      %446 = vadd.xlane.f32.xlu0 %v445
      %v447 = vpop.xlane.xlu0 %446
      %v448 = vadd.f32 %v254, %v255
      %449 = vadd.xlane.f32.xlu0 %v448
      %v450 = vpop.xlane.xlu0 %449
      %v451 = vadd.f32 %v260, %v261
      %452 = vadd.xlane.f32.xlu0 %v451
      %v453 = vpop.xlane.xlu0 %452
      %v454 = vadd.f32 %v266, %v267
      %455 = vadd.xlane.f32.xlu0 %v454
      %v456 = vpop.xlane.xlu0 %455
      %v457 = vadd.f32 %v272, %v273
      %458 = vadd.xlane.f32.xlu0 %v457
      %v459 = vpop.xlane.xlu0 %458
      %v460 = vadd.f32 %v278, %v279
      %461 = vadd.xlane.f32.xlu0 %v460
      %v462 = vpop.xlane.xlu0 %461
      %v463 = vadd.f32 %v284, %v285
      %464 = vadd.xlane.f32.xlu0 %v463
      %v465 = vpop.xlane.xlu0 %464
      %v466 = vadd.f32 %v290, %v291
      %467 = vadd.xlane.f32.xlu0 %v466
      %v468 = vpop.xlane.xlu0 %467
      %v469 = vadd.f32 %v296, %v297
      %470 = vadd.xlane.f32.xlu0 %v469
      %v471 = vpop.xlane.xlu0 %470
      %v472 = vadd.f32 %v302, %v303
      %473 = vadd.xlane.f32.xlu0 %v472
      %v474 = vpop.xlane.xlu0 %473
      %v475 = vadd.f32 %v308, %v309
      %476 = vadd.xlane.f32.xlu0 %v475
      %v477 = vpop.xlane.xlu0 %476
      %v478 = vadd.f32 %v314, %v315
      %479 = vadd.xlane.f32.xlu0 %v478
      %v480 = vpop.xlane.xlu0 %479
      %v481 = vadd.f32 %v320, %v321
      %482 = vadd.xlane.f32.xlu0 %v481
      %v483 = vpop.xlane.xlu0 %482
      %v484 = vadd.f32 %v326, %v327
      %485 = vadd.xlane.f32.xlu0 %v484
      %v486 = vpop.xlane.xlu0 %485
      %v487 = vmul.f32 %v441, %v379
      %v488 = vmul.f32 %v444, %v379
      %v489 = vmul.f32 %v447, %v379
      %v490 = vmul.f32 %v450, %v379
      %v491 = vmul.f32 %v453, %v379
      %v492 = vmul.f32 %v456, %v379
      %v493 = vmul.f32 %v459, %v379
      %v494 = vmul.f32 %v462, %v379
      %v495 = vmul.f32 %v465, %v379
      %v496 = vmul.f32 %v468, %v379
      %v497 = vmul.f32 %v471, %v379
      %v498 = vmul.f32 %v474, %v379
      %v499 = vmul.f32 %v477, %v379
      %v500 = vmul.f32 %v480, %v379
      %v501 = vmul.f32 %v483, %v379
      %v502 = vmul.f32 %v486, %v379
      %v503 = vld [vmem:[%s1 + $0x1] sm:$0x1]
      %v504 = vlaneseq
      %v505 = vshrl.u32 %v504, 7
      %v506 = vsub.s32 0, %v505
      %v507 = vrot.slane %v503, %v506
      %v508 = vmul.f32 %v487, %v507
      %v509 = vmul.f32 %v488, %v507
      %v510 = vmul.f32 %v489, %v507
      %v511 = vmul.f32 %v490, %v507
      %v512 = vmul.f32 %v491, %v507
      %v513 = vmul.f32 %v492, %v507
      %v514 = vmul.f32 %v493, %v507
      %v515 = vmul.f32 %v494, %v507
      %v516 = vmul.f32 %v495, %v507
      %v517 = vmul.f32 %v496, %v507
      %v518 = vmul.f32 %v497, %v507
      %v519 = vmul.f32 %v498, %v507
      %v520 = vmul.f32 %v499, %v507
      %v521 = vmul.f32 %v500, %v507
      %v522 = vmul.f32 %v501, %v507
      %v523 = vmul.f32 %v502, %v507
      %v524 = vadd.f32 %v423, %v508
      %v525 = vadd.f32 %v424, %v509
      %v526 = vadd.f32 %v425, %v510
      %v527 = vadd.f32 %v426, %v511
      %v528 = vadd.f32 %v427, %v512
      %v529 = vadd.f32 %v428, %v513
      %v530 = vadd.f32 %v429, %v514
      %v531 = vadd.f32 %v430, %v515
      %v532 = vadd.f32 %v431, %v516
      %v533 = vadd.f32 %v432, %v517
      %v534 = vadd.f32 %v433, %v518
      %v535 = vadd.f32 %v434, %v519
      %v536 = vadd.f32 %v435, %v520
      %v537 = vadd.f32 %v436, %v521
      %v538 = vadd.f32 %v437, %v522
      %v539 = vadd.f32 %v438, %v523
      %v540 = vadd.f32 %v238, %v239
      %541 = vadd.xlane.f32.xlu0 %v540
      %v542 = vpop.xlane.xlu0 %541
      %v543 = vadd.f32 %v244, %v245
      %544 = vadd.xlane.f32.xlu0 %v543
      %v545 = vpop.xlane.xlu0 %544
      %v546 = vadd.f32 %v250, %v251
      %547 = vadd.xlane.f32.xlu0 %v546
      %v548 = vpop.xlane.xlu0 %547
      %v549 = vadd.f32 %v256, %v257
      %550 = vadd.xlane.f32.xlu0 %v549
      %v551 = vpop.xlane.xlu0 %550
      %v552 = vadd.f32 %v262, %v263
      %553 = vadd.xlane.f32.xlu0 %v552
      %v554 = vpop.xlane.xlu0 %553
      %v555 = vadd.f32 %v268, %v269
      %556 = vadd.xlane.f32.xlu0 %v555
      %v557 = vpop.xlane.xlu0 %556
      %v558 = vadd.f32 %v274, %v275
      %559 = vadd.xlane.f32.xlu0 %v558
      %v560 = vpop.xlane.xlu0 %559
      %v561 = vadd.f32 %v280, %v281
      %562 = vadd.xlane.f32.xlu0 %v561
      %v563 = vpop.xlane.xlu0 %562
      %v564 = vadd.f32 %v286, %v287
      %565 = vadd.xlane.f32.xlu0 %v564
      %v566 = vpop.xlane.xlu0 %565
      %v567 = vadd.f32 %v292, %v293
      %568 = vadd.xlane.f32.xlu0 %v567
      %v569 = vpop.xlane.xlu0 %568
      %v570 = vadd.f32 %v298, %v299
      %571 = vadd.xlane.f32.xlu0 %v570
      %v572 = vpop.xlane.xlu0 %571
      %v573 = vadd.f32 %v304, %v305
      %574 = vadd.xlane.f32.xlu0 %v573
      %v575 = vpop.xlane.xlu0 %574
      %v576 = vadd.f32 %v310, %v311
      %577 = vadd.xlane.f32.xlu0 %v576
      %v578 = vpop.xlane.xlu0 %577
      %v579 = vadd.f32 %v316, %v317
      %580 = vadd.xlane.f32.xlu0 %v579
      %v581 = vpop.xlane.xlu0 %580
      %v582 = vadd.f32 %v322, %v323
      %583 = vadd.xlane.f32.xlu0 %v582
      %v584 = vpop.xlane.xlu0 %583
      %v585 = vadd.f32 %v328, %v329
      %586 = vadd.xlane.f32.xlu0 %v585
      %v587 = vpop.xlane.xlu0 %586
      %v588 = vmul.f32 %v542, %v379
      %v589 = vmul.f32 %v545, %v379
      %v590 = vmul.f32 %v548, %v379
      %v591 = vmul.f32 %v551, %v379
      %v592 = vmul.f32 %v554, %v379
      %v593 = vmul.f32 %v557, %v379
      %v594 = vmul.f32 %v560, %v379
      %v595 = vmul.f32 %v563, %v379
      %v596 = vmul.f32 %v566, %v379
      %v597 = vmul.f32 %v569, %v379
      %v598 = vmul.f32 %v572, %v379
      %v599 = vmul.f32 %v575, %v379
      %v600 = vmul.f32 %v578, %v379
      %v601 = vmul.f32 %v581, %v379
      %v602 = vmul.f32 %v584, %v379
      %v603 = vmul.f32 %v587, %v379
      %v604 = vld [vmem:[%s1 + $0x2] sm:$0x1]
      %v605 = vlaneseq
      %v606 = vshrl.u32 %v605, 7
      %v607 = vsub.s32 0, %v606
      %v608 = vrot.slane %v604, %v607
      %v609 = vmul.f32 %v588, %v608
      %v610 = vmul.f32 %v589, %v608
      %v611 = vmul.f32 %v590, %v608
      %v612 = vmul.f32 %v591, %v608
      %v613 = vmul.f32 %v592, %v608
      %v614 = vmul.f32 %v593, %v608
      %v615 = vmul.f32 %v594, %v608
      %v616 = vmul.f32 %v595, %v608
      %v617 = vmul.f32 %v596, %v608
      %v618 = vmul.f32 %v597, %v608
      %v619 = vmul.f32 %v598, %v608
      %v620 = vmul.f32 %v599, %v608
      %v621 = vmul.f32 %v600, %v608
      %v622 = vmul.f32 %v601, %v608
      %v623 = vmul.f32 %v602, %v608
      %v624 = vmul.f32 %v603, %v608
      %v625 = vadd.f32 %v524, %v609
      %v626 = vadd.f32 %v525, %v610
      %v627 = vadd.f32 %v526, %v611
      %v628 = vadd.f32 %v527, %v612
      %v629 = vadd.f32 %v528, %v613
      %v630 = vadd.f32 %v529, %v614
      %v631 = vadd.f32 %v530, %v615
      %v632 = vadd.f32 %v531, %v616
      %v633 = vadd.f32 %v532, %v617
      %v634 = vadd.f32 %v533, %v618
      %v635 = vadd.f32 %v534, %v619
      %v636 = vadd.f32 %v535, %v620
      %v637 = vadd.f32 %v536, %v621
      %v638 = vadd.f32 %v537, %v622
      %v639 = vadd.f32 %v538, %v623
      %v640 = vadd.f32 %v539, %v624
      %v641 = vpack.c.bf16 %v626, %v625
      %v642 = vpack.c.bf16 %v628, %v627
      %v643 = vpack.c.bf16 %v630, %v629
      %v644 = vpack.c.bf16 %v632, %v631
      %v645 = vpack.c.bf16 %v634, %v633
      %v646 = vpack.c.bf16 %v636, %v635
      %v647 = vpack.c.bf16 %v638, %v637
      %v648 = vpack.c.bf16 %v640, %v639
      %v649 = vld [vmem:[%s3] sm:$0xff]
      %v650 = vld [vmem:[%s3 + $0x8] sm:$0xff]
      %v651 = vld [vmem:[%s3 + $0x10] sm:$0xff]
      %v652 = vld [vmem:[%s3 + $0x18] sm:$0xff]
      %v653 = vld [vmem:[%s3 + $0x20] sm:$0xff]
      %v654 = vld [vmem:[%s3 + $0x28] sm:$0xff]
      %v655 = vld [vmem:[%s3 + $0x30] sm:$0xff]
      %v656 = vld [vmem:[%s3 + $0x38] sm:$0xff]
      %v657 = vld [vmem:[%s3 + $0x40] sm:$0xff]
      %v658 = vld [vmem:[%s3 + $0x48] sm:$0xff]
      %v659 = vld [vmem:[%s3 + $0x50] sm:$0xff]
      %v660 = vld [vmem:[%s3 + $0x58] sm:$0xff]
      %v661 = vld [vmem:[%s3 + $0x60] sm:$0xff]
      %v662 = vld [vmem:[%s3 + $0x68] sm:$0xff]
      %v663 = vld [vmem:[%s3 + $0x70] sm:$0xff]
      %v664 = vld [vmem:[%s3 + $0x78] sm:$0xff]
      %v665 = vld [vmem:[%s3 + $0x80] sm:$0xff]
      %v666 = vld [vmem:[%s3 + $0x88] sm:$0xff]
      %v667 = vld [vmem:[%s3 + $0x90] sm:$0xff]
      %v668 = vld [vmem:[%s3 + $0x98] sm:$0xff]
      %v669 = vld [vmem:[%s3 + $0xa0] sm:$0xff]
      %v670 = vld [vmem:[%s3 + $0xa8] sm:$0xff]
      %v671 = vld [vmem:[%s3 + $0xb0] sm:$0xff]
      %v672 = vld [vmem:[%s3 + $0xb8] sm:$0xff]
      %v673 = vld [vmem:[%s3 + $0xc0] sm:$0xff]
      %v674 = vld [vmem:[%s3 + $0xc8] sm:$0xff]
      %v675 = vld [vmem:[%s3 + $0xd0] sm:$0xff]
      %v676 = vld [vmem:[%s3 + $0xd8] sm:$0xff]
      %v677 = vld [vmem:[%s3 + $0xe0] sm:$0xff]
      %v678 = vld [vmem:[%s3 + $0xe8] sm:$0xff]
      %v679 = vld [vmem:[%s3 + $0xf0] sm:$0xff]
      %v680 = vld [vmem:[%s3 + $0xf8] sm:$0xff]
      %v681 = vld [vmem:[%s4] sm:$0xf]
      %v683 = vlaneseq
      %v684 = vshrl.u32 %v683, 7
      %v685 = vsub.s32 0, %v684
      %v686 = vrot.slane %v681, %v685
      %v687 = vlaneseq
      %v688 = vshrl.u32 %v687, 7
      %v689 = vsub.s32 1, %v688
      %v690 = vrot.slane %v681, %v689
      %v691 = vlaneseq
      %v692 = vshrl.u32 %v691, 7
      %v693 = vsub.s32 2, %v692
      %v694 = vrot.slane %v681, %v693
      %v695 = vlaneseq
      %v696 = vshrl.u32 %v695, 7
      %v697 = vsub.s32 3, %v696
      %v698 = vrot.slane %v681, %v697
      %v735 = vunpack.c.l.b16 %v649
      %v736 = vunpack.c.h.b16 %v649
      %v737 = vunpack.c.l.b16 %v650
      %v738 = vunpack.c.h.b16 %v650
      %v739 = vunpack.c.l.b16 %v651
      %v740 = vunpack.c.h.b16 %v651
      %v741 = vunpack.c.l.b16 %v652
      %v742 = vunpack.c.h.b16 %v652
      %v743 = vunpack.c.l.b16 %v653
      %v744 = vunpack.c.h.b16 %v653
      %v745 = vunpack.c.l.b16 %v654
      %v746 = vunpack.c.h.b16 %v654
      %v747 = vunpack.c.l.b16 %v655
      %v748 = vunpack.c.h.b16 %v655
      %v749 = vunpack.c.l.b16 %v656
      %v750 = vunpack.c.h.b16 %v656
      %v751 = vunpack.c.l.b16 %v657
      %v752 = vunpack.c.h.b16 %v657
      %v753 = vunpack.c.l.b16 %v658
      %v754 = vunpack.c.h.b16 %v658
      %v755 = vunpack.c.l.b16 %v659
      %v756 = vunpack.c.h.b16 %v659
      %v757 = vunpack.c.l.b16 %v660
      %v758 = vunpack.c.h.b16 %v660
      %v759 = vunpack.c.l.b16 %v661
      %v760 = vunpack.c.h.b16 %v661
      %v761 = vunpack.c.l.b16 %v662
      %v762 = vunpack.c.h.b16 %v662
      %v763 = vunpack.c.l.b16 %v663
      %v764 = vunpack.c.h.b16 %v663
      %v765 = vunpack.c.l.b16 %v664
      %v766 = vunpack.c.h.b16 %v664
      %v767 = vunpack.c.l.b16 %v665
      %v768 = vunpack.c.h.b16 %v665
      %v769 = vunpack.c.l.b16 %v666
      %v770 = vunpack.c.h.b16 %v666
      %v771 = vunpack.c.l.b16 %v667
      %v772 = vunpack.c.h.b16 %v667
      %v773 = vunpack.c.l.b16 %v668
      %v774 = vunpack.c.h.b16 %v668
      %v775 = vunpack.c.l.b16 %v669
      %v776 = vunpack.c.h.b16 %v669
      %v777 = vunpack.c.l.b16 %v670
      %v778 = vunpack.c.h.b16 %v670
      %v779 = vunpack.c.l.b16 %v671
      %v780 = vunpack.c.h.b16 %v671
      %v781 = vunpack.c.l.b16 %v672
      %v782 = vunpack.c.h.b16 %v672
      %v783 = vunpack.c.l.b16 %v673
      %v784 = vunpack.c.h.b16 %v673
      %v785 = vunpack.c.l.b16 %v674
      %v786 = vunpack.c.h.b16 %v674
      %v787 = vunpack.c.l.b16 %v675
      %v788 = vunpack.c.h.b16 %v675
      %v789 = vunpack.c.l.b16 %v676
      %v790 = vunpack.c.h.b16 %v676
      %v791 = vunpack.c.l.b16 %v677
      %v792 = vunpack.c.h.b16 %v677
      %v793 = vunpack.c.l.b16 %v678
      %v794 = vunpack.c.h.b16 %v678
      %v795 = vunpack.c.l.b16 %v679
      %v796 = vunpack.c.h.b16 %v679
      %v797 = vunpack.c.l.b16 %v680
      %v798 = vunpack.c.h.b16 %v680
      %v799 = vpack.c.b16 %v739, %v735
      %v800 = vpack.c.b16 %v740, %v736
      %v801 = vpack.c.b16 %v741, %v737
      %v802 = vpack.c.b16 %v742, %v738
      %v803 = vpack.c.b16 %v747, %v743
      %v804 = vpack.c.b16 %v748, %v744
      %v805 = vpack.c.b16 %v749, %v745
      %v806 = vpack.c.b16 %v750, %v746
      %v807 = vpack.c.b16 %v755, %v751
      %v808 = vpack.c.b16 %v756, %v752
      %v809 = vpack.c.b16 %v757, %v753
      %v810 = vpack.c.b16 %v758, %v754
      %v811 = vpack.c.b16 %v763, %v759
      %v812 = vpack.c.b16 %v764, %v760
      %v813 = vpack.c.b16 %v765, %v761
      %v814 = vpack.c.b16 %v766, %v762
      %v815 = vpack.c.b16 %v771, %v767
      %v816 = vpack.c.b16 %v772, %v768
      %v817 = vpack.c.b16 %v773, %v769
      %v818 = vpack.c.b16 %v774, %v770
      %v819 = vpack.c.b16 %v779, %v775
      %v820 = vpack.c.b16 %v780, %v776
      %v821 = vpack.c.b16 %v781, %v777
      %v822 = vpack.c.b16 %v782, %v778
      %v823 = vpack.c.b16 %v787, %v783
      %v824 = vpack.c.b16 %v788, %v784
      %v825 = vpack.c.b16 %v789, %v785
      %v826 = vpack.c.b16 %v790, %v786
      %v827 = vpack.c.b16 %v795, %v791
      %v828 = vpack.c.b16 %v796, %v792
      %v829 = vpack.c.b16 %v797, %v793
      %v830 = vpack.c.b16 %v798, %v794
      %863 = vmatprep.subr.bf16.mxu0 %v828
      %864 = vmatpush1.bf16.msra.mxu0 %v827
      %865 = vmatprep.subr.bf16.mxu0 %v824
      %866 = vmatpush1.bf16.msra.mxu0 %v823
      %867 = vmatprep.subr.bf16.mxu0 %v820
      %868 = vmatpush1.bf16.msra.mxu0 %v819
      %869 = vmatprep.subr.bf16.mxu0 %v816
      %870 = vmatpush1.bf16.msra.mxu0 %v815
      %871 = vmatprep.subr.bf16.mxu0 %v812
      %872 = vmatpush1.bf16.msra.mxu0 %v811
      %873 = vmatprep.subr.bf16.mxu0 %v808
      %874 = vmatpush1.bf16.msra.mxu0 %v807
      %875 = vmatprep.subr.bf16.mxu0 %v804
      %876 = vmatpush1.bf16.msra.mxu0 %v803
      %877 = vmatprep.subr.bf16.mxu0 %v800
      %878 = vmatpush1.bf16.msra.mxu0 %v799
      %879 = vmatprep.subr.bf16.mxu0 0
      %880 = vmatpush2.bf16.msra.mxu0 0
      %881 = vmatprep.subr.bf16.mxu0 0
      %882 = vmatpush2.bf16.msra.mxu0 0
      %883 = vmatprep.subr.bf16.mxu0 0
      %884 = vmatpush2.bf16.msra.mxu0 0
      %885 = vmatprep.subr.bf16.mxu0 0
      %886 = vmatpush2.bf16.msra.mxu0 0
      %887 = vmatprep.subr.bf16.mxu0 0
      %888 = vmatpush2.bf16.msra.mxu0 0
      %889 = vmatprep.subr.bf16.mxu0 0
      %890 = vmatpush2.bf16.msra.mxu0 0
      %891 = vmatprep.subr.bf16.mxu0 0
      %892 = vmatpush2.bf16.msra.mxu0 0
      %893 = vmatprep.subr.bf16.mxu0 0
      %894 = vmatpush2.bf16.msra.mxu0 0
      %895 = vmatprep.mubr.bf16.mxu0 0
      %896 = vmatmul.mubr.bf16.gmra.mxu0 %v641
      %v897 = vpop.f32.mrf.mxu0
      %v898 = vadd.f32 %v686, %v897
      %v899 = vpop.f32.mrf.mxu0
      %v900 = vadd.f32 %v690, %v899
      %v901 = vpop.f32.mrf.mxu0
      %v902 = vadd.f32 %v686, %v901
      %v903 = vpop.f32.mrf.mxu0
      %v904 = vadd.f32 %v690, %v903
      %905 = vmatprep.mubr.bf16.mxu0 0
      %906 = vmatmul.mubr.bf16.gmra.mxu0 %v642
      %v907 = vpop.f32.mrf.mxu0
      %v908 = vadd.f32 %v686, %v907
      %v909 = vpop.f32.mrf.mxu0
      %v910 = vadd.f32 %v690, %v909
      %v911 = vpop.f32.mrf.mxu0
      %v912 = vadd.f32 %v686, %v911
      %v913 = vpop.f32.mrf.mxu0
      %v914 = vadd.f32 %v690, %v913
      %915 = vmatprep.mubr.bf16.mxu0 0
      %916 = vmatmul.mubr.bf16.gmra.mxu0 %v643
      %v917 = vpop.f32.mrf.mxu0
      %v918 = vadd.f32 %v686, %v917
      %v919 = vpop.f32.mrf.mxu0
      %v920 = vadd.f32 %v690, %v919
      %v921 = vpop.f32.mrf.mxu0
      %v922 = vadd.f32 %v686, %v921
      %v923 = vpop.f32.mrf.mxu0
      %v924 = vadd.f32 %v690, %v923
      %925 = vmatprep.mubr.bf16.mxu0 0
      %926 = vmatmul.mubr.bf16.gmra.mxu0 %v644
      %v927 = vpop.f32.mrf.mxu0
      %v928 = vadd.f32 %v686, %v927
      %v929 = vpop.f32.mrf.mxu0
      %v930 = vadd.f32 %v690, %v929
      %v931 = vpop.f32.mrf.mxu0
      %v932 = vadd.f32 %v686, %v931
      %v933 = vpop.f32.mrf.mxu0
      %v934 = vadd.f32 %v690, %v933
      %935 = vmatprep.mubr.bf16.mxu0 0
      %936 = vmatmul.mubr.bf16.gmra.mxu0 %v645
      %v937 = vpop.f32.mrf.mxu0
      %v938 = vadd.f32 %v686, %v937
      %v939 = vpop.f32.mrf.mxu0
      %v940 = vadd.f32 %v690, %v939
      %v941 = vpop.f32.mrf.mxu0
      %v942 = vadd.f32 %v686, %v941
      %v943 = vpop.f32.mrf.mxu0
      %v944 = vadd.f32 %v690, %v943
      %945 = vmatprep.mubr.bf16.mxu0 0
      %946 = vmatmul.mubr.bf16.gmra.mxu0 %v646
      %v947 = vpop.f32.mrf.mxu0
      %v948 = vadd.f32 %v686, %v947
      %v949 = vpop.f32.mrf.mxu0
      %v950 = vadd.f32 %v690, %v949
      %v951 = vpop.f32.mrf.mxu0
      %v952 = vadd.f32 %v686, %v951
      %v953 = vpop.f32.mrf.mxu0
      %v954 = vadd.f32 %v690, %v953
      %955 = vmatprep.mubr.bf16.mxu0 0
      %956 = vmatmul.mubr.bf16.gmra.mxu0 %v647
      %v957 = vpop.f32.mrf.mxu0
      %v958 = vadd.f32 %v686, %v957
      %v959 = vpop.f32.mrf.mxu0
      %v960 = vadd.f32 %v690, %v959
      %v961 = vpop.f32.mrf.mxu0
      %v962 = vadd.f32 %v686, %v961
      %v963 = vpop.f32.mrf.mxu0
      %v964 = vadd.f32 %v690, %v963
      %965 = vmatprep.mubr.bf16.mxu0 0
      %966 = vmatmul.mubr.bf16.gmra.mxu0 %v648
      %v967 = vpop.f32.mrf.mxu0
      %v968 = vadd.f32 %v686, %v967
      %v969 = vpop.f32.mrf.mxu0
      %v970 = vadd.f32 %v690, %v969
      %v971 = vpop.f32.mrf.mxu0
      %v972 = vadd.f32 %v686, %v971
      %v973 = vpop.f32.mrf.mxu0
      %v974 = vadd.f32 %v690, %v973
      %975 = vdwg.mxu0
      %976 = vmatprep.subr.bf16.mxu0 %v830
      %977 = vmatpush1.bf16.msra.mxu0 %v829
      %978 = vmatprep.subr.bf16.mxu0 %v826
      %979 = vmatpush1.bf16.msra.mxu0 %v825
      %980 = vmatprep.subr.bf16.mxu0 %v822
      %981 = vmatpush1.bf16.msra.mxu0 %v821
      %982 = vmatprep.subr.bf16.mxu0 %v818
      %983 = vmatpush1.bf16.msra.mxu0 %v817
      %984 = vmatprep.subr.bf16.mxu0 %v814
      %985 = vmatpush1.bf16.msra.mxu0 %v813
      %986 = vmatprep.subr.bf16.mxu0 %v810
      %987 = vmatpush1.bf16.msra.mxu0 %v809
      %988 = vmatprep.subr.bf16.mxu0 %v806
      %989 = vmatpush1.bf16.msra.mxu0 %v805
      %990 = vmatprep.subr.bf16.mxu0 %v802
      %991 = vmatpush1.bf16.msra.mxu0 %v801
      %992 = vmatprep.subr.bf16.mxu0 0
      %993 = vmatpush2.bf16.msra.mxu0 0
      %994 = vmatprep.subr.bf16.mxu0 0
      %995 = vmatpush2.bf16.msra.mxu0 0
      %996 = vmatprep.subr.bf16.mxu0 0
      %997 = vmatpush2.bf16.msra.mxu0 0
      %998 = vmatprep.subr.bf16.mxu0 0
      %999 = vmatpush2.bf16.msra.mxu0 0
      %1000 = vmatprep.subr.bf16.mxu0 0
      %1001 = vmatpush2.bf16.msra.mxu0 0
      %1002 = vmatprep.subr.bf16.mxu0 0
      %1003 = vmatpush2.bf16.msra.mxu0 0
      %1004 = vmatprep.subr.bf16.mxu0 0
      %1005 = vmatpush2.bf16.msra.mxu0 0
      %1006 = vmatprep.subr.bf16.mxu0 0
      %1007 = vmatpush2.bf16.msra.mxu0 0
      %1008 = vmatprep.mubr.bf16.mxu0 0
      %1009 = vmatmul.mubr.bf16.gmra.mxu0 %v641
      %v1010 = vpop.f32.mrf.mxu0
      %v1011 = vadd.f32 %v694, %v1010
      %v1012 = vpop.f32.mrf.mxu0
      %v1013 = vadd.f32 %v698, %v1012
      %v1014 = vpop.f32.mrf.mxu0
      %v1015 = vadd.f32 %v694, %v1014
      %v1016 = vpop.f32.mrf.mxu0
      %v1017 = vadd.f32 %v698, %v1016
      %1018 = vmatprep.mubr.bf16.mxu0 0
      %1019 = vmatmul.mubr.bf16.gmra.mxu0 %v642
      %v1020 = vpop.f32.mrf.mxu0
      %v1021 = vadd.f32 %v694, %v1020
      %v1022 = vpop.f32.mrf.mxu0
      %v1023 = vadd.f32 %v698, %v1022
      %v1024 = vpop.f32.mrf.mxu0
      %v1025 = vadd.f32 %v694, %v1024
      %v1026 = vpop.f32.mrf.mxu0
      %v1027 = vadd.f32 %v698, %v1026
      %1028 = vmatprep.mubr.bf16.mxu0 0
      %1029 = vmatmul.mubr.bf16.gmra.mxu0 %v643
      %v1030 = vpop.f32.mrf.mxu0
      %v1031 = vadd.f32 %v694, %v1030
      %v1032 = vpop.f32.mrf.mxu0
      %v1033 = vadd.f32 %v698, %v1032
      %v1034 = vpop.f32.mrf.mxu0
      %v1035 = vadd.f32 %v694, %v1034
      %v1036 = vpop.f32.mrf.mxu0
      %v1037 = vadd.f32 %v698, %v1036
      %1038 = vmatprep.mubr.bf16.mxu0 0
      %1039 = vmatmul.mubr.bf16.gmra.mxu0 %v644
      %v1040 = vpop.f32.mrf.mxu0
      %v1041 = vadd.f32 %v694, %v1040
      %v1042 = vpop.f32.mrf.mxu0
      %v1043 = vadd.f32 %v698, %v1042
      %v1044 = vpop.f32.mrf.mxu0
      %v1045 = vadd.f32 %v694, %v1044
      %v1046 = vpop.f32.mrf.mxu0
      %v1047 = vadd.f32 %v698, %v1046
      %1048 = vmatprep.mubr.bf16.mxu0 0
      %1049 = vmatmul.mubr.bf16.gmra.mxu0 %v645
      %v1050 = vpop.f32.mrf.mxu0
      %v1051 = vadd.f32 %v694, %v1050
      %v1052 = vpop.f32.mrf.mxu0
      %v1053 = vadd.f32 %v698, %v1052
      %v1054 = vpop.f32.mrf.mxu0
      %v1055 = vadd.f32 %v694, %v1054
      %v1056 = vpop.f32.mrf.mxu0
      %v1057 = vadd.f32 %v698, %v1056
      %1058 = vmatprep.mubr.bf16.mxu0 0
      %1059 = vmatmul.mubr.bf16.gmra.mxu0 %v646
      %v1060 = vpop.f32.mrf.mxu0
      %v1061 = vadd.f32 %v694, %v1060
      %v1062 = vpop.f32.mrf.mxu0
      %v1063 = vadd.f32 %v698, %v1062
      %v1064 = vpop.f32.mrf.mxu0
      %v1065 = vadd.f32 %v694, %v1064
      %v1066 = vpop.f32.mrf.mxu0
      %v1067 = vadd.f32 %v698, %v1066
      %1068 = vmatprep.mubr.bf16.mxu0 0
      %1069 = vmatmul.mubr.bf16.gmra.mxu0 %v647
      %v1070 = vpop.f32.mrf.mxu0
      %v1071 = vadd.f32 %v694, %v1070
      %v1072 = vpop.f32.mrf.mxu0
      %v1073 = vadd.f32 %v698, %v1072
      %v1074 = vpop.f32.mrf.mxu0
      %v1075 = vadd.f32 %v694, %v1074
      %v1076 = vpop.f32.mrf.mxu0
      %v1077 = vadd.f32 %v698, %v1076
      %1078 = vmatprep.mubr.bf16.mxu0 0
      %1079 = vmatmul.mubr.bf16.gmra.mxu0 %v648
      %v1080 = vpop.f32.mrf.mxu0
      %v1081 = vadd.f32 %v694, %v1080
      %v1082 = vpop.f32.mrf.mxu0
      %v1083 = vadd.f32 %v698, %v1082
      %v1084 = vpop.f32.mrf.mxu0
      %v1085 = vadd.f32 %v694, %v1084
      %v1086 = vpop.f32.mrf.mxu0
      %v1087 = vadd.f32 %v698, %v1086
      %1088 = vdwg.mxu0
      %v1089 = vpack.c.bf16 %v902, %v898
      %v1090 = vpack.c.bf16 %v904, %v900
      %v1091 = vpack.c.bf16 %v1015, %v1011
      %v1092 = vpack.c.bf16 %v1017, %v1013
      %v1093 = vpack.c.bf16 %v912, %v908
      %v1094 = vpack.c.bf16 %v914, %v910
      %v1095 = vpack.c.bf16 %v1025, %v1021
      %v1096 = vpack.c.bf16 %v1027, %v1023
      %v1097 = vpack.c.bf16 %v922, %v918
      %v1098 = vpack.c.bf16 %v924, %v920
      %v1099 = vpack.c.bf16 %v1035, %v1031
      %v1100 = vpack.c.bf16 %v1037, %v1033
      %v1101 = vpack.c.bf16 %v932, %v928
      %v1102 = vpack.c.bf16 %v934, %v930
      %v1103 = vpack.c.bf16 %v1045, %v1041
      %v1104 = vpack.c.bf16 %v1047, %v1043
      %v1105 = vpack.c.bf16 %v942, %v938
      %v1106 = vpack.c.bf16 %v944, %v940
      %v1107 = vpack.c.bf16 %v1055, %v1051
      %v1108 = vpack.c.bf16 %v1057, %v1053
      %v1109 = vpack.c.bf16 %v952, %v948
      %v1110 = vpack.c.bf16 %v954, %v950
      %v1111 = vpack.c.bf16 %v1065, %v1061
      %v1112 = vpack.c.bf16 %v1067, %v1063
      %v1113 = vpack.c.bf16 %v962, %v958
      %v1114 = vpack.c.bf16 %v964, %v960
      %v1115 = vpack.c.bf16 %v1075, %v1071
      %v1116 = vpack.c.bf16 %v1077, %v1073
      %v1117 = vpack.c.bf16 %v972, %v968
      %v1118 = vpack.c.bf16 %v974, %v970
      %v1119 = vpack.c.bf16 %v1085, %v1081
      %v1120 = vpack.c.bf16 %v1087, %v1083
      %v1153 = vunpack.c.l.b16 %v1089
      %v1154 = vunpack.c.l.b16 %v1090
      %v1155 = vunpack.c.l.b16 %v1091
      %v1156 = vunpack.c.l.b16 %v1092
      %v1157 = vunpack.c.h.b16 %v1089
      %v1158 = vunpack.c.h.b16 %v1090
      %v1159 = vunpack.c.h.b16 %v1091
      %v1160 = vunpack.c.h.b16 %v1092
      %v1161 = vunpack.c.l.b16 %v1093
      %v1162 = vunpack.c.l.b16 %v1094
      %v1163 = vunpack.c.l.b16 %v1095
      %v1164 = vunpack.c.l.b16 %v1096
      %v1165 = vunpack.c.h.b16 %v1093
      %v1166 = vunpack.c.h.b16 %v1094
      %v1167 = vunpack.c.h.b16 %v1095
      %v1168 = vunpack.c.h.b16 %v1096
      %v1169 = vunpack.c.l.b16 %v1097
      %v1170 = vunpack.c.l.b16 %v1098
      %v1171 = vunpack.c.l.b16 %v1099
      %v1172 = vunpack.c.l.b16 %v1100
      %v1173 = vunpack.c.h.b16 %v1097
      %v1174 = vunpack.c.h.b16 %v1098
      %v1175 = vunpack.c.h.b16 %v1099
      %v1176 = vunpack.c.h.b16 %v1100
      %v1177 = vunpack.c.l.b16 %v1101
      %v1178 = vunpack.c.l.b16 %v1102
      %v1179 = vunpack.c.l.b16 %v1103
      %v1180 = vunpack.c.l.b16 %v1104
      %v1181 = vunpack.c.h.b16 %v1101
      %v1182 = vunpack.c.h.b16 %v1102
      %v1183 = vunpack.c.h.b16 %v1103
      %v1184 = vunpack.c.h.b16 %v1104
      %v1185 = vunpack.c.l.b16 %v1105
      %v1186 = vunpack.c.l.b16 %v1106
      %v1187 = vunpack.c.l.b16 %v1107
      %v1188 = vunpack.c.l.b16 %v1108
      %v1189 = vunpack.c.h.b16 %v1105
      %v1190 = vunpack.c.h.b16 %v1106
      %v1191 = vunpack.c.h.b16 %v1107
      %v1192 = vunpack.c.h.b16 %v1108
      %v1193 = vunpack.c.l.b16 %v1109
      %v1194 = vunpack.c.l.b16 %v1110
      %v1195 = vunpack.c.l.b16 %v1111
      %v1196 = vunpack.c.l.b16 %v1112
      %v1197 = vunpack.c.h.b16 %v1109
      %v1198 = vunpack.c.h.b16 %v1110
      %v1199 = vunpack.c.h.b16 %v1111
      %v1200 = vunpack.c.h.b16 %v1112
      %v1201 = vunpack.c.l.b16 %v1113
      %v1202 = vunpack.c.l.b16 %v1114
      %v1203 = vunpack.c.l.b16 %v1115
      %v1204 = vunpack.c.l.b16 %v1116
      %v1205 = vunpack.c.h.b16 %v1113
      %v1206 = vunpack.c.h.b16 %v1114
      %v1207 = vunpack.c.h.b16 %v1115
      %v1208 = vunpack.c.h.b16 %v1116
      %v1209 = vunpack.c.l.b16 %v1117
      %v1210 = vunpack.c.l.b16 %v1118
      %v1211 = vunpack.c.l.b16 %v1119
      %v1212 = vunpack.c.l.b16 %v1120
      %v1213 = vunpack.c.h.b16 %v1117
      %v1214 = vunpack.c.h.b16 %v1118
      %v1215 = vunpack.c.h.b16 %v1119
      %v1216 = vunpack.c.h.b16 %v1120
      %v1217 = vpack.c.b16 %v1154, %v1153
      %v1218 = vpack.c.b16 %v1156, %v1155
      %v1219 = vpack.c.b16 %v1158, %v1157
      %v1220 = vpack.c.b16 %v1160, %v1159
      %v1221 = vpack.c.b16 %v1162, %v1161
      %v1222 = vpack.c.b16 %v1164, %v1163
      %v1223 = vpack.c.b16 %v1166, %v1165
      %v1224 = vpack.c.b16 %v1168, %v1167
      %v1225 = vpack.c.b16 %v1170, %v1169
      %v1226 = vpack.c.b16 %v1172, %v1171
      %v1227 = vpack.c.b16 %v1174, %v1173
      %v1228 = vpack.c.b16 %v1176, %v1175
      %v1229 = vpack.c.b16 %v1178, %v1177
      %v1230 = vpack.c.b16 %v1180, %v1179
      %v1231 = vpack.c.b16 %v1182, %v1181
      %v1232 = vpack.c.b16 %v1184, %v1183
      %v1233 = vpack.c.b16 %v1186, %v1185
      %v1234 = vpack.c.b16 %v1188, %v1187
      %v1235 = vpack.c.b16 %v1190, %v1189
      %v1236 = vpack.c.b16 %v1192, %v1191
      %v1237 = vpack.c.b16 %v1194, %v1193
      %v1238 = vpack.c.b16 %v1196, %v1195
      %v1239 = vpack.c.b16 %v1198, %v1197
      %v1240 = vpack.c.b16 %v1200, %v1199
      %v1241 = vpack.c.b16 %v1202, %v1201
      %v1242 = vpack.c.b16 %v1204, %v1203
      %v1243 = vpack.c.b16 %v1206, %v1205
      %v1244 = vpack.c.b16 %v1208, %v1207
      %v1245 = vpack.c.b16 %v1210, %v1209
      %v1246 = vpack.c.b16 %v1212, %v1211
      %v1247 = vpack.c.b16 %v1214, %v1213
      %v1248 = vpack.c.b16 %v1216, %v1215
      %1281 = vst [vmem:[%s231] sm:$0xff] %v1217
      %1282 = vst [vmem:[%s231 + $0x8] sm:$0xff] %v1218
      %1283 = vst [vmem:[%s231 + $0x10] sm:$0xff] %v1219
      %1284 = vst [vmem:[%s231 + $0x18] sm:$0xff] %v1220
      %1285 = vst [vmem:[%s231 + $0x20] sm:$0xff] %v1221
      %1286 = vst [vmem:[%s231 + $0x28] sm:$0xff] %v1222
      %1287 = vst [vmem:[%s231 + $0x30] sm:$0xff] %v1223
      %1288 = vst [vmem:[%s231 + $0x38] sm:$0xff] %v1224
      %1289 = vst [vmem:[%s231 + $0x40] sm:$0xff] %v1225
      %1290 = vst [vmem:[%s231 + $0x48] sm:$0xff] %v1226
      %1291 = vst [vmem:[%s231 + $0x50] sm:$0xff] %v1227
      %1292 = vst [vmem:[%s231 + $0x58] sm:$0xff] %v1228
      %1293 = vst [vmem:[%s231 + $0x60] sm:$0xff] %v1229
      %1294 = vst [vmem:[%s231 + $0x68] sm:$0xff] %v1230
      %1295 = vst [vmem:[%s231 + $0x70] sm:$0xff] %v1231
      %1296 = vst [vmem:[%s231 + $0x78] sm:$0xff] %v1232
      %1297 = vst [vmem:[%s231 + $0x80] sm:$0xff] %v1233
      %1298 = vst [vmem:[%s231 + $0x88] sm:$0xff] %v1234
      %1299 = vst [vmem:[%s231 + $0x90] sm:$0xff] %v1235
      %1300 = vst [vmem:[%s231 + $0x98] sm:$0xff] %v1236
      %1301 = vst [vmem:[%s231 + $0xa0] sm:$0xff] %v1237
      %1302 = vst [vmem:[%s231 + $0xa8] sm:$0xff] %v1238
      %1303 = vst [vmem:[%s231 + $0xb0] sm:$0xff] %v1239
      %1304 = vst [vmem:[%s231 + $0xb8] sm:$0xff] %v1240
      %1305 = vst [vmem:[%s231 + $0xc0] sm:$0xff] %v1241
      %1306 = vst [vmem:[%s231 + $0xc8] sm:$0xff] %v1242
      %1307 = vst [vmem:[%s231 + $0xd0] sm:$0xff] %v1243
      %1308 = vst [vmem:[%s231 + $0xd8] sm:$0xff] %v1244
      %1309 = vst [vmem:[%s231 + $0xe0] sm:$0xff] %v1245
      %1310 = vst [vmem:[%s231 + $0xe8] sm:$0xff] %v1246
      %1311 = vst [vmem:[%s231 + $0xf0] sm:$0xff] %v1247
      %1312 = vst [vmem:[%s231 + $0xf8] sm:$0xff] %v1248
      %s1313 = smul.u32 16, %s16
      %p1314 = scmp.lt.s32.totalorder %s1313, 31
      %s1315 = scalar_select %p1314, %s1313, 31
      %s1316 = smul.addr %s1315, 4
      %s1317 = smul.addr %s1316, 4
      %s1318 = scalar_lea.vmem %s5, %s1317
      // Predicated region
      $region41: #{deepfake_detector_forward.2} parent=39 // pred_check
        %p1319 = pneg %p144
      $region42: #{deepfake_detector_forward.2} parent=39 // pred_check_branch
        %1321 = sbr.rel (%p1319) target = $region44
      $region43: #{deepfake_detector_forward.2} parent=39 // pred_region
        %s1322 = smul.u32 16, %s16
      $region44: #{deepfake_detector_forward.2} parent=39 // pred_fallthru
        _
    $region40: #{deepfake_detector_forward.2} parent=5 // pred_fallthru
      _
    %p1323 = scmp.le.s32.totalorder 2, %s11
    // Predicated region
    $region45: #{deepfake_detector_forward.2} parent=5 // pred_check
      %p1324 = pneg %p1323
    $region46: #{deepfake_detector_forward.2} parent=5 // pred_check_branch
      %1326 = sbr.rel (%p1324) target = $region48
    $region47: #{deepfake_detector_forward.2} parent=5 // pred_region
      %s1327 = ssub.s32 %s11, 2
      // Predicated region
      $region49: #{deepfake_detector_forward.2} parent=47 // pred_check
        %p1328 = pneg %p150
      $region50: #{deepfake_detector_forward.2} parent=47 // pred_check_branch
        %1330 = sbr.rel (%p1328) target = $region52
      $region51: #{deepfake_detector_forward.2} parent=47 // pred_region
        %s1331 = smul.u32 16, %s17
        %p1332 = scmp.lt.s32.totalorder %s1331, 31
        %s1333 = scalar_select %p1332, %s1331, 31
        %s1334 = smul.addr %s1333, 4
        %s1335 = smul.addr %s1334, 4
        %s1336 = scalar_lea.vmem %s5, %s1335
      $region52: #{deepfake_detector_forward.2} parent=47 // pred_fallthru
        _
    $region48: #{deepfake_detector_forward.2} parent=5 // pred_fallthru
      _
  $region6: #{deepfake_detector_forward.2} parent=0 // loop_footer
    %s15 = sadd.s32 1, %s11
  $region7: #{deepfake_detector_forward.2} parent=0 // loop_footer_branch
    %10 = sbr.rel target = $region3
  $region8: #{deepfake_detector_forward.2} parent=0 // loop_exit
    _

// kernel: deepfake_detector_forward.3
$region0: #{deepfake_detector_forward.3}
  #allocation0 [shape = 'u32[]', space=smem, size = 0x4, offset = 0x4, fixed_abs, tag = 'smem constant byte address 0x4 - core index']
  #allocation1 [shape = 'u32[144,128]{1,0:T(1,128)}', space=vmem, size = 0x12000, scoped, tag = 'internal scratch']
  #allocation2 [shape = 'f32[8,128]{1,0:T(8,128)}', space=vmem, size = 0x1000, scoped, tag = 'scratch operand']
  #allocation3 [shape = 'f32[8,128]{1,0:T(8,128)}', space=vmem, size = 0x1000, scoped, tag = 'scratch operand']
  #allocation4 [shape = 'bf16[128,512]{1,0:T(8,128)(2,1)}', space=vmem, size = 0x20000, scoped, tag = 'scratch operand']
  #allocation5 [shape = 's32[1]{0}', space=sflag, size = 0x4, scoped, tag = 'scratch operand']
  #allocation7 [shape = 's32[]', space=sflag, size = 0x4, offset = 0, fixed_abs, tag = 'sflag constant byte address 0x0 - dummy sync flag']
  %s0 = inlined_call_operand.vmem [shape: bf16[16,16,512], index: 0, kind: input, shape index: {}]
  %s1 = inlined_call_operand.vmem [shape: bf16[128,512], index: 1, kind: input, shape index: {}]
  %s2 = inlined_call_operand.vmem [shape: f32[2,16,128], index: 2, kind: output, shape index: {}]
  %s3 = sld [smem:[#allocation0]]
  $region102: #{deepfake_detector_forward.3} parent=0
    _
  %s5 = ssub.s32 1, %s3
  %s6 = scalar_select 0, %s5, %s3
  $region1: #{deepfake_detector_forward.3} parent=0
    #allocation6 [shape = 'u8[131072]{0}', space=vmem, size = 0x20000, scoped, tag = 'input window, operand 0']
    loop: start=0, step=1, limit=6
    $region2: #{deepfake_detector_forward.3} parent=1 // loop_pre_header
      _
    $region3: #{deepfake_detector_forward.3} parent=1 // loop_header
      %s8 = sphi 0, %s12
      %p9 = scmp.ge.s32.totalorder %s8, 6
      %s15 = sphi 0, %s27
      %s16 = sphi 0, %s23
      %s17 = sphi 0, %s15
      %s18 = sphi 0, %s16
      %s19 = sphi 0, %s17
      %s20 = sphi 0, %s18
      %s32 = sphi 0, %s34
      %s35 = sphi 0, %s32
      %s36 = sphi 0, %s35
      %s52 = sphi 0, %s36
      %s60 = sphi 0, %s62
      %s63 = sphi 0, %s60
      %s64 = sphi 0, %s63
      %s80 = sphi 0, %s64
    $region4: #{deepfake_detector_forward.3} parent=1 // loop_header_branch
      %11 = sbr.rel (%p9) target = $region8
    $region5: #{deepfake_detector_forward.3} parent=1 // loop_body
      %s13 = ssub.s32 %s8, 1
      %s14 = ssub.s32 %s8, 2
      %s21 = sadd.s32 1, %s16
      %p22 = scmp.ge.s32.totalorder %s21, 2
      %s23 = scalar_select %p22, 0, %s21
      %s24 = sadd.s32 1, %s15
      %s25 = scalar_select %p22, %s24, %s15
      %p26 = scmp.ge.s32.totalorder %s25, 2
      %s27 = scalar_select %p26, 0, %s25
      %s28 = ssub.s32 %s16, %s23
      %s29 = ssub.s32 %s15, %s27
      %s30 = sor.u32 %s28, %s29
      %p31 = scmp.eq.s32.totalorder %s30, 0
      %s33 = sadd.s32 %s32, 1
      %s34 = scalar_select %p31, %s32, %s33
      %p37 = pneg %p31
      %p38 = scmp.eq.s32.totalorder %s8, 3
      %p39 = por %p37, %p38
      %p40 = scmp.ne.s32.totalorder %s32, %s35
      %p41 = scmp.eq.s32.totalorder %s8, 0
      %p42 = por %p40, %p41
      %p43 = scmp.ne.s32.totalorder %s32, %s35
      %p44 = scmp.eq.s32.totalorder %s13, 3
      %p45 = por %p43, %p44
      %p46 = scmp.ne.s32.totalorder %s35, %s36
      %p47 = scmp.eq.s32.totalorder %s13, 0
      %p48 = por %p46, %p47
      %p49 = scmp.ne.s32.totalorder %s35, %s36
      %p50 = scmp.eq.s32.totalorder %s14, 3
      %p51 = por %p49, %p50
      %p53 = scmp.ne.s32.totalorder %s36, %s52
      %p54 = scmp.eq.s32.totalorder %s14, 0
      %p55 = por %p53, %p54
      %s56 = ssub.s32 %s15, %s27
      %s57 = ssub.s32 %s16, %s23
      %s58 = sor.u32 %s56, %s57
      %p59 = scmp.eq.s32.totalorder %s58, 0
      %s61 = sadd.s32 %s60, 1
      %s62 = scalar_select %p59, %s60, %s61
      %p65 = pneg %p59
      %p66 = scmp.eq.s32.totalorder %s8, 3
      %p67 = por %p65, %p66
      %p68 = scmp.ne.s32.totalorder %s60, %s63
      %p69 = scmp.eq.s32.totalorder %s8, 0
      %p70 = por %p68, %p69
      %p71 = scmp.ne.s32.totalorder %s60, %s63
      %p72 = scmp.eq.s32.totalorder %s13, 3
      %p73 = por %p71, %p72
      %p74 = scmp.ne.s32.totalorder %s63, %s64
      %p75 = scmp.eq.s32.totalorder %s13, 0
      %p76 = por %p74, %p75
      %p77 = scmp.ne.s32.totalorder %s63, %s64
      %p78 = scmp.eq.s32.totalorder %s14, 3
      %p79 = por %p77, %p78
      %p81 = scmp.ne.s32.totalorder %s64, %s80
      %p82 = scmp.eq.s32.totalorder %s14, 0
      %p83 = por %p81, %p82
      %p84 = scmp.le.s32.totalorder 1, %s8
      %p85 = scmp.lt.s32.totalorder %s8, 5
      %p86 = pnand %p84, %p85
      %p87 = pneg %p86
      // Predicated region
      $region9: #{deepfake_detector_forward.3} parent=5 // pred_check
        _
      $region10: #{deepfake_detector_forward.3} parent=5 // pred_check_branch
        %89 = sbr.rel (%p86) target = $region12
      $region11: #{deepfake_detector_forward.3} parent=5 // pred_region
        %s90 = ssub.s32 %s8, 1
      $region12: #{deepfake_detector_forward.3} parent=5 // pred_fallthru
        _
      %p91 = scmp.lt.s32.totalorder %s8, 4
      // Predicated region
      $region13: #{deepfake_detector_forward.3} parent=5 // pred_check
        %p92 = pneg %p91
      $region14: #{deepfake_detector_forward.3} parent=5 // pred_check_branch
        %94 = sbr.rel (%p92) target = $region16
      $region15: #{deepfake_detector_forward.3} parent=5 // pred_region
        // Predicated region
        $region17: #{deepfake_detector_forward.3} parent=15 // pred_check
          %p95 = pneg %p42
        $region18: #{deepfake_detector_forward.3} parent=15 // pred_check_branch
          %97 = sbr.rel (%p95) target = $region20
        $region19: #{deepfake_detector_forward.3} parent=15 // pred_region
          %s98 = sand.u32 %s32, 1
          %s99 = sand.u32 %s32, 1
          %s100 = smul.addr %s99, 128
          %s101 = scalar_lea.vmem [#allocation6], %s100
          %s102 = smul.u32 8, %s16
          %s103 = smul.addr %s15, 4
          %s104 = smul.addr %s102, 8
          %s105 = sadd.s32 %s103, %s104
          %s106 = smul.addr %s105, 4
          %s107 = scalar_lea.vmem %s0, %s106
          // Predicated region
          $region21: #{deepfake_detector_forward.3} parent=19 // pred_check
            _
          $region22: #{deepfake_detector_forward.3} parent=19 // pred_check_branch
            %109 = sbr.rel (0) target = $region24
          $region23: #{deepfake_detector_forward.3} parent=19 // pred_region
            // Predicated region
            $region25: #{deepfake_detector_forward.3} parent=23 // pred_check
              _
            $region26: #{deepfake_detector_forward.3} parent=23 // pred_check_branch
              %111 = sbr.rel (0) target = $region28
            $region27: #{deepfake_detector_forward.3} parent=23 // pred_region
              loop: start=0, step=1, limit=1
              $region29: #{deepfake_detector_forward.3} parent=27 // loop_pre_header
                _
              $region30: #{deepfake_detector_forward.3} parent=27 // loop_header
                %s113 = sphi 0, %s117
                %p114 = scmp.ge.s32.totalorder %s113, 1
                %s118 = sphi %s107, %s107
                %s119 = sphi %s101, %s101
              $region31: #{deepfake_detector_forward.3} parent=27 // loop_header_branch
                %116 = sbr.rel (%p114) target = $region35
              $region32: #{deepfake_detector_forward.3} parent=27 // loop_body
                %v120 = vld [vmem:[%s118] sm:$0xff]
                %121 = vst [vmem:[%s119] sm:$0xff] %v120
                %v122 = vld [vmem:[%s118 + $0x8] sm:$0xff]
                %123 = vst [vmem:[%s119 + $0x8] sm:$0xff] %v122
                %v124 = vld [vmem:[%s118 + $0x20] sm:$0xff]
                %125 = vst [vmem:[%s119 + $0x10] sm:$0xff] %v124
                %v126 = vld [vmem:[%s118 + $0x28] sm:$0xff]
                %127 = vst [vmem:[%s119 + $0x18] sm:$0xff] %v126
                %v128 = vld [vmem:[%s118 + $0x40] sm:$0xff]
                %129 = vst [vmem:[%s119 + $0x20] sm:$0xff] %v128
                %v130 = vld [vmem:[%s118 + $0x48] sm:$0xff]
                %131 = vst [vmem:[%s119 + $0x28] sm:$0xff] %v130
                %v132 = vld [vmem:[%s118 + $0x60] sm:$0xff]
                %133 = vst [vmem:[%s119 + $0x30] sm:$0xff] %v132
                %v134 = vld [vmem:[%s118 + $0x68] sm:$0xff]
                %135 = vst [vmem:[%s119 + $0x38] sm:$0xff] %v134
                %v136 = vld [vmem:[%s118 + $0x80] sm:$0xff]
                %137 = vst [vmem:[%s119 + $0x40] sm:$0xff] %v136
                %v138 = vld [vmem:[%s118 + $0x88] sm:$0xff]
                %139 = vst [vmem:[%s119 + $0x48] sm:$0xff] %v138
                %v140 = vld [vmem:[%s118 + $0xa0] sm:$0xff]
                %141 = vst [vmem:[%s119 + $0x50] sm:$0xff] %v140
                %v142 = vld [vmem:[%s118 + $0xa8] sm:$0xff]
                %143 = vst [vmem:[%s119 + $0x58] sm:$0xff] %v142
                %v144 = vld [vmem:[%s118 + $0xc0] sm:$0xff]
                %145 = vst [vmem:[%s119 + $0x60] sm:$0xff] %v144
                %v146 = vld [vmem:[%s118 + $0xc8] sm:$0xff]
                %147 = vst [vmem:[%s119 + $0x68] sm:$0xff] %v146
                %v148 = vld [vmem:[%s118 + $0xe0] sm:$0xff]
                %149 = vst [vmem:[%s119 + $0x70] sm:$0xff] %v148
                %v150 = vld [vmem:[%s118 + $0xe8] sm:$0xff]
                %151 = vst [vmem:[%s119 + $0x78] sm:$0xff] %v150
              $region33: #{deepfake_detector_forward.3} parent=27 // loop_footer
                %s117 = sadd.s32 1, %s113
              $region34: #{deepfake_detector_forward.3} parent=27 // loop_footer_branch
                %112 = sbr.rel target = $region30
              $region35: #{deepfake_detector_forward.3} parent=27 // loop_exit
                _
            $region28: #{deepfake_detector_forward.3} parent=23 // pred_fallthru
              _
            // Predicated region
            $region36: #{deepfake_detector_forward.3} parent=23 // pred_check
              _
            $region37: #{deepfake_detector_forward.3} parent=23 // pred_check_branch
              %153 = sbr.rel target = $region39
            $region38: #{deepfake_detector_forward.3} parent=23 // pred_region
              _
            $region39: #{deepfake_detector_forward.3} parent=23 // pred_fallthru
              _
          $region24: #{deepfake_detector_forward.3} parent=19 // pred_fallthru
            _
          %154 = vnop
        $region20: #{deepfake_detector_forward.3} parent=15 // pred_fallthru
          _
      $region16: #{deepfake_detector_forward.3} parent=5 // pred_fallthru
        _
      %p155 = scmp.le.s32.totalorder 1, %s8
      %p156 = scmp.lt.s32.totalorder %s8, 5
      %p157 = pnand %p155, %p156
      %p158 = pneg %p157
      // Predicated region
      $region40: #{deepfake_detector_forward.3} parent=5 // pred_check
        _
      $region41: #{deepfake_detector_forward.3} parent=5 // pred_check_branch
        %160 = sbr.rel (%p157) target = $region43
      $region42: #{deepfake_detector_forward.3} parent=5 // pred_region
        %s161 = ssub.s32 %s8, 1
        %s162 = sand.u32 %s35, 1
        %s163 = sand.u32 %s35, 1
        %s164 = smul.addr %s163, 128
        %s165 = scalar_lea.vmem [#allocation6], %s164
        // Predicated region
        $region44: #{deepfake_detector_forward.3} parent=42 // pred_check
          %p166 = pneg %p48
        $region45: #{deepfake_detector_forward.3} parent=42 // pred_check_branch
          %168 = sbr.rel (%p166) target = $region47
        $region46: #{deepfake_detector_forward.3} parent=42 // pred_region
          _
        $region47: #{deepfake_detector_forward.3} parent=42 // pred_fallthru
          _
        %s169 = sand.u32 %s35, 1
        %s170 = sand.u32 %s35, 1
        %s171 = smul.addr %s170, 128
        %s172 = scalar_lea.vmem [#allocation6], %s171
        %p173 = pneg %p48
        %p174 = pneg %p45
        %p175 = pneg %p76
        %p176 = pneg %p73
        %p177 = scmp.lt.s32.totalorder %s17, 1
        %s178 = scalar_select %p177, %s17, 1
        %p179 = scmp.lt.s32.totalorder %s18, 1
        %s180 = scalar_select %p179, %s18, 1
        %s181 = smul.addr %s178, 2
        %s182 = sadd.s32 %s180, %s181
        %s183 = smul.addr %s182, 8
        %s184 = scalar_lea.vmem %s2, %s183
        %s185 = smul.u32 8, %s18
        %p186 = scmp.lt.s32.totalorder %s17, 1
        %s187 = scalar_select %p186, %s17, 1
        %p188 = scmp.lt.s32.totalorder %s18, 1
        %s189 = scalar_select %p188, %s18, 1
        %s190 = smul.addr %s187, 2
        %s191 = sadd.s32 %s189, %s190
        %s192 = smul.addr %s191, 8
        %s193 = scalar_lea.vmem %s2, %s192
        %p195 = scmp.eq.s32.totalorder %s18, 0
        // Predicated region
        $region48: #{deepfake_detector_forward.3} parent=42 // pred_check
          %p196 = pneg %p195
        $region49: #{deepfake_detector_forward.3} parent=42 // pred_check_branch
          %198 = sbr.rel (%p196) target = $region51
        $region50: #{deepfake_detector_forward.3} parent=42 // pred_region
          %p200 = scmp.lt.u32.totalorder 256, 8
          %p201 = pneg %p200
          // Predicated region
          $region52: #{deepfake_detector_forward.3} parent=50 // pred_check
            _
          $region53: #{deepfake_detector_forward.3} parent=50 // pred_check_branch
            %203 = sbr.rel (%p200) target = $region55
          $region54: #{deepfake_detector_forward.3} parent=50 // pred_region
            %s219 = sand.u32 256, 7
            %p220 = scmp.eq.s32.totalorder %s219, 0
            // Predicated region
            $region67: #{deepfake_detector_forward.3} parent=54 // pred_check
              %p221 = pneg %p220
            $region68: #{deepfake_detector_forward.3} parent=54 // pred_check_branch
              %223 = sbr.rel (%p221) target = $region70
            $region69: #{deepfake_detector_forward.3} parent=54 // pred_region
              loop: start=0, step=1, limit=1
              $region71: #{deepfake_detector_forward.3} parent=69 // loop_pre_header
                _
              $region72: #{deepfake_detector_forward.3} parent=69 // loop_header
                %s225 = sphi 0, %s229
                %p226 = scmp.ge.s32.totalorder %s225, 1
                %s230 = sphi %s1, %s1
                %s231 = sphi [#allocation4], [#allocation4]
              $region73: #{deepfake_detector_forward.3} parent=69 // loop_header_branch
                %228 = sbr.rel (%p226) target = $region77
              $region74: #{deepfake_detector_forward.3} parent=69 // loop_body
                %v232 = vld [vmem:[%s230] sm:$0xff]
                %233 = vst [vmem:[%s231] sm:$0xff] %v232
                %v234 = vld [vmem:[%s230 + $0x8] sm:$0xff]
                %235 = vst [vmem:[%s231 + $0x8] sm:$0xff] %v234
                %v236 = vld [vmem:[%s230 + $0x10] sm:$0xff]
                %237 = vst [vmem:[%s231 + $0x10] sm:$0xff] %v236
                %v238 = vld [vmem:[%s230 + $0x18] sm:$0xff]
                %239 = vst [vmem:[%s231 + $0x18] sm:$0xff] %v238
                %v240 = vld [vmem:[%s230 + $0x20] sm:$0xff]
                %241 = vst [vmem:[%s231 + $0x20] sm:$0xff] %v240
                %v242 = vld [vmem:[%s230 + $0x28] sm:$0xff]
                %243 = vst [vmem:[%s231 + $0x28] sm:$0xff] %v242
                %v244 = vld [vmem:[%s230 + $0x30] sm:$0xff]
                %245 = vst [vmem:[%s231 + $0x30] sm:$0xff] %v244
                %v246 = vld [vmem:[%s230 + $0x38] sm:$0xff]
                %247 = vst [vmem:[%s231 + $0x38] sm:$0xff] %v246
                %v248 = vld [vmem:[%s230 + $0x40] sm:$0xff]
                %249 = vst [vmem:[%s231 + $0x40] sm:$0xff] %v248
                %v250 = vld [vmem:[%s230 + $0x48] sm:$0xff]
                %251 = vst [vmem:[%s231 + $0x48] sm:$0xff] %v250
                %v252 = vld [vmem:[%s230 + $0x50] sm:$0xff]
                %253 = vst [vmem:[%s231 + $0x50] sm:$0xff] %v252
                %v254 = vld [vmem:[%s230 + $0x58] sm:$0xff]
                %255 = vst [vmem:[%s231 + $0x58] sm:$0xff] %v254
                %v256 = vld [vmem:[%s230 + $0x60] sm:$0xff]
                %257 = vst [vmem:[%s231 + $0x60] sm:$0xff] %v256
                %v258 = vld [vmem:[%s230 + $0x68] sm:$0xff]
                %259 = vst [vmem:[%s231 + $0x68] sm:$0xff] %v258
                %v260 = vld [vmem:[%s230 + $0x70] sm:$0xff]
                %261 = vst [vmem:[%s231 + $0x70] sm:$0xff] %v260
                %v262 = vld [vmem:[%s230 + $0x78] sm:$0xff]
                %263 = vst [vmem:[%s231 + $0x78] sm:$0xff] %v262
                %v264 = vld [vmem:[%s230 + $0x80] sm:$0xff]
                %265 = vst [vmem:[%s231 + $0x80] sm:$0xff] %v264
                %v266 = vld [vmem:[%s230 + $0x88] sm:$0xff]
                %267 = vst [vmem:[%s231 + $0x88] sm:$0xff] %v266
                %v268 = vld [vmem:[%s230 + $0x90] sm:$0xff]
                %269 = vst [vmem:[%s231 + $0x90] sm:$0xff] %v268
                %v270 = vld [vmem:[%s230 + $0x98] sm:$0xff]
                %271 = vst [vmem:[%s231 + $0x98] sm:$0xff] %v270
                %v272 = vld [vmem:[%s230 + $0xa0] sm:$0xff]
                %273 = vst [vmem:[%s231 + $0xa0] sm:$0xff] %v272
                %v274 = vld [vmem:[%s230 + $0xa8] sm:$0xff]
                %275 = vst [vmem:[%s231 + $0xa8] sm:$0xff] %v274
                %v276 = vld [vmem:[%s230 + $0xb0] sm:$0xff]
                %277 = vst [vmem:[%s231 + $0xb0] sm:$0xff] %v276
                %v278 = vld [vmem:[%s230 + $0xb8] sm:$0xff]
                %279 = vst [vmem:[%s231 + $0xb8] sm:$0xff] %v278
                %v280 = vld [vmem:[%s230 + $0xc0] sm:$0xff]
                %281 = vst [vmem:[%s231 + $0xc0] sm:$0xff] %v280
                %v282 = vld [vmem:[%s230 + $0xc8] sm:$0xff]
                %283 = vst [vmem:[%s231 + $0xc8] sm:$0xff] %v282
                %v284 = vld [vmem:[%s230 + $0xd0] sm:$0xff]
                %285 = vst [vmem:[%s231 + $0xd0] sm:$0xff] %v284
                %v286 = vld [vmem:[%s230 + $0xd8] sm:$0xff]
                %287 = vst [vmem:[%s231 + $0xd8] sm:$0xff] %v286
                %v288 = vld [vmem:[%s230 + $0xe0] sm:$0xff]
                %289 = vst [vmem:[%s231 + $0xe0] sm:$0xff] %v288
                %v290 = vld [vmem:[%s230 + $0xe8] sm:$0xff]
                %291 = vst [vmem:[%s231 + $0xe8] sm:$0xff] %v290
                %v292 = vld [vmem:[%s230 + $0xf0] sm:$0xff]
                %293 = vst [vmem:[%s231 + $0xf0] sm:$0xff] %v292
                %v294 = vld [vmem:[%s230 + $0xf8] sm:$0xff]
                %295 = vst [vmem:[%s231 + $0xf8] sm:$0xff] %v294
              $region75: #{deepfake_detector_forward.3} parent=69 // loop_footer
                %s229 = sadd.s32 1, %s225
              $region76: #{deepfake_detector_forward.3} parent=69 // loop_footer_branch
                %224 = sbr.rel target = $region72
              $region77: #{deepfake_detector_forward.3} parent=69 // loop_exit
                _
            $region70: #{deepfake_detector_forward.3} parent=54 // pred_fallthru
              _
            %p296 = pneg %p220
            // Predicated region
            $region78: #{deepfake_detector_forward.3} parent=54 // pred_check
              _
            $region79: #{deepfake_detector_forward.3} parent=54 // pred_check_branch
              %298 = sbr.rel (%p220) target = $region81
            $region80: #{deepfake_detector_forward.3} parent=54 // pred_region
              %s299 = sand.u32 256, 7
            $region81: #{deepfake_detector_forward.3} parent=54 // pred_fallthru
              _
          $region55: #{deepfake_detector_forward.3} parent=50 // pred_fallthru
            _
          // Predicated region
          $region56: #{deepfake_detector_forward.3} parent=50 // pred_check
            %p204 = pneg %p200
          $region57: #{deepfake_detector_forward.3} parent=50 // pred_check_branch
            %206 = sbr.rel (%p204) target = $region59
          $region58: #{deepfake_detector_forward.3} parent=50 // pred_region
            %s207 = sshll.u32 1, 256
            %s208 = ssub.s32 %s207, 1
            loop: start=0, step=1, limit=1
            $region60: #{deepfake_detector_forward.3} parent=58 // loop_pre_header
              _
            $region61: #{deepfake_detector_forward.3} parent=58 // loop_header
              %s210 = sphi 0, %s214
              %p211 = scmp.ge.s32.totalorder %s210, 1
              %s215 = sphi %s1, %s1
              %s216 = sphi [#allocation4], [#allocation4]
            $region62: #{deepfake_detector_forward.3} parent=58 // loop_header_branch
              %213 = sbr.rel (%p211) target = $region66
            $region63: #{deepfake_detector_forward.3} parent=58 // loop_body
              %v217 = vld [vmem:[%s215] sm:%s208]
              %218 = vst [vmem:[%s216] sm:%s208] %v217
            $region64: #{deepfake_detector_forward.3} parent=58 // loop_footer
              %s214 = sadd.s32 1, %s210
            $region65: #{deepfake_detector_forward.3} parent=58 // loop_footer_branch
              %209 = sbr.rel target = $region61
            $region66: #{deepfake_detector_forward.3} parent=58 // loop_exit
              _
          $region59: #{deepfake_detector_forward.3} parent=50 // pred_fallthru
            _
          // Predicated region
          $region82: #{deepfake_detector_forward.3} parent=50 // pred_check
            _
          $region83: #{deepfake_detector_forward.3} parent=50 // pred_check_branch
            %302 = sbr.rel (0) target = $region85
          $region84: #{deepfake_detector_forward.3} parent=50 // pred_region
            %303 = vsyncadd [#allocation5], 4096
          $region85: #{deepfake_detector_forward.3} parent=50 // pred_fallthru
            _
          %v304 = vld [vmem:[%s165] sm:$0xff]
          %v305 = vld [vmem:[%s165 + $0x8] sm:$0xff]
          %v306 = vunpack.c.l.bf16 %v304
          %v307 = vunpack.c.h.bf16 %v304
          %v308 = vunpack.c.l.bf16 %v305
          %v309 = vunpack.c.h.bf16 %v305
          %v310 = vxor.u32 %v306, 2147483648
          %v311 = vmul.f32 %v310, 1.442695
          %v312 = vpow.pop %v311
          %v313 = vadd.f32 %v312, 1.0
          %v314 = vrcp.pop %v313
          %v315 = vmul.f32 1.0, %v314
          %v316 = vxor.u32 %v307, 2147483648
          %v317 = vmul.f32 %v316, 1.442695
          %v318 = vpow.pop %v317
          %v319 = vadd.f32 %v318, 1.0
          %v320 = vrcp.pop %v319
          %v321 = vmul.f32 1.0, %v320
          %v322 = vtanh.pop %v308
          %v323 = vxor.u32 %v309, 2147483648
          %v324 = vmul.f32 %v323, 1.442695
          %v325 = vpow.pop %v324
          %v326 = vadd.f32 %v325, 1.0
          %v327 = vrcp.pop %v326
          %v328 = vmul.f32 1.0, %v327
          %v329 = vmul.f32 %v321, 0.0
          %v330 = vmul.f32 %v315, %v322
          %v331 = vadd.f32 %v329, %v330
          %v332 = vtanh.pop %v331
          %v333 = vmul.f32 %v328, %v332
          %v334 = vrot.slane %v333, 4
          %v335 = vadd.f32 %v333, %v334
          %v336 = vrot.slane %v335, 2
          %v337 = vadd.f32 %v335, %v336
          %v338 = vrot.slane %v337, 1
          %v339 = vadd.f32 %v337, %v338
          %s340 = scalar_lea.vmem %s165, 16 [#allocation6]
          %v341 = vld [vmem:[%s340] sm:$0xff]
          %v342 = vld [vmem:[%s340 + $0x8] sm:$0xff]
          %v343 = vunpack.c.l.bf16 %v341
          %v344 = vunpack.c.h.bf16 %v341
          %v345 = vunpack.c.l.bf16 %v342
          %v346 = vunpack.c.h.bf16 %v342
          %s347 = smul.u32 4, 16
          %s348 = smul.u32 %s347, 4
          %s349 = sshll.u32 %s348, 4
          %350 = dma.done [#allocation5], %s349
          %v351 = vpack.c.bf16 %v333, %v333
          %v352 = vld [vmem:[#allocation4] sm:$0xff]
          %v353 = vld [vmem:[#allocation4 + $0x8] sm:$0xff]
          %v354 = vld [vmem:[#allocation4 + $0x10] sm:$0xff]
          %v355 = vld [vmem:[#allocation4 + $0x18] sm:$0xff]
          %v356 = vld [vmem:[#allocation4 + $0x20] sm:$0xff]
          %v357 = vld [vmem:[#allocation4 + $0x28] sm:$0xff]
          %v358 = vld [vmem:[#allocation4 + $0x30] sm:$0xff]
          %v359 = vld [vmem:[#allocation4 + $0x38] sm:$0xff]
          %v360 = vld [vmem:[#allocation4 + $0x40] sm:$0xff]
          %v361 = vld [vmem:[#allocation4 + $0x48] sm:$0xff]
          %v362 = vld [vmem:[#allocation4 + $0x50] sm:$0xff]
          %v363 = vld [vmem:[#allocation4 + $0x58] sm:$0xff]
          %v364 = vld [vmem:[#allocation4 + $0x60] sm:$0xff]
          %v365 = vld [vmem:[#allocation4 + $0x68] sm:$0xff]
          %v366 = vld [vmem:[#allocation4 + $0x70] sm:$0xff]
          %v367 = vld [vmem:[#allocation4 + $0x78] sm:$0xff]
          %v368 = vld [vmem:[#allocation4 + $0x80] sm:$0xff]
          %v369 = vld [vmem:[#allocation4 + $0x88] sm:$0xff]
          %v370 = vld [vmem:[#allocation4 + $0x90] sm:$0xff]
          %v371 = vld [vmem:[#allocation4 + $0x98] sm:$0xff]
          %v372 = vld [vmem:[#allocation4 + $0xa0] sm:$0xff]
          %v373 = vld [vmem:[#allocation4 + $0xa8] sm:$0xff]
          %v374 = vld [vmem:[#allocation4 + $0xb0] sm:$0xff]
          %v375 = vld [vmem:[#allocation4 + $0xb8] sm:$0xff]
          %v376 = vld [vmem:[#allocation4 + $0xc0] sm:$0xff]
          %v377 = vld [vmem:[#allocation4 + $0xc8] sm:$0xff]
          %v378 = vld [vmem:[#allocation4 + $0xd0] sm:$0xff]
          %v379 = vld [vmem:[#allocation4 + $0xd8] sm:$0xff]
          %v380 = vld [vmem:[#allocation4 + $0xe0] sm:$0xff]
          %v381 = vld [vmem:[#allocation4 + $0xe8] sm:$0xff]
          %v382 = vld [vmem:[#allocation4 + $0xf0] sm:$0xff]
          %v383 = vld [vmem:[#allocation4 + $0xf8] sm:$0xff]
          %v416 = vunpack.c.l.b16 %v352
          %v417 = vunpack.c.h.b16 %v352
          %v418 = vunpack.c.l.b16 %v353
          %v419 = vunpack.c.h.b16 %v353
          %v420 = vunpack.c.l.b16 %v354
          %v421 = vunpack.c.h.b16 %v354
          %v422 = vunpack.c.l.b16 %v355
          %v423 = vunpack.c.h.b16 %v355
          %v424 = vunpack.c.l.b16 %v356
          %v425 = vunpack.c.h.b16 %v356
          %v426 = vunpack.c.l.b16 %v357
          %v427 = vunpack.c.h.b16 %v357
          %v428 = vunpack.c.l.b16 %v358
          %v429 = vunpack.c.h.b16 %v358
          %v430 = vunpack.c.l.b16 %v359
          %v431 = vunpack.c.h.b16 %v359
          %v432 = vunpack.c.l.b16 %v360
          %v433 = vunpack.c.h.b16 %v360
          %v434 = vunpack.c.l.b16 %v361
          %v435 = vunpack.c.h.b16 %v361
          %v436 = vunpack.c.l.b16 %v362
          %v437 = vunpack.c.h.b16 %v362
          %v438 = vunpack.c.l.b16 %v363
          %v439 = vunpack.c.h.b16 %v363
          %v440 = vunpack.c.l.b16 %v364
          %v441 = vunpack.c.h.b16 %v364
          %v442 = vunpack.c.l.b16 %v365
          %v443 = vunpack.c.h.b16 %v365
          %v444 = vunpack.c.l.b16 %v366
          %v445 = vunpack.c.h.b16 %v366
          %v446 = vunpack.c.l.b16 %v367
          %v447 = vunpack.c.h.b16 %v367
          %v448 = vunpack.c.l.b16 %v368
          %v449 = vunpack.c.h.b16 %v368
          %v450 = vunpack.c.l.b16 %v369
          %v451 = vunpack.c.h.b16 %v369
          %v452 = vunpack.c.l.b16 %v370
          %v453 = vunpack.c.h.b16 %v370
          %v454 = vunpack.c.l.b16 %v371
          %v455 = vunpack.c.h.b16 %v371
          %v456 = vunpack.c.l.b16 %v372
          %v457 = vunpack.c.h.b16 %v372
          %v458 = vunpack.c.l.b16 %v373
          %v459 = vunpack.c.h.b16 %v373
          %v460 = vunpack.c.l.b16 %v374
          %v461 = vunpack.c.h.b16 %v374
          %v462 = vunpack.c.l.b16 %v375
          %v463 = vunpack.c.h.b16 %v375
          %v464 = vunpack.c.l.b16 %v376
          %v465 = vunpack.c.h.b16 %v376
          %v466 = vunpack.c.l.b16 %v377
          %v467 = vunpack.c.h.b16 %v377
          %v468 = vunpack.c.l.b16 %v378
          %v469 = vunpack.c.h.b16 %v378
          %v470 = vunpack.c.l.b16 %v379
          %v471 = vunpack.c.h.b16 %v379
          %v472 = vunpack.c.l.b16 %v380
          %v473 = vunpack.c.h.b16 %v380
          %v474 = vunpack.c.l.b16 %v381
          %v475 = vunpack.c.h.b16 %v381
          %v476 = vunpack.c.l.b16 %v382
          %v477 = vunpack.c.h.b16 %v382
          %v478 = vunpack.c.l.b16 %v383
          %v479 = vunpack.c.h.b16 %v383
          %v480 = vpack.c.b16 %v420, %v416
          %v481 = vpack.c.b16 %v421, %v417
          %v482 = vpack.c.b16 %v422, %v418
          %v483 = vpack.c.b16 %v423, %v419
          %v484 = vpack.c.b16 %v428, %v424
          %v485 = vpack.c.b16 %v429, %v425
          %v486 = vpack.c.b16 %v430, %v426
          %v487 = vpack.c.b16 %v431, %v427
          %v488 = vpack.c.b16 %v436, %v432
          %v489 = vpack.c.b16 %v437, %v433
          %v490 = vpack.c.b16 %v438, %v434
          %v491 = vpack.c.b16 %v439, %v435
          %v492 = vpack.c.b16 %v444, %v440
          %v493 = vpack.c.b16 %v445, %v441
          %v494 = vpack.c.b16 %v446, %v442
          %v495 = vpack.c.b16 %v447, %v443
          %v496 = vpack.c.b16 %v452, %v448
          %v497 = vpack.c.b16 %v453, %v449
          %v498 = vpack.c.b16 %v454, %v450
          %v499 = vpack.c.b16 %v455, %v451
          %v500 = vpack.c.b16 %v460, %v456
          %v501 = vpack.c.b16 %v461, %v457
          %v502 = vpack.c.b16 %v462, %v458
          %v503 = vpack.c.b16 %v463, %v459
          %v504 = vpack.c.b16 %v468, %v464
          %v505 = vpack.c.b16 %v469, %v465
          %v506 = vpack.c.b16 %v470, %v466
          %v507 = vpack.c.b16 %v471, %v467
          %v508 = vpack.c.b16 %v476, %v472
          %v509 = vpack.c.b16 %v477, %v473
          %v510 = vpack.c.b16 %v478, %v474
          %v511 = vpack.c.b16 %v479, %v475
          %544 = vmatprep.subr.bf16.mxu0 %v509
          %545 = vmatpush1.bf16.msra.mxu0 %v508
          %546 = vmatprep.subr.bf16.mxu0 %v505
          %547 = vmatpush1.bf16.msra.mxu0 %v504
          %548 = vmatprep.subr.bf16.mxu0 %v501
          %549 = vmatpush1.bf16.msra.mxu0 %v500
          %550 = vmatprep.subr.bf16.mxu0 %v497
          %551 = vmatpush1.bf16.msra.mxu0 %v496
          %552 = vmatprep.subr.bf16.mxu0 %v493
          %553 = vmatpush1.bf16.msra.mxu0 %v492
          %554 = vmatprep.subr.bf16.mxu0 %v489
          %555 = vmatpush1.bf16.msra.mxu0 %v488
          %556 = vmatprep.subr.bf16.mxu0 %v485
          %557 = vmatpush1.bf16.msra.mxu0 %v484
          %558 = vmatprep.subr.bf16.mxu0 %v481
          %559 = vmatpush1.bf16.msra.mxu0 %v480
          %560 = vmatprep.subr.bf16.mxu0 0
          %561 = vmatpush2.bf16.msra.mxu0 0
          %562 = vmatprep.subr.bf16.mxu0 0
          %563 = vmatpush2.bf16.msra.mxu0 0
          %564 = vmatprep.subr.bf16.mxu0 0
          %565 = vmatpush2.bf16.msra.mxu0 0
          %566 = vmatprep.subr.bf16.mxu0 0
          %567 = vmatpush2.bf16.msra.mxu0 0
          %568 = vmatprep.subr.bf16.mxu0 0
          %569 = vmatpush2.bf16.msra.mxu0 0
          %570 = vmatprep.subr.bf16.mxu0 0
          %571 = vmatpush2.bf16.msra.mxu0 0
          %572 = vmatprep.subr.bf16.mxu0 0
          %573 = vmatpush2.bf16.msra.mxu0 0
          %574 = vmatprep.subr.bf16.mxu0 0
          %575 = vmatpush2.bf16.msra.mxu0 0
          %576 = vmatprep.mubr.bf16.mxu0 0
          %577 = vmatmul.mubr.bf16.gmra.mxu0 %v351
          %v578 = vpop.f32.mrf.mxu0
          %v579 = vadd.f32 0.0, %v578
          %v580 = vpop.f32.mrf.mxu0
          %v581 = vadd.f32 0.0, %v580
          %v582 = vpop.f32.mrf.mxu0
          %v583 = vpop.f32.mrf.mxu0
          %584 = vdwg.mxu0
          %585 = vmatprep.subr.bf16.mxu0 %v511
          %586 = vmatpush1.bf16.msra.mxu0 %v510
          %587 = vmatprep.subr.bf16.mxu0 %v507
          %588 = vmatpush1.bf16.msra.mxu0 %v506
          %589 = vmatprep.subr.bf16.mxu0 %v503
          %590 = vmatpush1.bf16.msra.mxu0 %v502
          %591 = vmatprep.subr.bf16.mxu0 %v499
          %592 = vmatpush1.bf16.msra.mxu0 %v498
          %593 = vmatprep.subr.bf16.mxu0 %v495
          %594 = vmatpush1.bf16.msra.mxu0 %v494
          %595 = vmatprep.subr.bf16.mxu0 %v491
          %596 = vmatpush1.bf16.msra.mxu0 %v490
          %597 = vmatprep.subr.bf16.mxu0 %v487
          %598 = vmatpush1.bf16.msra.mxu0 %v486
          %599 = vmatprep.subr.bf16.mxu0 %v483
          %600 = vmatpush1.bf16.msra.mxu0 %v482
          %601 = vmatprep.subr.bf16.mxu0 0
          %602 = vmatpush2.bf16.msra.mxu0 0
          %603 = vmatprep.subr.bf16.mxu0 0
          %604 = vmatpush2.bf16.msra.mxu0 0
          %605 = vmatprep.subr.bf16.mxu0 0
          %606 = vmatpush2.bf16.msra.mxu0 0
          %607 = vmatprep.subr.bf16.mxu0 0
          %608 = vmatpush2.bf16.msra.mxu0 0
          %609 = vmatprep.subr.bf16.mxu0 0
          %610 = vmatpush2.bf16.msra.mxu0 0
          %611 = vmatprep.subr.bf16.mxu0 0
          %612 = vmatpush2.bf16.msra.mxu0 0
          %613 = vmatprep.subr.bf16.mxu0 0
          %614 = vmatpush2.bf16.msra.mxu0 0
          %615 = vmatprep.subr.bf16.mxu0 0
          %616 = vmatpush2.bf16.msra.mxu0 0
          %617 = vmatprep.mubr.bf16.mxu0 0
          %618 = vmatmul.mubr.bf16.gmra.mxu0 %v351
          %v619 = vpop.f32.mrf.mxu0
          %v620 = vadd.f32 0.0, %v619
          %v621 = vpop.f32.mrf.mxu0
          %v622 = vadd.f32 0.0, %v621
          %v623 = vpop.f32.mrf.mxu0
          %v624 = vpop.f32.mrf.mxu0
          %625 = vdwg.mxu0
          %v626 = vadd.f32 %v343, %v579
          %v627 = vadd.f32 %v344, %v581
          %v628 = vadd.f32 %v345, %v620
          %v629 = vadd.f32 %v346, %v622
          %v630 = vxor.u32 %v626, 2147483648
          %v631 = vmul.f32 %v630, 1.442695
          %v632 = vpow.pop %v631
          %v633 = vadd.f32 %v632, 1.0
          %v634 = vrcp.pop %v633
          %v635 = vmul.f32 1.0, %v634
          %v636 = vxor.u32 %v627, 2147483648
          %v637 = vmul.f32 %v636, 1.442695
          %v638 = vpow.pop %v637
          %v639 = vadd.f32 %v638, 1.0
          %v640 = vrcp.pop %v639
          %v641 = vmul.f32 1.0, %v640
          %v642 = vtanh.pop %v628
          %v643 = vxor.u32 %v629, 2147483648
          %v644 = vmul.f32 %v643, 1.442695
          %v645 = vpow.pop %v644
          %v646 = vadd.f32 %v645, 1.0
          %v647 = vrcp.pop %v646
          %v648 = vmul.f32 1.0, %v647
          %v649 = vmul.f32 %v641, %v331
          %v650 = vmul.f32 %v635, %v642
          %v651 = vadd.f32 %v649, %v650
          %v652 = vtanh.pop %v651
          %v653 = vmul.f32 %v648, %v652
          %v654 = vrot.slane %v653, 4
          %v655 = vadd.f32 %v653, %v654
          %v656 = vrot.slane %v655, 2
          %v657 = vadd.f32 %v655, %v656
          %v658 = vrot.slane %v657, 1
          %v659 = vadd.f32 %v657, %v658
          %s660 = scalar_lea.vmem %s165, 32 [#allocation6]
          %v661 = vld [vmem:[%s660] sm:$0xff]
          %v662 = vld [vmem:[%s660 + $0x8] sm:$0xff]
          %v663 = vunpack.c.l.bf16 %v661
          %v664 = vunpack.c.h.bf16 %v661
          %v665 = vunpack.c.l.bf16 %v662
          %v666 = vunpack.c.h.bf16 %v662
          %v667 = vpack.c.bf16 %v653, %v653
          %668 = vmatprep.subr.bf16.mxu0 %v509
          %669 = vmatpush1.bf16.msra.mxu0 %v508
          %670 = vmatprep.subr.bf16.mxu0 %v505
          %671 = vmatpush1.bf16.msra.mxu0 %v504
          %672 = vmatprep.subr.bf16.mxu0 %v501
          %673 = vmatpush1.bf16.msra.mxu0 %v500
          %674 = vmatprep.subr.bf16.mxu0 %v497
          %675 = vmatpush1.bf16.msra.mxu0 %v496
          %676 = vmatprep.subr.bf16.mxu0 %v493
          %677 = vmatpush1.bf16.msra.mxu0 %v492
          %678 = vmatprep.subr.bf16.mxu0 %v489
          %679 = vmatpush1.bf16.msra.mxu0 %v488
          %680 = vmatprep.subr.bf16.mxu0 %v485
          %681 = vmatpush1.bf16.msra.mxu0 %v484
          %682 = vmatprep.subr.bf16.mxu0 %v481
          %683 = vmatpush1.bf16.msra.mxu0 %v480
          %684 = vmatprep.subr.bf16.mxu0 0
          %685 = vmatpush2.bf16.msra.mxu0 0
          %686 = vmatprep.subr.bf16.mxu0 0
          %687 = vmatpush2.bf16.msra.mxu0 0
          %688 = vmatprep.subr.bf16.mxu0 0
          %689 = vmatpush2.bf16.msra.mxu0 0
          %690 = vmatprep.subr.bf16.mxu0 0
          %691 = vmatpush2.bf16.msra.mxu0 0
          %692 = vmatprep.subr.bf16.mxu0 0
          %693 = vmatpush2.bf16.msra.mxu0 0
          %694 = vmatprep.subr.bf16.mxu0 0
          %695 = vmatpush2.bf16.msra.mxu0 0
          %696 = vmatprep.subr.bf16.mxu0 0
          %697 = vmatpush2.bf16.msra.mxu0 0
          %698 = vmatprep.subr.bf16.mxu0 0
          %699 = vmatpush2.bf16.msra.mxu0 0
          %700 = vmatprep.mubr.bf16.mxu0 0
          %701 = vmatmul.mubr.bf16.gmra.mxu0 %v667
          %v702 = vpop.f32.mrf.mxu0
          %v703 = vadd.f32 0.0, %v702
          %v704 = vpop.f32.mrf.mxu0
          %v705 = vadd.f32 0.0, %v704
          %v706 = vpop.f32.mrf.mxu0
          %v707 = vpop.f32.mrf.mxu0
          %708 = vdwg.mxu0
          %709 = vmatprep.subr.bf16.mxu0 %v511
          %710 = vmatpush1.bf16.msra.mxu0 %v510
          %711 = vmatprep.subr.bf16.mxu0 %v507
          %712 = vmatpush1.bf16.msra.mxu0 %v506
          %713 = vmatprep.subr.bf16.mxu0 %v503
          %714 = vmatpush1.bf16.msra.mxu0 %v502
          %715 = vmatprep.subr.bf16.mxu0 %v499
          %716 = vmatpush1.bf16.msra.mxu0 %v498
          %717 = vmatprep.subr.bf16.mxu0 %v495
          %718 = vmatpush1.bf16.msra.mxu0 %v494
          %719 = vmatprep.subr.bf16.mxu0 %v491
          %720 = vmatpush1.bf16.msra.mxu0 %v490
          %721 = vmatprep.subr.bf16.mxu0 %v487
          %722 = vmatpush1.bf16.msra.mxu0 %v486
          %723 = vmatprep.subr.bf16.mxu0 %v483
          %724 = vmatpush1.bf16.msra.mxu0 %v482
          %725 = vmatprep.subr.bf16.mxu0 0
          %726 = vmatpush2.bf16.msra.mxu0 0
          %727 = vmatprep.subr.bf16.mxu0 0
          %728 = vmatpush2.bf16.msra.mxu0 0
          %729 = vmatprep.subr.bf16.mxu0 0
          %730 = vmatpush2.bf16.msra.mxu0 0
          %731 = vmatprep.subr.bf16.mxu0 0
          %732 = vmatpush2.bf16.msra.mxu0 0
          %733 = vmatprep.subr.bf16.mxu0 0
          %734 = vmatpush2.bf16.msra.mxu0 0
          %735 = vmatprep.subr.bf16.mxu0 0
          %736 = vmatpush2.bf16.msra.mxu0 0
          %737 = vmatprep.subr.bf16.mxu0 0
          %738 = vmatpush2.bf16.msra.mxu0 0
          %739 = vmatprep.subr.bf16.mxu0 0
          %740 = vmatpush2.bf16.msra.mxu0 0
          %741 = vmatprep.mubr.bf16.mxu0 0
          %742 = vmatmul.mubr.bf16.gmra.mxu0 %v667
          %v743 = vpop.f32.mrf.mxu0
          %v744 = vadd.f32 0.0, %v743
          %v745 = vpop.f32.mrf.mxu0
          %v746 = vadd.f32 0.0, %v745
          %v747 = vpop.f32.mrf.mxu0
          %v748 = vpop.f32.mrf.mxu0
          %749 = vdwg.mxu0
          %v750 = vadd.f32 %v663, %v703
          %v751 = vadd.f32 %v664, %v705
          %v752 = vadd.f32 %v665, %v744
          %v753 = vadd.f32 %v666, %v746
          %v754 = vxor.u32 %v750, 2147483648
          %v755 = vmul.f32 %v754, 1.442695
          %v756 = vpow.pop %v755
          %v757 = vadd.f32 %v756, 1.0
          %v758 = vrcp.pop %v757
          %v759 = vmul.f32 1.0, %v758
          %v760 = vxor.u32 %v751, 2147483648
          %v761 = vmul.f32 %v760, 1.442695
          %v762 = vpow.pop %v761
          %v763 = vadd.f32 %v762, 1.0
          %v764 = vrcp.pop %v763
          %v765 = vmul.f32 1.0, %v764
          %v766 = vtanh.pop %v752
          %v767 = vxor.u32 %v753, 2147483648
          %v768 = vmul.f32 %v767, 1.442695
          %v769 = vpow.pop %v768
          %v770 = vadd.f32 %v769, 1.0
          %v771 = vrcp.pop %v770
          %v772 = vmul.f32 1.0, %v771
          %v773 = vmul.f32 %v765, %v651
          %v774 = vmul.f32 %v759, %v766
          %v775 = vadd.f32 %v773, %v774
          %v776 = vtanh.pop %v775
          %v777 = vmul.f32 %v772, %v776
          %v778 = vrot.slane %v777, 4
          %v779 = vadd.f32 %v777, %v778
          %v780 = vrot.slane %v779, 2
          %v781 = vadd.f32 %v779, %v780
          %v782 = vrot.slane %v781, 1
          %v783 = vadd.f32 %v781, %v782
          %s784 = scalar_lea.vmem %s165, 48 [#allocation6]
          %v785 = vld [vmem:[%s784] sm:$0xff]
          %v786 = vld [vmem:[%s784 + $0x8] sm:$0xff]
          %v787 = vunpack.c.l.bf16 %v785
          %v788 = vunpack.c.h.bf16 %v785
          %v789 = vunpack.c.l.bf16 %v786
          %v790 = vunpack.c.h.bf16 %v786
          %v791 = vpack.c.bf16 %v777, %v777
          %792 = vmatprep.subr.bf16.mxu0 %v509
          %793 = vmatpush1.bf16.msra.mxu0 %v508
          %794 = vmatprep.subr.bf16.mxu0 %v505
          %795 = vmatpush1.bf16.msra.mxu0 %v504
          %796 = vmatprep.subr.bf16.mxu0 %v501
          %797 = vmatpush1.bf16.msra.mxu0 %v500
          %798 = vmatprep.subr.bf16.mxu0 %v497
          %799 = vmatpush1.bf16.msra.mxu0 %v496
          %800 = vmatprep.subr.bf16.mxu0 %v493
          %801 = vmatpush1.bf16.msra.mxu0 %v492
          %802 = vmatprep.subr.bf16.mxu0 %v489
          %803 = vmatpush1.bf16.msra.mxu0 %v488
          %804 = vmatprep.subr.bf16.mxu0 %v485
          %805 = vmatpush1.bf16.msra.mxu0 %v484
          %806 = vmatprep.subr.bf16.mxu0 %v481
          %807 = vmatpush1.bf16.msra.mxu0 %v480
          %808 = vmatprep.subr.bf16.mxu0 0
          %809 = vmatpush2.bf16.msra.mxu0 0
          %810 = vmatprep.subr.bf16.mxu0 0
          %811 = vmatpush2.bf16.msra.mxu0 0
          %812 = vmatprep.subr.bf16.mxu0 0
          %813 = vmatpush2.bf16.msra.mxu0 0
          %814 = vmatprep.subr.bf16.mxu0 0
          %815 = vmatpush2.bf16.msra.mxu0 0
          %816 = vmatprep.subr.bf16.mxu0 0
          %817 = vmatpush2.bf16.msra.mxu0 0
          %818 = vmatprep.subr.bf16.mxu0 0
          %819 = vmatpush2.bf16.msra.mxu0 0
          %820 = vmatprep.subr.bf16.mxu0 0
          %821 = vmatpush2.bf16.msra.mxu0 0
          %822 = vmatprep.subr.bf16.mxu0 0
          %823 = vmatpush2.bf16.msra.mxu0 0
          %824 = vmatprep.mubr.bf16.mxu0 0
          %825 = vmatmul.mubr.bf16.gmra.mxu0 %v791
          %v826 = vpop.f32.mrf.mxu0
          %v827 = vadd.f32 0.0, %v826
          %v828 = vpop.f32.mrf.mxu0
          %v829 = vadd.f32 0.0, %v828
          %v830 = vpop.f32.mrf.mxu0
          %v831 = vpop.f32.mrf.mxu0
          %832 = vdwg.mxu0
          %833 = vmatprep.subr.bf16.mxu0 %v511
          %834 = vmatpush1.bf16.msra.mxu0 %v510
          %835 = vmatprep.subr.bf16.mxu0 %v507
          %836 = vmatpush1.bf16.msra.mxu0 %v506
          %837 = vmatprep.subr.bf16.mxu0 %v503
          %838 = vmatpush1.bf16.msra.mxu0 %v502
          %839 = vmatprep.subr.bf16.mxu0 %v499
          %840 = vmatpush1.bf16.msra.mxu0 %v498
          %841 = vmatprep.subr.bf16.mxu0 %v495
          %842 = vmatpush1.bf16.msra.mxu0 %v494
          %843 = vmatprep.subr.bf16.mxu0 %v491
          %844 = vmatpush1.bf16.msra.mxu0 %v490
          %845 = vmatprep.subr.bf16.mxu0 %v487
          %846 = vmatpush1.bf16.msra.mxu0 %v486
          %847 = vmatprep.subr.bf16.mxu0 %v483
          %848 = vmatpush1.bf16.msra.mxu0 %v482
          %849 = vmatprep.subr.bf16.mxu0 0
          %850 = vmatpush2.bf16.msra.mxu0 0
          %851 = vmatprep.subr.bf16.mxu0 0
          %852 = vmatpush2.bf16.msra.mxu0 0
          %853 = vmatprep.subr.bf16.mxu0 0
          %854 = vmatpush2.bf16.msra.mxu0 0
          %855 = vmatprep.subr.bf16.mxu0 0
          %856 = vmatpush2.bf16.msra.mxu0 0
          %857 = vmatprep.subr.bf16.mxu0 0
          %858 = vmatpush2.bf16.msra.mxu0 0
          %859 = vmatprep.subr.bf16.mxu0 0
          %860 = vmatpush2.bf16.msra.mxu0 0
          %861 = vmatprep.subr.bf16.mxu0 0
          %862 = vmatpush2.bf16.msra.mxu0 0
          %863 = vmatprep.subr.bf16.mxu0 0
          %864 = vmatpush2.bf16.msra.mxu0 0
          %865 = vmatprep.mubr.bf16.mxu0 0
          %866 = vmatmul.mubr.bf16.gmra.mxu0 %v791
          %v867 = vpop.f32.mrf.mxu0
          %v868 = vadd.f32 0.0, %v867
          %v869 = vpop.f32.mrf.mxu0
          %v870 = vadd.f32 0.0, %v869
          %v871 = vpop.f32.mrf.mxu0
          %v872 = vpop.f32.mrf.mxu0
          %873 = vdwg.mxu0
          %v874 = vadd.f32 %v787, %v827
          %v875 = vadd.f32 %v788, %v829
          %v876 = vadd.f32 %v789, %v868
          %v877 = vadd.f32 %v790, %v870
          %v878 = vxor.u32 %v874, 2147483648
          %v879 = vmul.f32 %v878, 1.442695
          %v880 = vpow.pop %v879
          %v881 = vadd.f32 %v880, 1.0
          %v882 = vrcp.pop %v881
          %v883 = vmul.f32 1.0, %v882
          %v884 = vxor.u32 %v875, 2147483648
          %v885 = vmul.f32 %v884, 1.442695
          %v886 = vpow.pop %v885
          %v887 = vadd.f32 %v886, 1.0
          %v888 = vrcp.pop %v887
          %v889 = vmul.f32 1.0, %v888
          %v890 = vtanh.pop %v876
          %v891 = vxor.u32 %v877, 2147483648
          %v892 = vmul.f32 %v891, 1.442695
          %v893 = vpow.pop %v892
          %v894 = vadd.f32 %v893, 1.0
          %v895 = vrcp.pop %v894
          %v896 = vmul.f32 1.0, %v895
          %v897 = vmul.f32 %v889, %v775
          %v898 = vmul.f32 %v883, %v890
          %v899 = vadd.f32 %v897, %v898
          %v900 = vtanh.pop %v899
          %v901 = vmul.f32 %v896, %v900
          %v902 = vrot.slane %v901, 4
          %v903 = vadd.f32 %v901, %v902
          %v904 = vrot.slane %v903, 2
          %v905 = vadd.f32 %v903, %v904
          %v906 = vrot.slane %v905, 1
          %v907 = vadd.f32 %v905, %v906
          %s908 = scalar_lea.vmem %s165, 64 [#allocation6]
          %v909 = vld [vmem:[%s908] sm:$0xff]
          %v910 = vld [vmem:[%s908 + $0x8] sm:$0xff]
          %v911 = vunpack.c.l.bf16 %v909
          %v912 = vunpack.c.h.bf16 %v909
          %v913 = vunpack.c.l.bf16 %v910
          %v914 = vunpack.c.h.bf16 %v910
          %v915 = vpack.c.bf16 %v901, %v901
          %916 = vmatprep.subr.bf16.mxu0 %v509
          %917 = vmatpush1.bf16.msra.mxu0 %v508
          %918 = vmatprep.subr.bf16.mxu0 %v505
          %919 = vmatpush1.bf16.msra.mxu0 %v504
          %920 = vmatprep.subr.bf16.mxu0 %v501
          %921 = vmatpush1.bf16.msra.mxu0 %v500
          %922 = vmatprep.subr.bf16.mxu0 %v497
          %923 = vmatpush1.bf16.msra.mxu0 %v496
          %924 = vmatprep.subr.bf16.mxu0 %v493
          %925 = vmatpush1.bf16.msra.mxu0 %v492
          %926 = vmatprep.subr.bf16.mxu0 %v489
          %927 = vmatpush1.bf16.msra.mxu0 %v488
          %928 = vmatprep.subr.bf16.mxu0 %v485
          %929 = vmatpush1.bf16.msra.mxu0 %v484
          %930 = vmatprep.subr.bf16.mxu0 %v481
          %931 = vmatpush1.bf16.msra.mxu0 %v480
          %932 = vmatprep.subr.bf16.mxu0 0
          %933 = vmatpush2.bf16.msra.mxu0 0
          %934 = vmatprep.subr.bf16.mxu0 0
          %935 = vmatpush2.bf16.msra.mxu0 0
          %936 = vmatprep.subr.bf16.mxu0 0
          %937 = vmatpush2.bf16.msra.mxu0 0
          %938 = vmatprep.subr.bf16.mxu0 0
          %939 = vmatpush2.bf16.msra.mxu0 0
          %940 = vmatprep.subr.bf16.mxu0 0
          %941 = vmatpush2.bf16.msra.mxu0 0
          %942 = vmatprep.subr.bf16.mxu0 0
          %943 = vmatpush2.bf16.msra.mxu0 0
          %944 = vmatprep.subr.bf16.mxu0 0
          %945 = vmatpush2.bf16.msra.mxu0 0
          %946 = vmatprep.subr.bf16.mxu0 0
          %947 = vmatpush2.bf16.msra.mxu0 0
          %948 = vmatprep.mubr.bf16.mxu0 0
          %949 = vmatmul.mubr.bf16.gmra.mxu0 %v915
          %v950 = vpop.f32.mrf.mxu0
          %v951 = vadd.f32 0.0, %v950
          %v952 = vpop.f32.mrf.mxu0
          %v953 = vadd.f32 0.0, %v952
          %v954 = vpop.f32.mrf.mxu0
          %v955 = vpop.f32.mrf.mxu0
          %956 = vdwg.mxu0
          %957 = vmatprep.subr.bf16.mxu0 %v511
          %958 = vmatpush1.bf16.msra.mxu0 %v510
          %959 = vmatprep.subr.bf16.mxu0 %v507
          %960 = vmatpush1.bf16.msra.mxu0 %v506
          %961 = vmatprep.subr.bf16.mxu0 %v503
          %962 = vmatpush1.bf16.msra.mxu0 %v502
          %963 = vmatprep.subr.bf16.mxu0 %v499
          %964 = vmatpush1.bf16.msra.mxu0 %v498
          %965 = vmatprep.subr.bf16.mxu0 %v495
          %966 = vmatpush1.bf16.msra.mxu0 %v494
          %967 = vmatprep.subr.bf16.mxu0 %v491
          %968 = vmatpush1.bf16.msra.mxu0 %v490
          %969 = vmatprep.subr.bf16.mxu0 %v487
          %970 = vmatpush1.bf16.msra.mxu0 %v486
          %971 = vmatprep.subr.bf16.mxu0 %v483
          %972 = vmatpush1.bf16.msra.mxu0 %v482
          %973 = vmatprep.subr.bf16.mxu0 0
          %974 = vmatpush2.bf16.msra.mxu0 0
          %975 = vmatprep.subr.bf16.mxu0 0
          %976 = vmatpush2.bf16.msra.mxu0 0
          %977 = vmatprep.subr.bf16.mxu0 0
          %978 = vmatpush2.bf16.msra.mxu0 0
          %979 = vmatprep.subr.bf16.mxu0 0
          %980 = vmatpush2.bf16.msra.mxu0 0
          %981 = vmatprep.subr.bf16.mxu0 0
          %982 = vmatpush2.bf16.msra.mxu0 0
          %983 = vmatprep.subr.bf16.mxu0 0
          %984 = vmatpush2.bf16.msra.mxu0 0
          %985 = vmatprep.subr.bf16.mxu0 0
          %986 = vmatpush2.bf16.msra.mxu0 0
          %987 = vmatprep.subr.bf16.mxu0 0
          %988 = vmatpush2.bf16.msra.mxu0 0
          %989 = vmatprep.mubr.bf16.mxu0 0
          %990 = vmatmul.mubr.bf16.gmra.mxu0 %v915
          %v991 = vpop.f32.mrf.mxu0
          %v992 = vadd.f32 0.0, %v991
          %v993 = vpop.f32.mrf.mxu0
          %v994 = vadd.f32 0.0, %v993
          %v995 = vpop.f32.mrf.mxu0
          %v996 = vpop.f32.mrf.mxu0
          %997 = vdwg.mxu0
          %v998 = vadd.f32 %v911, %v951
          %v999 = vadd.f32 %v912, %v953
          %v1000 = vadd.f32 %v913, %v992
          %v1001 = vadd.f32 %v914, %v994
          %v1002 = vxor.u32 %v998, 2147483648
          %v1003 = vmul.f32 %v1002, 1.442695
          %v1004 = vpow.pop %v1003
          %v1005 = vadd.f32 %v1004, 1.0
          %v1006 = vrcp.pop %v1005
          %v1007 = vmul.f32 1.0, %v1006
          %v1008 = vxor.u32 %v999, 2147483648
          %v1009 = vmul.f32 %v1008, 1.442695
          %v1010 = vpow.pop %v1009
          %v1011 = vadd.f32 %v1010, 1.0
          %v1012 = vrcp.pop %v1011
          %v1013 = vmul.f32 1.0, %v1012
          %v1014 = vtanh.pop %v1000
          %v1015 = vxor.u32 %v1001, 2147483648
          %v1016 = vmul.f32 %v1015, 1.442695
          %v1017 = vpow.pop %v1016
          %v1018 = vadd.f32 %v1017, 1.0
          %v1019 = vrcp.pop %v1018
          %v1020 = vmul.f32 1.0, %v1019
          %v1021 = vmul.f32 %v1013, %v899
          %v1022 = vmul.f32 %v1007, %v1014
          %v1023 = vadd.f32 %v1021, %v1022
          %v1024 = vtanh.pop %v1023
          %v1025 = vmul.f32 %v1020, %v1024
          %v1026 = vrot.slane %v1025, 4
          %v1027 = vadd.f32 %v1025, %v1026
          %v1028 = vrot.slane %v1027, 2
          %v1029 = vadd.f32 %v1027, %v1028
          %v1030 = vrot.slane %v1029, 1
          %v1031 = vadd.f32 %v1029, %v1030
          %s1032 = scalar_lea.vmem %s165, 80 [#allocation6]
          %v1033 = vld [vmem:[%s1032] sm:$0xff]
          %v1034 = vld [vmem:[%s1032 + $0x8] sm:$0xff]
          %v1035 = vunpack.c.l.bf16 %v1033
          %v1036 = vunpack.c.h.bf16 %v1033
          %v1037 = vunpack.c.l.bf16 %v1034
          %v1038 = vunpack.c.h.bf16 %v1034
          %v1039 = vpack.c.bf16 %v1025, %v1025
          %1040 = vmatprep.subr.bf16.mxu0 %v509
          %1041 = vmatpush1.bf16.msra.mxu0 %v508
          %1042 = vmatprep.subr.bf16.mxu0 %v505
          %1043 = vmatpush1.bf16.msra.mxu0 %v504
          %1044 = vmatprep.subr.bf16.mxu0 %v501
          %1045 = vmatpush1.bf16.msra.mxu0 %v500
          %1046 = vmatprep.subr.bf16.mxu0 %v497
          %1047 = vmatpush1.bf16.msra.mxu0 %v496
          %1048 = vmatprep.subr.bf16.mxu0 %v493
          %1049 = vmatpush1.bf16.msra.mxu0 %v492
          %1050 = vmatprep.subr.bf16.mxu0 %v489
          %1051 = vmatpush1.bf16.msra.mxu0 %v488
          %1052 = vmatprep.subr.bf16.mxu0 %v485
          %1053 = vmatpush1.bf16.msra.mxu0 %v484
          %1054 = vmatprep.subr.bf16.mxu0 %v481
          %1055 = vmatpush1.bf16.msra.mxu0 %v480
          %1056 = vmatprep.subr.bf16.mxu0 0
          %1057 = vmatpush2.bf16.msra.mxu0 0
          %1058 = vmatprep.subr.bf16.mxu0 0
          %1059 = vmatpush2.bf16.msra.mxu0 0
          %1060 = vmatprep.subr.bf16.mxu0 0
          %1061 = vmatpush2.bf16.msra.mxu0 0
          %1062 = vmatprep.subr.bf16.mxu0 0
          %1063 = vmatpush2.bf16.msra.mxu0 0
          %1064 = vmatprep.subr.bf16.mxu0 0
          %1065 = vmatpush2.bf16.msra.mxu0 0
          %1066 = vmatprep.subr.bf16.mxu0 0
          %1067 = vmatpush2.bf16.msra.mxu0 0
          %1068 = vmatprep.subr.bf16.mxu0 0
          %1069 = vmatpush2.bf16.msra.mxu0 0
          %1070 = vmatprep.subr.bf16.mxu0 0
          %1071 = vmatpush2.bf16.msra.mxu0 0
          %1072 = vmatprep.mubr.bf16.mxu0 0
          %1073 = vmatmul.mubr.bf16.gmra.mxu0 %v1039
          %v1074 = vpop.f32.mrf.mxu0
          %v1075 = vadd.f32 0.0, %v1074
          %v1076 = vpop.f32.mrf.mxu0
          %v1077 = vadd.f32 0.0, %v1076
          %v1078 = vpop.f32.mrf.mxu0
          %v1079 = vpop.f32.mrf.mxu0
          %1080 = vdwg.mxu0
          %1081 = vmatprep.subr.bf16.mxu0 %v511
          %1082 = vmatpush1.bf16.msra.mxu0 %v510
          %1083 = vmatprep.subr.bf16.mxu0 %v507
          %1084 = vmatpush1.bf16.msra.mxu0 %v506
          %1085 = vmatprep.subr.bf16.mxu0 %v503
          %1086 = vmatpush1.bf16.msra.mxu0 %v502
          %1087 = vmatprep.subr.bf16.mxu0 %v499
          %1088 = vmatpush1.bf16.msra.mxu0 %v498
          %1089 = vmatprep.subr.bf16.mxu0 %v495
          %1090 = vmatpush1.bf16.msra.mxu0 %v494
          %1091 = vmatprep.subr.bf16.mxu0 %v491
          %1092 = vmatpush1.bf16.msra.mxu0 %v490
          %1093 = vmatprep.subr.bf16.mxu0 %v487
          %1094 = vmatpush1.bf16.msra.mxu0 %v486
          %1095 = vmatprep.subr.bf16.mxu0 %v483
          %1096 = vmatpush1.bf16.msra.mxu0 %v482
          %1097 = vmatprep.subr.bf16.mxu0 0
          %1098 = vmatpush2.bf16.msra.mxu0 0
          %1099 = vmatprep.subr.bf16.mxu0 0
          %1100 = vmatpush2.bf16.msra.mxu0 0
          %1101 = vmatprep.subr.bf16.mxu0 0
          %1102 = vmatpush2.bf16.msra.mxu0 0
          %1103 = vmatprep.subr.bf16.mxu0 0
          %1104 = vmatpush2.bf16.msra.mxu0 0
          %1105 = vmatprep.subr.bf16.mxu0 0
          %1106 = vmatpush2.bf16.msra.mxu0 0
          %1107 = vmatprep.subr.bf16.mxu0 0
          %1108 = vmatpush2.bf16.msra.mxu0 0
          %1109 = vmatprep.subr.bf16.mxu0 0
          %1110 = vmatpush2.bf16.msra.mxu0 0
          %1111 = vmatprep.subr.bf16.mxu0 0
          %1112 = vmatpush2.bf16.msra.mxu0 0
          %1113 = vmatprep.mubr.bf16.mxu0 0
          %1114 = vmatmul.mubr.bf16.gmra.mxu0 %v1039
          %v1115 = vpop.f32.mrf.mxu0
          %v1116 = vadd.f32 0.0, %v1115
          %v1117 = vpop.f32.mrf.mxu0
          %v1118 = vadd.f32 0.0, %v1117
          %v1119 = vpop.f32.mrf.mxu0
          %v1120 = vpop.f32.mrf.mxu0
          %1121 = vdwg.mxu0
          %v1122 = vadd.f32 %v1035, %v1075
          %v1123 = vadd.f32 %v1036, %v1077
          %v1124 = vadd.f32 %v1037, %v1116
          %v1125 = vadd.f32 %v1038, %v1118
          %v1126 = vxor.u32 %v1122, 2147483648
          %v1127 = vmul.f32 %v1126, 1.442695
          %v1128 = vpow.pop %v1127
          %v1129 = vadd.f32 %v1128, 1.0
          %v1130 = vrcp.pop %v1129
          %v1131 = vmul.f32 1.0, %v1130
          %v1132 = vxor.u32 %v1123, 2147483648
          %v1133 = vmul.f32 %v1132, 1.442695
          %v1134 = vpow.pop %v1133
          %v1135 = vadd.f32 %v1134, 1.0
          %v1136 = vrcp.pop %v1135
          %v1137 = vmul.f32 1.0, %v1136
          %v1138 = vtanh.pop %v1124
          %v1139 = vxor.u32 %v1125, 2147483648
          %v1140 = vmul.f32 %v1139, 1.442695
          %v1141 = vpow.pop %v1140
          %v1142 = vadd.f32 %v1141, 1.0
          %v1143 = vrcp.pop %v1142
          %v1144 = vmul.f32 1.0, %v1143
          %v1145 = vmul.f32 %v1137, %v1023
          %v1146 = vmul.f32 %v1131, %v1138
          %v1147 = vadd.f32 %v1145, %v1146
          %v1148 = vtanh.pop %v1147
          %v1149 = vmul.f32 %v1144, %v1148
          %v1150 = vrot.slane %v1149, 4
          %v1151 = vadd.f32 %v1149, %v1150
          %v1152 = vrot.slane %v1151, 2
          %v1153 = vadd.f32 %v1151, %v1152
          %v1154 = vrot.slane %v1153, 1
          %v1155 = vadd.f32 %v1153, %v1154
          %s1156 = scalar_lea.vmem %s165, 96 [#allocation6]
          %v1157 = vld [vmem:[%s1156] sm:$0xff]
          %v1158 = vld [vmem:[%s1156 + $0x8] sm:$0xff]
          %v1159 = vunpack.c.l.bf16 %v1157
          %v1160 = vunpack.c.h.bf16 %v1157
          %v1161 = vunpack.c.l.bf16 %v1158
          %v1162 = vunpack.c.h.bf16 %v1158
          %v1163 = vpack.c.bf16 %v1149, %v1149
          %1164 = vmatprep.subr.bf16.mxu0 %v509
          %1165 = vmatpush1.bf16.msra.mxu0 %v508
          %1166 = vmatprep.subr.bf16.mxu0 %v505
          %1167 = vmatpush1.bf16.msra.mxu0 %v504
          %1168 = vmatprep.subr.bf16.mxu0 %v501
          %1169 = vmatpush1.bf16.msra.mxu0 %v500
          %1170 = vmatprep.subr.bf16.mxu0 %v497
          %1171 = vmatpush1.bf16.msra.mxu0 %v496
          %1172 = vmatprep.subr.bf16.mxu0 %v493
          %1173 = vmatpush1.bf16.msra.mxu0 %v492
          %1174 = vmatprep.subr.bf16.mxu0 %v489
          %1175 = vmatpush1.bf16.msra.mxu0 %v488
          %1176 = vmatprep.subr.bf16.mxu0 %v485
          %1177 = vmatpush1.bf16.msra.mxu0 %v484
          %1178 = vmatprep.subr.bf16.mxu0 %v481
          %1179 = vmatpush1.bf16.msra.mxu0 %v480
          %1180 = vmatprep.subr.bf16.mxu0 0
          %1181 = vmatpush2.bf16.msra.mxu0 0
          %1182 = vmatprep.subr.bf16.mxu0 0
          %1183 = vmatpush2.bf16.msra.mxu0 0
          %1184 = vmatprep.subr.bf16.mxu0 0
          %1185 = vmatpush2.bf16.msra.mxu0 0
          %1186 = vmatprep.subr.bf16.mxu0 0
          %1187 = vmatpush2.bf16.msra.mxu0 0
          %1188 = vmatprep.subr.bf16.mxu0 0
          %1189 = vmatpush2.bf16.msra.mxu0 0
          %1190 = vmatprep.subr.bf16.mxu0 0
          %1191 = vmatpush2.bf16.msra.mxu0 0
          %1192 = vmatprep.subr.bf16.mxu0 0
          %1193 = vmatpush2.bf16.msra.mxu0 0
          %1194 = vmatprep.subr.bf16.mxu0 0
          %1195 = vmatpush2.bf16.msra.mxu0 0
          %1196 = vmatprep.mubr.bf16.mxu0 0
          %1197 = vmatmul.mubr.bf16.gmra.mxu0 %v1163
          %v1198 = vpop.f32.mrf.mxu0
          %v1199 = vadd.f32 0.0, %v1198
          %v1200 = vpop.f32.mrf.mxu0
          %v1201 = vadd.f32 0.0, %v1200
          %v1202 = vpop.f32.mrf.mxu0
          %v1203 = vpop.f32.mrf.mxu0
          %1204 = vdwg.mxu0
          %1205 = vmatprep.subr.bf16.mxu0 %v511
          %1206 = vmatpush1.bf16.msra.mxu0 %v510
          %1207 = vmatprep.subr.bf16.mxu0 %v507
          %1208 = vmatpush1.bf16.msra.mxu0 %v506
          %1209 = vmatprep.subr.bf16.mxu0 %v503
          %1210 = vmatpush1.bf16.msra.mxu0 %v502
          %1211 = vmatprep.subr.bf16.mxu0 %v499
          %1212 = vmatpush1.bf16.msra.mxu0 %v498
          %1213 = vmatprep.subr.bf16.mxu0 %v495
          %1214 = vmatpush1.bf16.msra.mxu0 %v494
          %1215 = vmatprep.subr.bf16.mxu0 %v491
          %1216 = vmatpush1.bf16.msra.mxu0 %v490
          %1217 = vmatprep.subr.bf16.mxu0 %v487
          %1218 = vmatpush1.bf16.msra.mxu0 %v486
          %1219 = vmatprep.subr.bf16.mxu0 %v483
          %1220 = vmatpush1.bf16.msra.mxu0 %v482
          %1221 = vmatprep.subr.bf16.mxu0 0
          %1222 = vmatpush2.bf16.msra.mxu0 0
          %1223 = vmatprep.subr.bf16.mxu0 0
          %1224 = vmatpush2.bf16.msra.mxu0 0
          %1225 = vmatprep.subr.bf16.mxu0 0
          %1226 = vmatpush2.bf16.msra.mxu0 0
          %1227 = vmatprep.subr.bf16.mxu0 0
          %1228 = vmatpush2.bf16.msra.mxu0 0
          %1229 = vmatprep.subr.bf16.mxu0 0
          %1230 = vmatpush2.bf16.msra.mxu0 0
          %1231 = vmatprep.subr.bf16.mxu0 0
          %1232 = vmatpush2.bf16.msra.mxu0 0
          %1233 = vmatprep.subr.bf16.mxu0 0
          %1234 = vmatpush2.bf16.msra.mxu0 0
          %1235 = vmatprep.subr.bf16.mxu0 0
          %1236 = vmatpush2.bf16.msra.mxu0 0
          %1237 = vmatprep.mubr.bf16.mxu0 0
          %1238 = vmatmul.mubr.bf16.gmra.mxu0 %v1163
          %v1239 = vpop.f32.mrf.mxu0
          %v1240 = vadd.f32 0.0, %v1239
          %v1241 = vpop.f32.mrf.mxu0
          %v1242 = vadd.f32 0.0, %v1241
          %v1243 = vpop.f32.mrf.mxu0
          %v1244 = vpop.f32.mrf.mxu0
          %1245 = vdwg.mxu0
          %v1246 = vadd.f32 %v1159, %v1199
          %v1247 = vadd.f32 %v1160, %v1201
          %v1248 = vadd.f32 %v1161, %v1240
          %v1249 = vadd.f32 %v1162, %v1242
          %v1250 = vxor.u32 %v1246, 2147483648
          %v1251 = vmul.f32 %v1250, 1.442695
          %v1252 = vpow.pop %v1251
          %v1253 = vadd.f32 %v1252, 1.0
          %v1254 = vrcp.pop %v1253
          %v1255 = vmul.f32 1.0, %v1254
          %v1256 = vxor.u32 %v1247, 2147483648
          %v1257 = vmul.f32 %v1256, 1.442695
          %v1258 = vpow.pop %v1257
          %v1259 = vadd.f32 %v1258, 1.0
          %v1260 = vrcp.pop %v1259
          %v1261 = vmul.f32 1.0, %v1260
          %v1262 = vtanh.pop %v1248
          %v1263 = vxor.u32 %v1249, 2147483648
          %v1264 = vmul.f32 %v1263, 1.442695
          %v1265 = vpow.pop %v1264
          %v1266 = vadd.f32 %v1265, 1.0
          %v1267 = vrcp.pop %v1266
          %v1268 = vmul.f32 1.0, %v1267
          %v1269 = vmul.f32 %v1261, %v1147
          %v1270 = vmul.f32 %v1255, %v1262
          %v1271 = vadd.f32 %v1269, %v1270
          %v1272 = vtanh.pop %v1271
          %v1273 = vmul.f32 %v1268, %v1272
          %v1274 = vrot.slane %v1273, 4
          %v1275 = vadd.f32 %v1273, %v1274
          %v1276 = vrot.slane %v1275, 2
          %v1277 = vadd.f32 %v1275, %v1276
          %v1278 = vrot.slane %v1277, 1
          %v1279 = vadd.f32 %v1277, %v1278
          %s1280 = scalar_lea.vmem %s165, 112 [#allocation6]
          %v1281 = vld [vmem:[%s1280] sm:$0xff]
          %v1282 = vld [vmem:[%s1280 + $0x8] sm:$0xff]
          %v1283 = vunpack.c.l.bf16 %v1281
          %v1284 = vunpack.c.h.bf16 %v1281
          %v1285 = vunpack.c.l.bf16 %v1282
          %v1286 = vunpack.c.h.bf16 %v1282
          %v1287 = vpack.c.bf16 %v1273, %v1273
          %1288 = vmatprep.subr.bf16.mxu0 %v509
          %1289 = vmatpush1.bf16.msra.mxu0 %v508
          %1290 = vmatprep.subr.bf16.mxu0 %v505
          %1291 = vmatpush1.bf16.msra.mxu0 %v504
          %1292 = vmatprep.subr.bf16.mxu0 %v501
          %1293 = vmatpush1.bf16.msra.mxu0 %v500
          %1294 = vmatprep.subr.bf16.mxu0 %v497
          %1295 = vmatpush1.bf16.msra.mxu0 %v496
          %1296 = vmatprep.subr.bf16.mxu0 %v493
          %1297 = vmatpush1.bf16.msra.mxu0 %v492
          %1298 = vmatprep.subr.bf16.mxu0 %v489
          %1299 = vmatpush1.bf16.msra.mxu0 %v488
          %1300 = vmatprep.subr.bf16.mxu0 %v485
          %1301 = vmatpush1.bf16.msra.mxu0 %v484
          %1302 = vmatprep.subr.bf16.mxu0 %v481
          %1303 = vmatpush1.bf16.msra.mxu0 %v480
          %1304 = vmatprep.subr.bf16.mxu0 0
          %1305 = vmatpush2.bf16.msra.mxu0 0
          %1306 = vmatprep.subr.bf16.mxu0 0
          %1307 = vmatpush2.bf16.msra.mxu0 0
          %1308 = vmatprep.subr.bf16.mxu0 0
          %1309 = vmatpush2.bf16.msra.mxu0 0
          %1310 = vmatprep.subr.bf16.mxu0 0
          %1311 = vmatpush2.bf16.msra.mxu0 0
          %1312 = vmatprep.subr.bf16.mxu0 0
          %1313 = vmatpush2.bf16.msra.mxu0 0
          %1314 = vmatprep.subr.bf16.mxu0 0
          %1315 = vmatpush2.bf16.msra.mxu0 0
          %1316 = vmatprep.subr.bf16.mxu0 0
          %1317 = vmatpush2.bf16.msra.mxu0 0
          %1318 = vmatprep.subr.bf16.mxu0 0
          %1319 = vmatpush2.bf16.msra.mxu0 0
          %1320 = vmatprep.mubr.bf16.mxu0 0
          %1321 = vmatmul.mubr.bf16.gmra.mxu0 %v1287
          %v1322 = vpop.f32.mrf.mxu0
          %v1323 = vadd.f32 0.0, %v1322
          %v1324 = vpop.f32.mrf.mxu0
          %v1325 = vadd.f32 0.0, %v1324
          %v1326 = vpop.f32.mrf.mxu0
          %v1327 = vpop.f32.mrf.mxu0
          %1328 = vdwg.mxu0
          %1329 = vmatprep.subr.bf16.mxu0 %v511
          %1330 = vmatpush1.bf16.msra.mxu0 %v510
          %1331 = vmatprep.subr.bf16.mxu0 %v507
          %1332 = vmatpush1.bf16.msra.mxu0 %v506
          %1333 = vmatprep.subr.bf16.mxu0 %v503
          %1334 = vmatpush1.bf16.msra.mxu0 %v502
          %1335 = vmatprep.subr.bf16.mxu0 %v499
          %1336 = vmatpush1.bf16.msra.mxu0 %v498
          %1337 = vmatprep.subr.bf16.mxu0 %v495
          %1338 = vmatpush1.bf16.msra.mxu0 %v494
          %1339 = vmatprep.subr.bf16.mxu0 %v491
          %1340 = vmatpush1.bf16.msra.mxu0 %v490
          %1341 = vmatprep.subr.bf16.mxu0 %v487
          %1342 = vmatpush1.bf16.msra.mxu0 %v486
          %1343 = vmatprep.subr.bf16.mxu0 %v483
          %1344 = vmatpush1.bf16.msra.mxu0 %v482
          %1345 = vmatprep.subr.bf16.mxu0 0
          %1346 = vmatpush2.bf16.msra.mxu0 0
          %1347 = vmatprep.subr.bf16.mxu0 0
          %1348 = vmatpush2.bf16.msra.mxu0 0
          %1349 = vmatprep.subr.bf16.mxu0 0
          %1350 = vmatpush2.bf16.msra.mxu0 0
          %1351 = vmatprep.subr.bf16.mxu0 0
          %1352 = vmatpush2.bf16.msra.mxu0 0
          %1353 = vmatprep.subr.bf16.mxu0 0
          %1354 = vmatpush2.bf16.msra.mxu0 0
          %1355 = vmatprep.subr.bf16.mxu0 0
          %1356 = vmatpush2.bf16.msra.mxu0 0
          %1357 = vmatprep.subr.bf16.mxu0 0
          %1358 = vmatpush2.bf16.msra.mxu0 0
          %1359 = vmatprep.subr.bf16.mxu0 0
          %1360 = vmatpush2.bf16.msra.mxu0 0
          %1361 = vmatprep.mubr.bf16.mxu0 0
          %1362 = vmatmul.mubr.bf16.gmra.mxu0 %v1287
          %v1363 = vpop.f32.mrf.mxu0
          %v1364 = vadd.f32 0.0, %v1363
          %v1365 = vpop.f32.mrf.mxu0
          %v1366 = vadd.f32 0.0, %v1365
          %v1367 = vpop.f32.mrf.mxu0
          %v1368 = vpop.f32.mrf.mxu0
          %1369 = vdwg.mxu0
          %v1370 = vadd.f32 %v1283, %v1323
          %v1371 = vadd.f32 %v1284, %v1325
          %v1372 = vadd.f32 %v1285, %v1364
          %v1373 = vadd.f32 %v1286, %v1366
          %v1374 = vxor.u32 %v1370, 2147483648
          %v1375 = vmul.f32 %v1374, 1.442695
          %v1376 = vpow.pop %v1375
          %v1377 = vadd.f32 %v1376, 1.0
          %v1378 = vrcp.pop %v1377
          %v1379 = vmul.f32 1.0, %v1378
          %v1380 = vxor.u32 %v1371, 2147483648
          %v1381 = vmul.f32 %v1380, 1.442695
          %v1382 = vpow.pop %v1381
          %v1383 = vadd.f32 %v1382, 1.0
          %v1384 = vrcp.pop %v1383
          %v1385 = vmul.f32 1.0, %v1384
          %v1386 = vtanh.pop %v1372
          %v1387 = vxor.u32 %v1373, 2147483648
          %v1388 = vmul.f32 %v1387, 1.442695
          %v1389 = vpow.pop %v1388
          %v1390 = vadd.f32 %v1389, 1.0
          %v1391 = vrcp.pop %v1390
          %v1392 = vmul.f32 1.0, %v1391
          %v1393 = vmul.f32 %v1385, %v1271
          %v1394 = vmul.f32 %v1379, %v1386
          %v1395 = vadd.f32 %v1393, %v1394
          %v1396 = vtanh.pop %v1395
          %v1397 = vmul.f32 %v1392, %v1396
          %v1398 = vrot.slane %v1397, 4
          %v1399 = vadd.f32 %v1397, %v1398
          %v1400 = vrot.slane %v1399, 2
          %v1401 = vadd.f32 %v1399, %v1400
          %v1402 = vrot.slane %v1401, 1
          %v1403 = vadd.f32 %v1401, %v1402
          %1404 = vst [vmem:[#allocation2] sm:$0xff] %v1397
          %1405 = vst [vmem:[#allocation3] sm:$0xff] %v1395
          %vm1406 = vcmask 1040384
          %v1407 = vsel %vm1406, %v339, %v659
          %vm1408 = vcmask 1041408
          %v1409 = vsel %vm1408, %v1407, %v783
          %vm1410 = vcmask 1042432
          %v1411 = vsel %vm1410, %v1409, %v907
          %vm1412 = vcmask 1043456
          %v1413 = vsel %vm1412, %v1411, %v1031
          %vm1414 = vcmask 1044480
          %v1415 = vsel %vm1414, %v1413, %v1155
          %vm1416 = vcmask 1045504
          %v1417 = vsel %vm1416, %v1415, %v1279
          %vm1418 = vcmask 1046528
          %v1419 = vsel %vm1418, %v1417, %v1403
          %1420 = vst [vmem:[%s193] sm:$0xff] %v1419
        $region51: #{deepfake_detector_forward.3} parent=42 // pred_fallthru
          _
        %p1421 = scmp.ne.s32.totalorder %s18, 0
        // Predicated region
        $region86: #{deepfake_detector_forward.3} parent=42 // pred_check
          %p1422 = pneg %p1421
        $region87: #{deepfake_detector_forward.3} parent=42 // pred_check_branch
          %1424 = sbr.rel (%p1422) target = $region89
        $region88: #{deepfake_detector_forward.3} parent=42 // pred_region
          %v1425 = vld [vmem:[#allocation2] sm:$0xff]
          %v1426 = vld [vmem:[#allocation3] sm:$0xff]
          %v1427 = vld [vmem:[%s165] sm:$0xff]
          %v1428 = vld [vmem:[%s165 + $0x8] sm:$0xff]
          %v1429 = vunpack.c.l.bf16 %v1427
          %v1430 = vunpack.c.h.bf16 %v1427
          %v1431 = vunpack.c.l.bf16 %v1428
          %v1432 = vunpack.c.h.bf16 %v1428
          %v1433 = vpack.c.bf16 %v1425, %v1425
          %v1434 = vld [vmem:[#allocation4] sm:$0xff]
          %v1435 = vld [vmem:[#allocation4 + $0x8] sm:$0xff]
          %v1436 = vld [vmem:[#allocation4 + $0x10] sm:$0xff]
          %v1437 = vld [vmem:[#allocation4 + $0x18] sm:$0xff]
          %v1438 = vld [vmem:[#allocation4 + $0x20] sm:$0xff]
          %v1439 = vld [vmem:[#allocation4 + $0x28] sm:$0xff]
          %v1440 = vld [vmem:[#allocation4 + $0x30] sm:$0xff]
          %v1441 = vld [vmem:[#allocation4 + $0x38] sm:$0xff]
          %v1442 = vld [vmem:[#allocation4 + $0x40] sm:$0xff]
          %v1443 = vld [vmem:[#allocation4 + $0x48] sm:$0xff]
          %v1444 = vld [vmem:[#allocation4 + $0x50] sm:$0xff]
          %v1445 = vld [vmem:[#allocation4 + $0x58] sm:$0xff]
          %v1446 = vld [vmem:[#allocation4 + $0x60] sm:$0xff]
          %v1447 = vld [vmem:[#allocation4 + $0x68] sm:$0xff]
          %v1448 = vld [vmem:[#allocation4 + $0x70] sm:$0xff]
          %v1449 = vld [vmem:[#allocation4 + $0x78] sm:$0xff]
          %v1450 = vld [vmem:[#allocation4 + $0x80] sm:$0xff]
          %v1451 = vld [vmem:[#allocation4 + $0x88] sm:$0xff]
          %v1452 = vld [vmem:[#allocation4 + $0x90] sm:$0xff]
          %v1453 = vld [vmem:[#allocation4 + $0x98] sm:$0xff]
          %v1454 = vld [vmem:[#allocation4 + $0xa0] sm:$0xff]
          %v1455 = vld [vmem:[#allocation4 + $0xa8] sm:$0xff]
          %v1456 = vld [vmem:[#allocation4 + $0xb0] sm:$0xff]
          %v1457 = vld [vmem:[#allocation4 + $0xb8] sm:$0xff]
          %v1458 = vld [vmem:[#allocation4 + $0xc0] sm:$0xff]
          %v1459 = vld [vmem:[#allocation4 + $0xc8] sm:$0xff]
          %v1460 = vld [vmem:[#allocation4 + $0xd0] sm:$0xff]
          %v1461 = vld [vmem:[#allocation4 + $0xd8] sm:$0xff]
          %v1462 = vld [vmem:[#allocation4 + $0xe0] sm:$0xff]
          %v1463 = vld [vmem:[#allocation4 + $0xe8] sm:$0xff]
          %v1464 = vld [vmem:[#allocation4 + $0xf0] sm:$0xff]
          %v1465 = vld [vmem:[#allocation4 + $0xf8] sm:$0xff]
          %v1498 = vunpack.c.l.b16 %v1434
          %v1499 = vunpack.c.h.b16 %v1434
          %v1500 = vunpack.c.l.b16 %v1435
          %v1501 = vunpack.c.h.b16 %v1435
          %v1502 = vunpack.c.l.b16 %v1436
          %v1503 = vunpack.c.h.b16 %v1436
          %v1504 = vunpack.c.l.b16 %v1437
          %v1505 = vunpack.c.h.b16 %v1437
          %v1506 = vunpack.c.l.b16 %v1438
          %v1507 = vunpack.c.h.b16 %v1438
          %v1508 = vunpack.c.l.b16 %v1439
          %v1509 = vunpack.c.h.b16 %v1439
          %v1510 = vunpack.c.l.b16 %v1440
          %v1511 = vunpack.c.h.b16 %v1440
          %v1512 = vunpack.c.l.b16 %v1441
          %v1513 = vunpack.c.h.b16 %v1441
          %v1514 = vunpack.c.l.b16 %v1442
          %v1515 = vunpack.c.h.b16 %v1442
          %v1516 = vunpack.c.l.b16 %v1443
          %v1517 = vunpack.c.h.b16 %v1443
          %v1518 = vunpack.c.l.b16 %v1444
          %v1519 = vunpack.c.h.b16 %v1444
          %v1520 = vunpack.c.l.b16 %v1445
          %v1521 = vunpack.c.h.b16 %v1445
          %v1522 = vunpack.c.l.b16 %v1446
          %v1523 = vunpack.c.h.b16 %v1446
          %v1524 = vunpack.c.l.b16 %v1447
          %v1525 = vunpack.c.h.b16 %v1447
          %v1526 = vunpack.c.l.b16 %v1448
          %v1527 = vunpack.c.h.b16 %v1448
          %v1528 = vunpack.c.l.b16 %v1449
          %v1529 = vunpack.c.h.b16 %v1449
          %v1530 = vunpack.c.l.b16 %v1450
          %v1531 = vunpack.c.h.b16 %v1450
          %v1532 = vunpack.c.l.b16 %v1451
          %v1533 = vunpack.c.h.b16 %v1451
          %v1534 = vunpack.c.l.b16 %v1452
          %v1535 = vunpack.c.h.b16 %v1452
          %v1536 = vunpack.c.l.b16 %v1453
          %v1537 = vunpack.c.h.b16 %v1453
          %v1538 = vunpack.c.l.b16 %v1454
          %v1539 = vunpack.c.h.b16 %v1454
          %v1540 = vunpack.c.l.b16 %v1455
          %v1541 = vunpack.c.h.b16 %v1455
          %v1542 = vunpack.c.l.b16 %v1456
          %v1543 = vunpack.c.h.b16 %v1456
          %v1544 = vunpack.c.l.b16 %v1457
          %v1545 = vunpack.c.h.b16 %v1457
          %v1546 = vunpack.c.l.b16 %v1458
          %v1547 = vunpack.c.h.b16 %v1458
          %v1548 = vunpack.c.l.b16 %v1459
          %v1549 = vunpack.c.h.b16 %v1459
          %v1550 = vunpack.c.l.b16 %v1460
          %v1551 = vunpack.c.h.b16 %v1460
          %v1552 = vunpack.c.l.b16 %v1461
          %v1553 = vunpack.c.h.b16 %v1461
          %v1554 = vunpack.c.l.b16 %v1462
          %v1555 = vunpack.c.h.b16 %v1462
          %v1556 = vunpack.c.l.b16 %v1463
          %v1557 = vunpack.c.h.b16 %v1463
          %v1558 = vunpack.c.l.b16 %v1464
          %v1559 = vunpack.c.h.b16 %v1464
          %v1560 = vunpack.c.l.b16 %v1465
          %v1561 = vunpack.c.h.b16 %v1465
          %v1562 = vpack.c.b16 %v1502, %v1498
          %v1563 = vpack.c.b16 %v1503, %v1499
          %v1564 = vpack.c.b16 %v1504, %v1500
          %v1565 = vpack.c.b16 %v1505, %v1501
          %v1566 = vpack.c.b16 %v1510, %v1506
          %v1567 = vpack.c.b16 %v1511, %v1507
          %v1568 = vpack.c.b16 %v1512, %v1508
          %v1569 = vpack.c.b16 %v1513, %v1509
          %v1570 = vpack.c.b16 %v1518, %v1514
          %v1571 = vpack.c.b16 %v1519, %v1515
          %v1572 = vpack.c.b16 %v1520, %v1516
          %v1573 = vpack.c.b16 %v1521, %v1517
          %v1574 = vpack.c.b16 %v1526, %v1522
          %v1575 = vpack.c.b16 %v1527, %v1523
          %v1576 = vpack.c.b16 %v1528, %v1524
          %v1577 = vpack.c.b16 %v1529, %v1525
          %v1578 = vpack.c.b16 %v1534, %v1530
          %v1579 = vpack.c.b16 %v1535, %v1531
          %v1580 = vpack.c.b16 %v1536, %v1532
          %v1581 = vpack.c.b16 %v1537, %v1533
          %v1582 = vpack.c.b16 %v1542, %v1538
          %v1583 = vpack.c.b16 %v1543, %v1539
          %v1584 = vpack.c.b16 %v1544, %v1540
          %v1585 = vpack.c.b16 %v1545, %v1541
          %v1586 = vpack.c.b16 %v1550, %v1546
          %v1587 = vpack.c.b16 %v1551, %v1547
          %v1588 = vpack.c.b16 %v1552, %v1548
          %v1589 = vpack.c.b16 %v1553, %v1549
          %v1590 = vpack.c.b16 %v1558, %v1554
          %v1591 = vpack.c.b16 %v1559, %v1555
          %v1592 = vpack.c.b16 %v1560, %v1556
          %v1593 = vpack.c.b16 %v1561, %v1557
          %1626 = vmatprep.subr.bf16.mxu0 %v1591
          %1627 = vmatpush1.bf16.msra.mxu0 %v1590
          %1628 = vmatprep.subr.bf16.mxu0 %v1587
          %1629 = vmatpush1.bf16.msra.mxu0 %v1586
          %1630 = vmatprep.subr.bf16.mxu0 %v1583
          %1631 = vmatpush1.bf16.msra.mxu0 %v1582
          %1632 = vmatprep.subr.bf16.mxu0 %v1579
          %1633 = vmatpush1.bf16.msra.mxu0 %v1578
          %1634 = vmatprep.subr.bf16.mxu0 %v1575
          %1635 = vmatpush1.bf16.msra.mxu0 %v1574
          %1636 = vmatprep.subr.bf16.mxu0 %v1571
          %1637 = vmatpush1.bf16.msra.mxu0 %v1570
          %1638 = vmatprep.subr.bf16.mxu0 %v1567
          %1639 = vmatpush1.bf16.msra.mxu0 %v1566
          %1640 = vmatprep.subr.bf16.mxu0 %v1563
          %1641 = vmatpush1.bf16.msra.mxu0 %v1562
          %1642 = vmatprep.subr.bf16.mxu0 0
          %1643 = vmatpush2.bf16.msra.mxu0 0
          %1644 = vmatprep.subr.bf16.mxu0 0
          %1645 = vmatpush2.bf16.msra.mxu0 0
          %1646 = vmatprep.subr.bf16.mxu0 0
          %1647 = vmatpush2.bf16.msra.mxu0 0
          %1648 = vmatprep.subr.bf16.mxu0 0
          %1649 = vmatpush2.bf16.msra.mxu0 0
          %1650 = vmatprep.subr.bf16.mxu0 0
          %1651 = vmatpush2.bf16.msra.mxu0 0
          %1652 = vmatprep.subr.bf16.mxu0 0
          %1653 = vmatpush2.bf16.msra.mxu0 0
          %1654 = vmatprep.subr.bf16.mxu0 0
          %1655 = vmatpush2.bf16.msra.mxu0 0
          %1656 = vmatprep.subr.bf16.mxu0 0
          %1657 = vmatpush2.bf16.msra.mxu0 0
          %1658 = vmatprep.mubr.bf16.mxu0 0
          %1659 = vmatmul.mubr.bf16.gmra.mxu0 %v1433
          %v1660 = vpop.f32.mrf.mxu0
          %v1661 = vadd.f32 0.0, %v1660
          %v1662 = vpop.f32.mrf.mxu0
          %v1663 = vadd.f32 0.0, %v1662
          %v1664 = vpop.f32.mrf.mxu0
          %v1665 = vpop.f32.mrf.mxu0
          %1666 = vdwg.mxu0
          %1667 = vmatprep.subr.bf16.mxu0 %v1593
          %1668 = vmatpush1.bf16.msra.mxu0 %v1592
          %1669 = vmatprep.subr.bf16.mxu0 %v1589
          %1670 = vmatpush1.bf16.msra.mxu0 %v1588
          %1671 = vmatprep.subr.bf16.mxu0 %v1585
          %1672 = vmatpush1.bf16.msra.mxu0 %v1584
          %1673 = vmatprep.subr.bf16.mxu0 %v1581
          %1674 = vmatpush1.bf16.msra.mxu0 %v1580
          %1675 = vmatprep.subr.bf16.mxu0 %v1577
          %1676 = vmatpush1.bf16.msra.mxu0 %v1576
          %1677 = vmatprep.subr.bf16.mxu0 %v1573
          %1678 = vmatpush1.bf16.msra.mxu0 %v1572
          %1679 = vmatprep.subr.bf16.mxu0 %v1569
          %1680 = vmatpush1.bf16.msra.mxu0 %v1568
          %1681 = vmatprep.subr.bf16.mxu0 %v1565
          %1682 = vmatpush1.bf16.msra.mxu0 %v1564
          %1683 = vmatprep.subr.bf16.mxu0 0
          %1684 = vmatpush2.bf16.msra.mxu0 0
          %1685 = vmatprep.subr.bf16.mxu0 0
          %1686 = vmatpush2.bf16.msra.mxu0 0
          %1687 = vmatprep.subr.bf16.mxu0 0
          %1688 = vmatpush2.bf16.msra.mxu0 0
          %1689 = vmatprep.subr.bf16.mxu0 0
          %1690 = vmatpush2.bf16.msra.mxu0 0
          %1691 = vmatprep.subr.bf16.mxu0 0
          %1692 = vmatpush2.bf16.msra.mxu0 0
          %1693 = vmatprep.subr.bf16.mxu0 0
          %1694 = vmatpush2.bf16.msra.mxu0 0
          %1695 = vmatprep.subr.bf16.mxu0 0
          %1696 = vmatpush2.bf16.msra.mxu0 0
          %1697 = vmatprep.subr.bf16.mxu0 0
          %1698 = vmatpush2.bf16.msra.mxu0 0
          %1699 = vmatprep.mubr.bf16.mxu0 0
          %1700 = vmatmul.mubr.bf16.gmra.mxu0 %v1433
          %v1701 = vpop.f32.mrf.mxu0
          %v1702 = vadd.f32 0.0, %v1701
          %v1703 = vpop.f32.mrf.mxu0
          %v1704 = vadd.f32 0.0, %v1703
          %v1705 = vpop.f32.mrf.mxu0
          %v1706 = vpop.f32.mrf.mxu0
          %1707 = vdwg.mxu0
          %v1708 = vadd.f32 %v1429, %v1661
          %v1709 = vadd.f32 %v1430, %v1663
          %v1710 = vadd.f32 %v1431, %v1702
          %v1711 = vadd.f32 %v1432, %v1704
          %v1712 = vxor.u32 %v1708, 2147483648
          %v1713 = vmul.f32 %v1712, 1.442695
          %v1714 = vpow.pop %v1713
          %v1715 = vadd.f32 %v1714, 1.0
          %v1716 = vrcp.pop %v1715
          %v1717 = vmul.f32 1.0, %v1716
          %v1718 = vxor.u32 %v1709, 2147483648
          %v1719 = vmul.f32 %v1718, 1.442695
          %v1720 = vpow.pop %v1719
          %v1721 = vadd.f32 %v1720, 1.0
          %v1722 = vrcp.pop %v1721
          %v1723 = vmul.f32 1.0, %v1722
          %v1724 = vtanh.pop %v1710
          %v1725 = vxor.u32 %v1711, 2147483648
          %v1726 = vmul.f32 %v1725, 1.442695
          %v1727 = vpow.pop %v1726
          %v1728 = vadd.f32 %v1727, 1.0
          %v1729 = vrcp.pop %v1728
          %v1730 = vmul.f32 1.0, %v1729
          %v1731 = vmul.f32 %v1723, %v1426
          %v1732 = vmul.f32 %v1717, %v1724
          %v1733 = vadd.f32 %v1731, %v1732
          %v1734 = vtanh.pop %v1733
          %v1735 = vmul.f32 %v1730, %v1734
          %v1736 = vrot.slane %v1735, 4
          %v1737 = vadd.f32 %v1735, %v1736
          %v1738 = vrot.slane %v1737, 2
          %v1739 = vadd.f32 %v1737, %v1738
          %v1740 = vrot.slane %v1739, 1
          %v1741 = vadd.f32 %v1739, %v1740
          %s1742 = scalar_lea.vmem %s165, 16 [#allocation6]
          %v1743 = vld [vmem:[%s1742] sm:$0xff]
          %v1744 = vld [vmem:[%s1742 + $0x8] sm:$0xff]
          %v1745 = vunpack.c.l.bf16 %v1743
          %v1746 = vunpack.c.h.bf16 %v1743
          %v1747 = vunpack.c.l.bf16 %v1744
          %v1748 = vunpack.c.h.bf16 %v1744
          %v1749 = vpack.c.bf16 %v1735, %v1735
          %1750 = vmatprep.subr.bf16.mxu0 %v1591
          %1751 = vmatpush1.bf16.msra.mxu0 %v1590
          %1752 = vmatprep.subr.bf16.mxu0 %v1587
          %1753 = vmatpush1.bf16.msra.mxu0 %v1586
          %1754 = vmatprep.subr.bf16.mxu0 %v1583
          %1755 = vmatpush1.bf16.msra.mxu0 %v1582
          %1756 = vmatprep.subr.bf16.mxu0 %v1579
          %1757 = vmatpush1.bf16.msra.mxu0 %v1578
          %1758 = vmatprep.subr.bf16.mxu0 %v1575
          %1759 = vmatpush1.bf16.msra.mxu0 %v1574
          %1760 = vmatprep.subr.bf16.mxu0 %v1571
          %1761 = vmatpush1.bf16.msra.mxu0 %v1570
          %1762 = vmatprep.subr.bf16.mxu0 %v1567
          %1763 = vmatpush1.bf16.msra.mxu0 %v1566
          %1764 = vmatprep.subr.bf16.mxu0 %v1563
          %1765 = vmatpush1.bf16.msra.mxu0 %v1562
          %1766 = vmatprep.subr.bf16.mxu0 0
          %1767 = vmatpush2.bf16.msra.mxu0 0
          %1768 = vmatprep.subr.bf16.mxu0 0
          %1769 = vmatpush2.bf16.msra.mxu0 0
          %1770 = vmatprep.subr.bf16.mxu0 0
          %1771 = vmatpush2.bf16.msra.mxu0 0
          %1772 = vmatprep.subr.bf16.mxu0 0
          %1773 = vmatpush2.bf16.msra.mxu0 0
          %1774 = vmatprep.subr.bf16.mxu0 0
          %1775 = vmatpush2.bf16.msra.mxu0 0
          %1776 = vmatprep.subr.bf16.mxu0 0
          %1777 = vmatpush2.bf16.msra.mxu0 0
          %1778 = vmatprep.subr.bf16.mxu0 0
          %1779 = vmatpush2.bf16.msra.mxu0 0
          %1780 = vmatprep.subr.bf16.mxu0 0
          %1781 = vmatpush2.bf16.msra.mxu0 0
          %1782 = vmatprep.mubr.bf16.mxu0 0
          %1783 = vmatmul.mubr.bf16.gmra.mxu0 %v1749
          %v1784 = vpop.f32.mrf.mxu0
          %v1785 = vadd.f32 0.0, %v1784
          %v1786 = vpop.f32.mrf.mxu0
          %v1787 = vadd.f32 0.0, %v1786
          %v1788 = vpop.f32.mrf.mxu0
          %v1789 = vpop.f32.mrf.mxu0
          %1790 = vdwg.mxu0
          %1791 = vmatprep.subr.bf16.mxu0 %v1593
          %1792 = vmatpush1.bf16.msra.mxu0 %v1592
          %1793 = vmatprep.subr.bf16.mxu0 %v1589
          %1794 = vmatpush1.bf16.msra.mxu0 %v1588
          %1795 = vmatprep.subr.bf16.mxu0 %v1585
          %1796 = vmatpush1.bf16.msra.mxu0 %v1584
          %1797 = vmatprep.subr.bf16.mxu0 %v1581
          %1798 = vmatpush1.bf16.msra.mxu0 %v1580
          %1799 = vmatprep.subr.bf16.mxu0 %v1577
          %1800 = vmatpush1.bf16.msra.mxu0 %v1576
          %1801 = vmatprep.subr.bf16.mxu0 %v1573
          %1802 = vmatpush1.bf16.msra.mxu0 %v1572
          %1803 = vmatprep.subr.bf16.mxu0 %v1569
          %1804 = vmatpush1.bf16.msra.mxu0 %v1568
          %1805 = vmatprep.subr.bf16.mxu0 %v1565
          %1806 = vmatpush1.bf16.msra.mxu0 %v1564
          %1807 = vmatprep.subr.bf16.mxu0 0
          %1808 = vmatpush2.bf16.msra.mxu0 0
          %1809 = vmatprep.subr.bf16.mxu0 0
          %1810 = vmatpush2.bf16.msra.mxu0 0
          %1811 = vmatprep.subr.bf16.mxu0 0
          %1812 = vmatpush2.bf16.msra.mxu0 0
          %1813 = vmatprep.subr.bf16.mxu0 0
          %1814 = vmatpush2.bf16.msra.mxu0 0
          %1815 = vmatprep.subr.bf16.mxu0 0
          %1816 = vmatpush2.bf16.msra.mxu0 0
          %1817 = vmatprep.subr.bf16.mxu0 0
          %1818 = vmatpush2.bf16.msra.mxu0 0
          %1819 = vmatprep.subr.bf16.mxu0 0
          %1820 = vmatpush2.bf16.msra.mxu0 0
          %1821 = vmatprep.subr.bf16.mxu0 0
          %1822 = vmatpush2.bf16.msra.mxu0 0
          %1823 = vmatprep.mubr.bf16.mxu0 0
          %1824 = vmatmul.mubr.bf16.gmra.mxu0 %v1749
          %v1825 = vpop.f32.mrf.mxu0
          %v1826 = vadd.f32 0.0, %v1825
          %v1827 = vpop.f32.mrf.mxu0
          %v1828 = vadd.f32 0.0, %v1827
          %v1829 = vpop.f32.mrf.mxu0
          %v1830 = vpop.f32.mrf.mxu0
          %1831 = vdwg.mxu0
          %v1832 = vadd.f32 %v1745, %v1785
          %v1833 = vadd.f32 %v1746, %v1787
          %v1834 = vadd.f32 %v1747, %v1826
          %v1835 = vadd.f32 %v1748, %v1828
          %v1836 = vxor.u32 %v1832, 2147483648
          %v1837 = vmul.f32 %v1836, 1.442695
          %v1838 = vpow.pop %v1837
          %v1839 = vadd.f32 %v1838, 1.0
          %v1840 = vrcp.pop %v1839
          %v1841 = vmul.f32 1.0, %v1840
          %v1842 = vxor.u32 %v1833, 2147483648
          %v1843 = vmul.f32 %v1842, 1.442695
          %v1844 = vpow.pop %v1843
          %v1845 = vadd.f32 %v1844, 1.0
          %v1846 = vrcp.pop %v1845
          %v1847 = vmul.f32 1.0, %v1846
          %v1848 = vtanh.pop %v1834
          %v1849 = vxor.u32 %v1835, 2147483648
          %v1850 = vmul.f32 %v1849, 1.442695
          %v1851 = vpow.pop %v1850
          %v1852 = vadd.f32 %v1851, 1.0
          %v1853 = vrcp.pop %v1852
          %v1854 = vmul.f32 1.0, %v1853
          %v1855 = vmul.f32 %v1847, %v1733
          %v1856 = vmul.f32 %v1841, %v1848
          %v1857 = vadd.f32 %v1855, %v1856
          %v1858 = vtanh.pop %v1857
          %v1859 = vmul.f32 %v1854, %v1858
          %v1860 = vrot.slane %v1859, 4
          %v1861 = vadd.f32 %v1859, %v1860
          %v1862 = vrot.slane %v1861, 2
          %v1863 = vadd.f32 %v1861, %v1862
          %v1864 = vrot.slane %v1863, 1
          %v1865 = vadd.f32 %v1863, %v1864
          %s1866 = scalar_lea.vmem %s165, 32 [#allocation6]
          %v1867 = vld [vmem:[%s1866] sm:$0xff]
          %v1868 = vld [vmem:[%s1866 + $0x8] sm:$0xff]
          %v1869 = vunpack.c.l.bf16 %v1867
          %v1870 = vunpack.c.h.bf16 %v1867
          %v1871 = vunpack.c.l.bf16 %v1868
          %v1872 = vunpack.c.h.bf16 %v1868
          %v1873 = vpack.c.bf16 %v1859, %v1859
          %1874 = vmatprep.subr.bf16.mxu0 %v1591
          %1875 = vmatpush1.bf16.msra.mxu0 %v1590
          %1876 = vmatprep.subr.bf16.mxu0 %v1587
          %1877 = vmatpush1.bf16.msra.mxu0 %v1586
          %1878 = vmatprep.subr.bf16.mxu0 %v1583
          %1879 = vmatpush1.bf16.msra.mxu0 %v1582
          %1880 = vmatprep.subr.bf16.mxu0 %v1579
          %1881 = vmatpush1.bf16.msra.mxu0 %v1578
          %1882 = vmatprep.subr.bf16.mxu0 %v1575
          %1883 = vmatpush1.bf16.msra.mxu0 %v1574
          %1884 = vmatprep.subr.bf16.mxu0 %v1571
          %1885 = vmatpush1.bf16.msra.mxu0 %v1570
          %1886 = vmatprep.subr.bf16.mxu0 %v1567
          %1887 = vmatpush1.bf16.msra.mxu0 %v1566
          %1888 = vmatprep.subr.bf16.mxu0 %v1563
          %1889 = vmatpush1.bf16.msra.mxu0 %v1562
          %1890 = vmatprep.subr.bf16.mxu0 0
          %1891 = vmatpush2.bf16.msra.mxu0 0
          %1892 = vmatprep.subr.bf16.mxu0 0
          %1893 = vmatpush2.bf16.msra.mxu0 0
          %1894 = vmatprep.subr.bf16.mxu0 0
          %1895 = vmatpush2.bf16.msra.mxu0 0
          %1896 = vmatprep.subr.bf16.mxu0 0
          %1897 = vmatpush2.bf16.msra.mxu0 0
          %1898 = vmatprep.subr.bf16.mxu0 0
          %1899 = vmatpush2.bf16.msra.mxu0 0
          %1900 = vmatprep.subr.bf16.mxu0 0
          %1901 = vmatpush2.bf16.msra.mxu0 0
          %1902 = vmatprep.subr.bf16.mxu0 0
          %1903 = vmatpush2.bf16.msra.mxu0 0
          %1904 = vmatprep.subr.bf16.mxu0 0
          %1905 = vmatpush2.bf16.msra.mxu0 0
          %1906 = vmatprep.mubr.bf16.mxu0 0
          %1907 = vmatmul.mubr.bf16.gmra.mxu0 %v1873
          %v1908 = vpop.f32.mrf.mxu0
          %v1909 = vadd.f32 0.0, %v1908
          %v1910 = vpop.f32.mrf.mxu0
          %v1911 = vadd.f32 0.0, %v1910
          %v1912 = vpop.f32.mrf.mxu0
          %v1913 = vpop.f32.mrf.mxu0
          %1914 = vdwg.mxu0
          %1915 = vmatprep.subr.bf16.mxu0 %v1593
          %1916 = vmatpush1.bf16.msra.mxu0 %v1592
          %1917 = vmatprep.subr.bf16.mxu0 %v1589
          %1918 = vmatpush1.bf16.msra.mxu0 %v1588
          %1919 = vmatprep.subr.bf16.mxu0 %v1585
          %1920 = vmatpush1.bf16.msra.mxu0 %v1584
          %1921 = vmatprep.subr.bf16.mxu0 %v1581
          %1922 = vmatpush1.bf16.msra.mxu0 %v1580
          %1923 = vmatprep.subr.bf16.mxu0 %v1577
          %1924 = vmatpush1.bf16.msra.mxu0 %v1576
          %1925 = vmatprep.subr.bf16.mxu0 %v1573
          %1926 = vmatpush1.bf16.msra.mxu0 %v1572
          %1927 = vmatprep.subr.bf16.mxu0 %v1569
          %1928 = vmatpush1.bf16.msra.mxu0 %v1568
          %1929 = vmatprep.subr.bf16.mxu0 %v1565
          %1930 = vmatpush1.bf16.msra.mxu0 %v1564
          %1931 = vmatprep.subr.bf16.mxu0 0
          %1932 = vmatpush2.bf16.msra.mxu0 0
          %1933 = vmatprep.subr.bf16.mxu0 0
          %1934 = vmatpush2.bf16.msra.mxu0 0
          %1935 = vmatprep.subr.bf16.mxu0 0
          %1936 = vmatpush2.bf16.msra.mxu0 0
          %1937 = vmatprep.subr.bf16.mxu0 0
          %1938 = vmatpush2.bf16.msra.mxu0 0
          %1939 = vmatprep.subr.bf16.mxu0 0
          %1940 = vmatpush2.bf16.msra.mxu0 0
          %1941 = vmatprep.subr.bf16.mxu0 0
          %1942 = vmatpush2.bf16.msra.mxu0 0
          %1943 = vmatprep.subr.bf16.mxu0 0
          %1944 = vmatpush2.bf16.msra.mxu0 0
          %1945 = vmatprep.subr.bf16.mxu0 0
          %1946 = vmatpush2.bf16.msra.mxu0 0
          %1947 = vmatprep.mubr.bf16.mxu0 0
          %1948 = vmatmul.mubr.bf16.gmra.mxu0 %v1873
          %v1949 = vpop.f32.mrf.mxu0
          %v1950 = vadd.f32 0.0, %v1949
          %v1951 = vpop.f32.mrf.mxu0
          %v1952 = vadd.f32 0.0, %v1951
          %v1953 = vpop.f32.mrf.mxu0
          %v1954 = vpop.f32.mrf.mxu0
          %1955 = vdwg.mxu0
          %v1956 = vadd.f32 %v1869, %v1909
          %v1957 = vadd.f32 %v1870, %v1911
          %v1958 = vadd.f32 %v1871, %v1950
          %v1959 = vadd.f32 %v1872, %v1952
          %v1960 = vxor.u32 %v1956, 2147483648
          %v1961 = vmul.f32 %v1960, 1.442695
          %v1962 = vpow.pop %v1961
          %v1963 = vadd.f32 %v1962, 1.0
          %v1964 = vrcp.pop %v1963
          %v1965 = vmul.f32 1.0, %v1964
          %v1966 = vxor.u32 %v1957, 2147483648
          %v1967 = vmul.f32 %v1966, 1.442695
          %v1968 = vpow.pop %v1967
          %v1969 = vadd.f32 %v1968, 1.0
          %v1970 = vrcp.pop %v1969
          %v1971 = vmul.f32 1.0, %v1970
          %v1972 = vtanh.pop %v1958
          %v1973 = vxor.u32 %v1959, 2147483648
          %v1974 = vmul.f32 %v1973, 1.442695
          %v1975 = vpow.pop %v1974
          %v1976 = vadd.f32 %v1975, 1.0
          %v1977 = vrcp.pop %v1976
          %v1978 = vmul.f32 1.0, %v1977
          %v1979 = vmul.f32 %v1971, %v1857
          %v1980 = vmul.f32 %v1965, %v1972
          %v1981 = vadd.f32 %v1979, %v1980
          %v1982 = vtanh.pop %v1981
          %v1983 = vmul.f32 %v1978, %v1982
          %v1984 = vrot.slane %v1983, 4
          %v1985 = vadd.f32 %v1983, %v1984
          %v1986 = vrot.slane %v1985, 2
          %v1987 = vadd.f32 %v1985, %v1986
          %v1988 = vrot.slane %v1987, 1
          %v1989 = vadd.f32 %v1987, %v1988
          %s1990 = scalar_lea.vmem %s165, 48 [#allocation6]
          %v1991 = vld [vmem:[%s1990] sm:$0xff]
          %v1992 = vld [vmem:[%s1990 + $0x8] sm:$0xff]
          %v1993 = vunpack.c.l.bf16 %v1991
          %v1994 = vunpack.c.h.bf16 %v1991
          %v1995 = vunpack.c.l.bf16 %v1992
          %v1996 = vunpack.c.h.bf16 %v1992
          %v1997 = vpack.c.bf16 %v1983, %v1983
          %1998 = vmatprep.subr.bf16.mxu0 %v1591
          %1999 = vmatpush1.bf16.msra.mxu0 %v1590
          %2000 = vmatprep.subr.bf16.mxu0 %v1587
          %2001 = vmatpush1.bf16.msra.mxu0 %v1586
          %2002 = vmatprep.subr.bf16.mxu0 %v1583
          %2003 = vmatpush1.bf16.msra.mxu0 %v1582
          %2004 = vmatprep.subr.bf16.mxu0 %v1579
          %2005 = vmatpush1.bf16.msra.mxu0 %v1578
          %2006 = vmatprep.subr.bf16.mxu0 %v1575
          %2007 = vmatpush1.bf16.msra.mxu0 %v1574
          %2008 = vmatprep.subr.bf16.mxu0 %v1571
          %2009 = vmatpush1.bf16.msra.mxu0 %v1570
          %2010 = vmatprep.subr.bf16.mxu0 %v1567
          %2011 = vmatpush1.bf16.msra.mxu0 %v1566
          %2012 = vmatprep.subr.bf16.mxu0 %v1563
          %2013 = vmatpush1.bf16.msra.mxu0 %v1562
          %2014 = vmatprep.subr.bf16.mxu0 0
          %2015 = vmatpush2.bf16.msra.mxu0 0
          %2016 = vmatprep.subr.bf16.mxu0 0
          %2017 = vmatpush2.bf16.msra.mxu0 0
          %2018 = vmatprep.subr.bf16.mxu0 0
          %2019 = vmatpush2.bf16.msra.mxu0 0
          %2020 = vmatprep.subr.bf16.mxu0 0
          %2021 = vmatpush2.bf16.msra.mxu0 0
          %2022 = vmatprep.subr.bf16.mxu0 0
          %2023 = vmatpush2.bf16.msra.mxu0 0
          %2024 = vmatprep.subr.bf16.mxu0 0
          %2025 = vmatpush2.bf16.msra.mxu0 0
          %2026 = vmatprep.subr.bf16.mxu0 0
          %2027 = vmatpush2.bf16.msra.mxu0 0
          %2028 = vmatprep.subr.bf16.mxu0 0
          %2029 = vmatpush2.bf16.msra.mxu0 0
          %2030 = vmatprep.mubr.bf16.mxu0 0
          %2031 = vmatmul.mubr.bf16.gmra.mxu0 %v1997
          %v2032 = vpop.f32.mrf.mxu0
          %v2033 = vadd.f32 0.0, %v2032
          %v2034 = vpop.f32.mrf.mxu0
          %v2035 = vadd.f32 0.0, %v2034
          %v2036 = vpop.f32.mrf.mxu0
          %v2037 = vpop.f32.mrf.mxu0
          %2038 = vdwg.mxu0
          %2039 = vmatprep.subr.bf16.mxu0 %v1593
          %2040 = vmatpush1.bf16.msra.mxu0 %v1592
          %2041 = vmatprep.subr.bf16.mxu0 %v1589
          %2042 = vmatpush1.bf16.msra.mxu0 %v1588
          %2043 = vmatprep.subr.bf16.mxu0 %v1585
          %2044 = vmatpush1.bf16.msra.mxu0 %v1584
          %2045 = vmatprep.subr.bf16.mxu0 %v1581
          %2046 = vmatpush1.bf16.msra.mxu0 %v1580
          %2047 = vmatprep.subr.bf16.mxu0 %v1577
          %2048 = vmatpush1.bf16.msra.mxu0 %v1576
          %2049 = vmatprep.subr.bf16.mxu0 %v1573
          %2050 = vmatpush1.bf16.msra.mxu0 %v1572
          %2051 = vmatprep.subr.bf16.mxu0 %v1569
          %2052 = vmatpush1.bf16.msra.mxu0 %v1568
          %2053 = vmatprep.subr.bf16.mxu0 %v1565
          %2054 = vmatpush1.bf16.msra.mxu0 %v1564
          %2055 = vmatprep.subr.bf16.mxu0 0
          %2056 = vmatpush2.bf16.msra.mxu0 0
          %2057 = vmatprep.subr.bf16.mxu0 0
          %2058 = vmatpush2.bf16.msra.mxu0 0
          %2059 = vmatprep.subr.bf16.mxu0 0
          %2060 = vmatpush2.bf16.msra.mxu0 0
          %2061 = vmatprep.subr.bf16.mxu0 0
          %2062 = vmatpush2.bf16.msra.mxu0 0
          %2063 = vmatprep.subr.bf16.mxu0 0
          %2064 = vmatpush2.bf16.msra.mxu0 0
          %2065 = vmatprep.subr.bf16.mxu0 0
          %2066 = vmatpush2.bf16.msra.mxu0 0
          %2067 = vmatprep.subr.bf16.mxu0 0
          %2068 = vmatpush2.bf16.msra.mxu0 0
          %2069 = vmatprep.subr.bf16.mxu0 0
          %2070 = vmatpush2.bf16.msra.mxu0 0
          %2071 = vmatprep.mubr.bf16.mxu0 0
          %2072 = vmatmul.mubr.bf16.gmra.mxu0 %v1997
          %v2073 = vpop.f32.mrf.mxu0
          %v2074 = vadd.f32 0.0, %v2073
          %v2075 = vpop.f32.mrf.mxu0
          %v2076 = vadd.f32 0.0, %v2075
          %v2077 = vpop.f32.mrf.mxu0
          %v2078 = vpop.f32.mrf.mxu0
          %2079 = vdwg.mxu0
          %v2080 = vadd.f32 %v1993, %v2033
          %v2081 = vadd.f32 %v1994, %v2035
          %v2082 = vadd.f32 %v1995, %v2074
          %v2083 = vadd.f32 %v1996, %v2076
          %v2084 = vxor.u32 %v2080, 2147483648
          %v2085 = vmul.f32 %v2084, 1.442695
          %v2086 = vpow.pop %v2085
          %v2087 = vadd.f32 %v2086, 1.0
          %v2088 = vrcp.pop %v2087
          %v2089 = vmul.f32 1.0, %v2088
          %v2090 = vxor.u32 %v2081, 2147483648
          %v2091 = vmul.f32 %v2090, 1.442695
          %v2092 = vpow.pop %v2091
          %v2093 = vadd.f32 %v2092, 1.0
          %v2094 = vrcp.pop %v2093
          %v2095 = vmul.f32 1.0, %v2094
          %v2096 = vtanh.pop %v2082
          %v2097 = vxor.u32 %v2083, 2147483648
          %v2098 = vmul.f32 %v2097, 1.442695
          %v2099 = vpow.pop %v2098
          %v2100 = vadd.f32 %v2099, 1.0
          %v2101 = vrcp.pop %v2100
          %v2102 = vmul.f32 1.0, %v2101
          %v2103 = vmul.f32 %v2095, %v1981
          %v2104 = vmul.f32 %v2089, %v2096
          %v2105 = vadd.f32 %v2103, %v2104
          %v2106 = vtanh.pop %v2105
          %v2107 = vmul.f32 %v2102, %v2106
          %v2108 = vrot.slane %v2107, 4
          %v2109 = vadd.f32 %v2107, %v2108
          %v2110 = vrot.slane %v2109, 2
          %v2111 = vadd.f32 %v2109, %v2110
          %v2112 = vrot.slane %v2111, 1
          %v2113 = vadd.f32 %v2111, %v2112
          %s2114 = scalar_lea.vmem %s165, 64 [#allocation6]
          %v2115 = vld [vmem:[%s2114] sm:$0xff]
          %v2116 = vld [vmem:[%s2114 + $0x8] sm:$0xff]
          %v2117 = vunpack.c.l.bf16 %v2115
          %v2118 = vunpack.c.h.bf16 %v2115
          %v2119 = vunpack.c.l.bf16 %v2116
          %v2120 = vunpack.c.h.bf16 %v2116
          %v2121 = vpack.c.bf16 %v2107, %v2107
          %2122 = vmatprep.subr.bf16.mxu0 %v1591
          %2123 = vmatpush1.bf16.msra.mxu0 %v1590
          %2124 = vmatprep.subr.bf16.mxu0 %v1587
          %2125 = vmatpush1.bf16.msra.mxu0 %v1586
          %2126 = vmatprep.subr.bf16.mxu0 %v1583
          %2127 = vmatpush1.bf16.msra.mxu0 %v1582
          %2128 = vmatprep.subr.bf16.mxu0 %v1579
          %2129 = vmatpush1.bf16.msra.mxu0 %v1578
          %2130 = vmatprep.subr.bf16.mxu0 %v1575
          %2131 = vmatpush1.bf16.msra.mxu0 %v1574
          %2132 = vmatprep.subr.bf16.mxu0 %v1571
          %2133 = vmatpush1.bf16.msra.mxu0 %v1570
          %2134 = vmatprep.subr.bf16.mxu0 %v1567
          %2135 = vmatpush1.bf16.msra.mxu0 %v1566
          %2136 = vmatprep.subr.bf16.mxu0 %v1563
          %2137 = vmatpush1.bf16.msra.mxu0 %v1562
          %2138 = vmatprep.subr.bf16.mxu0 0
          %2139 = vmatpush2.bf16.msra.mxu0 0
          %2140 = vmatprep.subr.bf16.mxu0 0
          %2141 = vmatpush2.bf16.msra.mxu0 0
          %2142 = vmatprep.subr.bf16.mxu0 0
          %2143 = vmatpush2.bf16.msra.mxu0 0
          %2144 = vmatprep.subr.bf16.mxu0 0
          %2145 = vmatpush2.bf16.msra.mxu0 0
          %2146 = vmatprep.subr.bf16.mxu0 0
          %2147 = vmatpush2.bf16.msra.mxu0 0
          %2148 = vmatprep.subr.bf16.mxu0 0
          %2149 = vmatpush2.bf16.msra.mxu0 0
          %2150 = vmatprep.subr.bf16.mxu0 0
          %2151 = vmatpush2.bf16.msra.mxu0 0
          %2152 = vmatprep.subr.bf16.mxu0 0
          %2153 = vmatpush2.bf16.msra.mxu0 0
          %2154 = vmatprep.mubr.bf16.mxu0 0
          %2155 = vmatmul.mubr.bf16.gmra.mxu0 %v2121
          %v2156 = vpop.f32.mrf.mxu0
          %v2157 = vadd.f32 0.0, %v2156
          %v2158 = vpop.f32.mrf.mxu0
          %v2159 = vadd.f32 0.0, %v2158
          %v2160 = vpop.f32.mrf.mxu0
          %v2161 = vpop.f32.mrf.mxu0
          %2162 = vdwg.mxu0
          %2163 = vmatprep.subr.bf16.mxu0 %v1593
          %2164 = vmatpush1.bf16.msra.mxu0 %v1592
          %2165 = vmatprep.subr.bf16.mxu0 %v1589
          %2166 = vmatpush1.bf16.msra.mxu0 %v1588
          %2167 = vmatprep.subr.bf16.mxu0 %v1585
          %2168 = vmatpush1.bf16.msra.mxu0 %v1584
          %2169 = vmatprep.subr.bf16.mxu0 %v1581
          %2170 = vmatpush1.bf16.msra.mxu0 %v1580
          %2171 = vmatprep.subr.bf16.mxu0 %v1577
          %2172 = vmatpush1.bf16.msra.mxu0 %v1576
          %2173 = vmatprep.subr.bf16.mxu0 %v1573
          %2174 = vmatpush1.bf16.msra.mxu0 %v1572
          %2175 = vmatprep.subr.bf16.mxu0 %v1569
          %2176 = vmatpush1.bf16.msra.mxu0 %v1568
          %2177 = vmatprep.subr.bf16.mxu0 %v1565
          %2178 = vmatpush1.bf16.msra.mxu0 %v1564
          %2179 = vmatprep.subr.bf16.mxu0 0
          %2180 = vmatpush2.bf16.msra.mxu0 0
          %2181 = vmatprep.subr.bf16.mxu0 0
          %2182 = vmatpush2.bf16.msra.mxu0 0
          %2183 = vmatprep.subr.bf16.mxu0 0
          %2184 = vmatpush2.bf16.msra.mxu0 0
          %2185 = vmatprep.subr.bf16.mxu0 0
          %2186 = vmatpush2.bf16.msra.mxu0 0
          %2187 = vmatprep.subr.bf16.mxu0 0
          %2188 = vmatpush2.bf16.msra.mxu0 0
          %2189 = vmatprep.subr.bf16.mxu0 0
          %2190 = vmatpush2.bf16.msra.mxu0 0
          %2191 = vmatprep.subr.bf16.mxu0 0
          %2192 = vmatpush2.bf16.msra.mxu0 0
          %2193 = vmatprep.subr.bf16.mxu0 0
          %2194 = vmatpush2.bf16.msra.mxu0 0
          %2195 = vmatprep.mubr.bf16.mxu0 0
          %2196 = vmatmul.mubr.bf16.gmra.mxu0 %v2121
          %v2197 = vpop.f32.mrf.mxu0
          %v2198 = vadd.f32 0.0, %v2197
          %v2199 = vpop.f32.mrf.mxu0
          %v2200 = vadd.f32 0.0, %v2199
          %v2201 = vpop.f32.mrf.mxu0
          %v2202 = vpop.f32.mrf.mxu0
          %2203 = vdwg.mxu0
          %v2204 = vadd.f32 %v2117, %v2157
          %v2205 = vadd.f32 %v2118, %v2159
          %v2206 = vadd.f32 %v2119, %v2198
          %v2207 = vadd.f32 %v2120, %v2200
          %v2208 = vxor.u32 %v2204, 2147483648
          %v2209 = vmul.f32 %v2208, 1.442695
          %v2210 = vpow.pop %v2209
          %v2211 = vadd.f32 %v2210, 1.0
          %v2212 = vrcp.pop %v2211
          %v2213 = vmul.f32 1.0, %v2212
          %v2214 = vxor.u32 %v2205, 2147483648
          %v2215 = vmul.f32 %v2214, 1.442695
          %v2216 = vpow.pop %v2215
          %v2217 = vadd.f32 %v2216, 1.0
          %v2218 = vrcp.pop %v2217
          %v2219 = vmul.f32 1.0, %v2218
          %v2220 = vtanh.pop %v2206
          %v2221 = vxor.u32 %v2207, 2147483648
          %v2222 = vmul.f32 %v2221, 1.442695
          %v2223 = vpow.pop %v2222
          %v2224 = vadd.f32 %v2223, 1.0
          %v2225 = vrcp.pop %v2224
          %v2226 = vmul.f32 1.0, %v2225
          %v2227 = vmul.f32 %v2219, %v2105
          %v2228 = vmul.f32 %v2213, %v2220
          %v2229 = vadd.f32 %v2227, %v2228
          %v2230 = vtanh.pop %v2229
          %v2231 = vmul.f32 %v2226, %v2230
          %v2232 = vrot.slane %v2231, 4
          %v2233 = vadd.f32 %v2231, %v2232
          %v2234 = vrot.slane %v2233, 2
          %v2235 = vadd.f32 %v2233, %v2234
          %v2236 = vrot.slane %v2235, 1
          %v2237 = vadd.f32 %v2235, %v2236
          %s2238 = scalar_lea.vmem %s165, 80 [#allocation6]
          %v2239 = vld [vmem:[%s2238] sm:$0xff]
          %v2240 = vld [vmem:[%s2238 + $0x8] sm:$0xff]
          %v2241 = vunpack.c.l.bf16 %v2239
          %v2242 = vunpack.c.h.bf16 %v2239
          %v2243 = vunpack.c.l.bf16 %v2240
          %v2244 = vunpack.c.h.bf16 %v2240
          %v2245 = vpack.c.bf16 %v2231, %v2231
          %2246 = vmatprep.subr.bf16.mxu0 %v1591
          %2247 = vmatpush1.bf16.msra.mxu0 %v1590
          %2248 = vmatprep.subr.bf16.mxu0 %v1587
          %2249 = vmatpush1.bf16.msra.mxu0 %v1586
          %2250 = vmatprep.subr.bf16.mxu0 %v1583
          %2251 = vmatpush1.bf16.msra.mxu0 %v1582
          %2252 = vmatprep.subr.bf16.mxu0 %v1579
          %2253 = vmatpush1.bf16.msra.mxu0 %v1578
          %2254 = vmatprep.subr.bf16.mxu0 %v1575
          %2255 = vmatpush1.bf16.msra.mxu0 %v1574
          %2256 = vmatprep.subr.bf16.mxu0 %v1571
          %2257 = vmatpush1.bf16.msra.mxu0 %v1570
          %2258 = vmatprep.subr.bf16.mxu0 %v1567
          %2259 = vmatpush1.bf16.msra.mxu0 %v1566
          %2260 = vmatprep.subr.bf16.mxu0 %v1563
          %2261 = vmatpush1.bf16.msra.mxu0 %v1562
          %2262 = vmatprep.subr.bf16.mxu0 0
          %2263 = vmatpush2.bf16.msra.mxu0 0
          %2264 = vmatprep.subr.bf16.mxu0 0
          %2265 = vmatpush2.bf16.msra.mxu0 0
          %2266 = vmatprep.subr.bf16.mxu0 0
          %2267 = vmatpush2.bf16.msra.mxu0 0
          %2268 = vmatprep.subr.bf16.mxu0 0
          %2269 = vmatpush2.bf16.msra.mxu0 0
          %2270 = vmatprep.subr.bf16.mxu0 0
          %2271 = vmatpush2.bf16.msra.mxu0 0
          %2272 = vmatprep.subr.bf16.mxu0 0
          %2273 = vmatpush2.bf16.msra.mxu0 0
          %2274 = vmatprep.subr.bf16.mxu0 0
          %2275 = vmatpush2.bf16.msra.mxu0 0
          %2276 = vmatprep.subr.bf16.mxu0 0
          %2277 = vmatpush2.bf16.msra.mxu0 0
          %2278 = vmatprep.mubr.bf16.mxu0 0
          %2279 = vmatmul.mubr.bf16.gmra.mxu0 %v2245
          %v2280 = vpop.f32.mrf.mxu0
          %v2281 = vadd.f32 0.0, %v2280
          %v2282 = vpop.f32.mrf.mxu0
          %v2283 = vadd.f32 0.0, %v2282
          %v2284 = vpop.f32.mrf.mxu0
          %v2285 = vpop.f32.mrf.mxu0
          %2286 = vdwg.mxu0
          %2287 = vmatprep.subr.bf16.mxu0 %v1593
          %2288 = vmatpush1.bf16.msra.mxu0 %v1592
          %2289 = vmatprep.subr.bf16.mxu0 %v1589
          %2290 = vmatpush1.bf16.msra.mxu0 %v1588
          %2291 = vmatprep.subr.bf16.mxu0 %v1585
          %2292 = vmatpush1.bf16.msra.mxu0 %v1584
          %2293 = vmatprep.subr.bf16.mxu0 %v1581
          %2294 = vmatpush1.bf16.msra.mxu0 %v1580
          %2295 = vmatprep.subr.bf16.mxu0 %v1577
          %2296 = vmatpush1.bf16.msra.mxu0 %v1576
          %2297 = vmatprep.subr.bf16.mxu0 %v1573
          %2298 = vmatpush1.bf16.msra.mxu0 %v1572
          %2299 = vmatprep.subr.bf16.mxu0 %v1569
          %2300 = vmatpush1.bf16.msra.mxu0 %v1568
          %2301 = vmatprep.subr.bf16.mxu0 %v1565
          %2302 = vmatpush1.bf16.msra.mxu0 %v1564
          %2303 = vmatprep.subr.bf16.mxu0 0
          %2304 = vmatpush2.bf16.msra.mxu0 0
          %2305 = vmatprep.subr.bf16.mxu0 0
          %2306 = vmatpush2.bf16.msra.mxu0 0
          %2307 = vmatprep.subr.bf16.mxu0 0
          %2308 = vmatpush2.bf16.msra.mxu0 0
          %2309 = vmatprep.subr.bf16.mxu0 0
          %2310 = vmatpush2.bf16.msra.mxu0 0
          %2311 = vmatprep.subr.bf16.mxu0 0
          %2312 = vmatpush2.bf16.msra.mxu0 0
          %2313 = vmatprep.subr.bf16.mxu0 0
          %2314 = vmatpush2.bf16.msra.mxu0 0
          %2315 = vmatprep.subr.bf16.mxu0 0
          %2316 = vmatpush2.bf16.msra.mxu0 0
          %2317 = vmatprep.subr.bf16.mxu0 0
          %2318 = vmatpush2.bf16.msra.mxu0 0
          %2319 = vmatprep.mubr.bf16.mxu0 0
          %2320 = vmatmul.mubr.bf16.gmra.mxu0 %v2245
          %v2321 = vpop.f32.mrf.mxu0
          %v2322 = vadd.f32 0.0, %v2321
          %v2323 = vpop.f32.mrf.mxu0
          %v2324 = vadd.f32 0.0, %v2323
          %v2325 = vpop.f32.mrf.mxu0
          %v2326 = vpop.f32.mrf.mxu0
          %2327 = vdwg.mxu0
          %v2328 = vadd.f32 %v2241, %v2281
          %v2329 = vadd.f32 %v2242, %v2283
          %v2330 = vadd.f32 %v2243, %v2322
          %v2331 = vadd.f32 %v2244, %v2324
          %v2332 = vxor.u32 %v2328, 2147483648
          %v2333 = vmul.f32 %v2332, 1.442695
          %v2334 = vpow.pop %v2333
          %v2335 = vadd.f32 %v2334, 1.0
          %v2336 = vrcp.pop %v2335
          %v2337 = vmul.f32 1.0, %v2336
          %v2338 = vxor.u32 %v2329, 2147483648
          %v2339 = vmul.f32 %v2338, 1.442695
          %v2340 = vpow.pop %v2339
          %v2341 = vadd.f32 %v2340, 1.0
          %v2342 = vrcp.pop %v2341
          %v2343 = vmul.f32 1.0, %v2342
          %v2344 = vtanh.pop %v2330
          %v2345 = vxor.u32 %v2331, 2147483648
          %v2346 = vmul.f32 %v2345, 1.442695
          %v2347 = vpow.pop %v2346
          %v2348 = vadd.f32 %v2347, 1.0
          %v2349 = vrcp.pop %v2348
          %v2350 = vmul.f32 1.0, %v2349
          %v2351 = vmul.f32 %v2343, %v2229
          %v2352 = vmul.f32 %v2337, %v2344
          %v2353 = vadd.f32 %v2351, %v2352
          %v2354 = vtanh.pop %v2353
          %v2355 = vmul.f32 %v2350, %v2354
          %v2356 = vrot.slane %v2355, 4
          %v2357 = vadd.f32 %v2355, %v2356
          %v2358 = vrot.slane %v2357, 2
          %v2359 = vadd.f32 %v2357, %v2358
          %v2360 = vrot.slane %v2359, 1
          %v2361 = vadd.f32 %v2359, %v2360
          %s2362 = scalar_lea.vmem %s165, 96 [#allocation6]
          %v2363 = vld [vmem:[%s2362] sm:$0xff]
          %v2364 = vld [vmem:[%s2362 + $0x8] sm:$0xff]
          %v2365 = vunpack.c.l.bf16 %v2363
          %v2366 = vunpack.c.h.bf16 %v2363
          %v2367 = vunpack.c.l.bf16 %v2364
          %v2368 = vunpack.c.h.bf16 %v2364
          %v2369 = vpack.c.bf16 %v2355, %v2355
          %2370 = vmatprep.subr.bf16.mxu0 %v1591
          %2371 = vmatpush1.bf16.msra.mxu0 %v1590
          %2372 = vmatprep.subr.bf16.mxu0 %v1587
          %2373 = vmatpush1.bf16.msra.mxu0 %v1586
          %2374 = vmatprep.subr.bf16.mxu0 %v1583
          %2375 = vmatpush1.bf16.msra.mxu0 %v1582
          %2376 = vmatprep.subr.bf16.mxu0 %v1579
          %2377 = vmatpush1.bf16.msra.mxu0 %v1578
          %2378 = vmatprep.subr.bf16.mxu0 %v1575
          %2379 = vmatpush1.bf16.msra.mxu0 %v1574
          %2380 = vmatprep.subr.bf16.mxu0 %v1571
          %2381 = vmatpush1.bf16.msra.mxu0 %v1570
          %2382 = vmatprep.subr.bf16.mxu0 %v1567
          %2383 = vmatpush1.bf16.msra.mxu0 %v1566
          %2384 = vmatprep.subr.bf16.mxu0 %v1563
          %2385 = vmatpush1.bf16.msra.mxu0 %v1562
          %2386 = vmatprep.subr.bf16.mxu0 0
          %2387 = vmatpush2.bf16.msra.mxu0 0
          %2388 = vmatprep.subr.bf16.mxu0 0
          %2389 = vmatpush2.bf16.msra.mxu0 0
          %2390 = vmatprep.subr.bf16.mxu0 0
          %2391 = vmatpush2.bf16.msra.mxu0 0
          %2392 = vmatprep.subr.bf16.mxu0 0
          %2393 = vmatpush2.bf16.msra.mxu0 0
          %2394 = vmatprep.subr.bf16.mxu0 0
          %2395 = vmatpush2.bf16.msra.mxu0 0
          %2396 = vmatprep.subr.bf16.mxu0 0
          %2397 = vmatpush2.bf16.msra.mxu0 0
          %2398 = vmatprep.subr.bf16.mxu0 0
          %2399 = vmatpush2.bf16.msra.mxu0 0
          %2400 = vmatprep.subr.bf16.mxu0 0
          %2401 = vmatpush2.bf16.msra.mxu0 0
          %2402 = vmatprep.mubr.bf16.mxu0 0
          %2403 = vmatmul.mubr.bf16.gmra.mxu0 %v2369
          %v2404 = vpop.f32.mrf.mxu0
          %v2405 = vadd.f32 0.0, %v2404
          %v2406 = vpop.f32.mrf.mxu0
          %v2407 = vadd.f32 0.0, %v2406
          %v2408 = vpop.f32.mrf.mxu0
          %v2409 = vpop.f32.mrf.mxu0
          %2410 = vdwg.mxu0
          %2411 = vmatprep.subr.bf16.mxu0 %v1593
          %2412 = vmatpush1.bf16.msra.mxu0 %v1592
          %2413 = vmatprep.subr.bf16.mxu0 %v1589
          %2414 = vmatpush1.bf16.msra.mxu0 %v1588
          %2415 = vmatprep.subr.bf16.mxu0 %v1585
          %2416 = vmatpush1.bf16.msra.mxu0 %v1584
          %2417 = vmatprep.subr.bf16.mxu0 %v1581
          %2418 = vmatpush1.bf16.msra.mxu0 %v1580
          %2419 = vmatprep.subr.bf16.mxu0 %v1577
          %2420 = vmatpush1.bf16.msra.mxu0 %v1576
          %2421 = vmatprep.subr.bf16.mxu0 %v1573
          %2422 = vmatpush1.bf16.msra.mxu0 %v1572
          %2423 = vmatprep.subr.bf16.mxu0 %v1569
          %2424 = vmatpush1.bf16.msra.mxu0 %v1568
          %2425 = vmatprep.subr.bf16.mxu0 %v1565
          %2426 = vmatpush1.bf16.msra.mxu0 %v1564
          %2427 = vmatprep.subr.bf16.mxu0 0
          %2428 = vmatpush2.bf16.msra.mxu0 0
          %2429 = vmatprep.subr.bf16.mxu0 0
          %2430 = vmatpush2.bf16.msra.mxu0 0
          %2431 = vmatprep.subr.bf16.mxu0 0
          %2432 = vmatpush2.bf16.msra.mxu0 0
          %2433 = vmatprep.subr.bf16.mxu0 0
          %2434 = vmatpush2.bf16.msra.mxu0 0
          %2435 = vmatprep.subr.bf16.mxu0 0
          %2436 = vmatpush2.bf16.msra.mxu0 0
          %2437 = vmatprep.subr.bf16.mxu0 0
          %2438 = vmatpush2.bf16.msra.mxu0 0
          %2439 = vmatprep.subr.bf16.mxu0 0
          %2440 = vmatpush2.bf16.msra.mxu0 0
          %2441 = vmatprep.subr.bf16.mxu0 0
          %2442 = vmatpush2.bf16.msra.mxu0 0
          %2443 = vmatprep.mubr.bf16.mxu0 0
          %2444 = vmatmul.mubr.bf16.gmra.mxu0 %v2369
          %v2445 = vpop.f32.mrf.mxu0
          %v2446 = vadd.f32 0.0, %v2445
          %v2447 = vpop.f32.mrf.mxu0
          %v2448 = vadd.f32 0.0, %v2447
          %v2449 = vpop.f32.mrf.mxu0
          %v2450 = vpop.f32.mrf.mxu0
          %2451 = vdwg.mxu0
          %v2452 = vadd.f32 %v2365, %v2405
          %v2453 = vadd.f32 %v2366, %v2407
          %v2454 = vadd.f32 %v2367, %v2446
          %v2455 = vadd.f32 %v2368, %v2448
          %v2456 = vxor.u32 %v2452, 2147483648
          %v2457 = vmul.f32 %v2456, 1.442695
          %v2458 = vpow.pop %v2457
          %v2459 = vadd.f32 %v2458, 1.0
          %v2460 = vrcp.pop %v2459
          %v2461 = vmul.f32 1.0, %v2460
          %v2462 = vxor.u32 %v2453, 2147483648
          %v2463 = vmul.f32 %v2462, 1.442695
          %v2464 = vpow.pop %v2463
          %v2465 = vadd.f32 %v2464, 1.0
          %v2466 = vrcp.pop %v2465
          %v2467 = vmul.f32 1.0, %v2466
          %v2468 = vtanh.pop %v2454
          %v2469 = vxor.u32 %v2455, 2147483648
          %v2470 = vmul.f32 %v2469, 1.442695
          %v2471 = vpow.pop %v2470
          %v2472 = vadd.f32 %v2471, 1.0
          %v2473 = vrcp.pop %v2472
          %v2474 = vmul.f32 1.0, %v2473
          %v2475 = vmul.f32 %v2467, %v2353
          %v2476 = vmul.f32 %v2461, %v2468
          %v2477 = vadd.f32 %v2475, %v2476
          %v2478 = vtanh.pop %v2477
          %v2479 = vmul.f32 %v2474, %v2478
          %v2480 = vrot.slane %v2479, 4
          %v2481 = vadd.f32 %v2479, %v2480
          %v2482 = vrot.slane %v2481, 2
          %v2483 = vadd.f32 %v2481, %v2482
          %v2484 = vrot.slane %v2483, 1
          %v2485 = vadd.f32 %v2483, %v2484
          %s2486 = scalar_lea.vmem %s165, 112 [#allocation6]
          %v2487 = vld [vmem:[%s2486] sm:$0xff]
          %v2488 = vld [vmem:[%s2486 + $0x8] sm:$0xff]
          %v2489 = vunpack.c.l.bf16 %v2487
          %v2490 = vunpack.c.h.bf16 %v2487
          %v2491 = vunpack.c.l.bf16 %v2488
          %v2492 = vunpack.c.h.bf16 %v2488
          %v2493 = vpack.c.bf16 %v2479, %v2479
          %2494 = vmatprep.subr.bf16.mxu0 %v1591
          %2495 = vmatpush1.bf16.msra.mxu0 %v1590
          %2496 = vmatprep.subr.bf16.mxu0 %v1587
          %2497 = vmatpush1.bf16.msra.mxu0 %v1586
          %2498 = vmatprep.subr.bf16.mxu0 %v1583
          %2499 = vmatpush1.bf16.msra.mxu0 %v1582
          %2500 = vmatprep.subr.bf16.mxu0 %v1579
          %2501 = vmatpush1.bf16.msra.mxu0 %v1578
          %2502 = vmatprep.subr.bf16.mxu0 %v1575
          %2503 = vmatpush1.bf16.msra.mxu0 %v1574
          %2504 = vmatprep.subr.bf16.mxu0 %v1571
          %2505 = vmatpush1.bf16.msra.mxu0 %v1570
          %2506 = vmatprep.subr.bf16.mxu0 %v1567
          %2507 = vmatpush1.bf16.msra.mxu0 %v1566
          %2508 = vmatprep.subr.bf16.mxu0 %v1563
          %2509 = vmatpush1.bf16.msra.mxu0 %v1562
          %2510 = vmatprep.subr.bf16.mxu0 0
          %2511 = vmatpush2.bf16.msra.mxu0 0
          %2512 = vmatprep.subr.bf16.mxu0 0
          %2513 = vmatpush2.bf16.msra.mxu0 0
          %2514 = vmatprep.subr.bf16.mxu0 0
          %2515 = vmatpush2.bf16.msra.mxu0 0
          %2516 = vmatprep.subr.bf16.mxu0 0
          %2517 = vmatpush2.bf16.msra.mxu0 0
          %2518 = vmatprep.subr.bf16.mxu0 0
          %2519 = vmatpush2.bf16.msra.mxu0 0
          %2520 = vmatprep.subr.bf16.mxu0 0
          %2521 = vmatpush2.bf16.msra.mxu0 0
          %2522 = vmatprep.subr.bf16.mxu0 0
          %2523 = vmatpush2.bf16.msra.mxu0 0
          %2524 = vmatprep.subr.bf16.mxu0 0
          %2525 = vmatpush2.bf16.msra.mxu0 0
          %2526 = vmatprep.mubr.bf16.mxu0 0
          %2527 = vmatmul.mubr.bf16.gmra.mxu0 %v2493
          %v2528 = vpop.f32.mrf.mxu0
          %v2529 = vadd.f32 0.0, %v2528
          %v2530 = vpop.f32.mrf.mxu0
          %v2531 = vadd.f32 0.0, %v2530
          %v2532 = vpop.f32.mrf.mxu0
          %v2533 = vpop.f32.mrf.mxu0
          %2534 = vdwg.mxu0
          %2535 = vmatprep.subr.bf16.mxu0 %v1593
          %2536 = vmatpush1.bf16.msra.mxu0 %v1592
          %2537 = vmatprep.subr.bf16.mxu0 %v1589
          %2538 = vmatpush1.bf16.msra.mxu0 %v1588
          %2539 = vmatprep.subr.bf16.mxu0 %v1585
          %2540 = vmatpush1.bf16.msra.mxu0 %v1584
          %2541 = vmatprep.subr.bf16.mxu0 %v1581
          %2542 = vmatpush1.bf16.msra.mxu0 %v1580
          %2543 = vmatprep.subr.bf16.mxu0 %v1577
          %2544 = vmatpush1.bf16.msra.mxu0 %v1576
          %2545 = vmatprep.subr.bf16.mxu0 %v1573
          %2546 = vmatpush1.bf16.msra.mxu0 %v1572
          %2547 = vmatprep.subr.bf16.mxu0 %v1569
          %2548 = vmatpush1.bf16.msra.mxu0 %v1568
          %2549 = vmatprep.subr.bf16.mxu0 %v1565
          %2550 = vmatpush1.bf16.msra.mxu0 %v1564
          %2551 = vmatprep.subr.bf16.mxu0 0
          %2552 = vmatpush2.bf16.msra.mxu0 0
          %2553 = vmatprep.subr.bf16.mxu0 0
          %2554 = vmatpush2.bf16.msra.mxu0 0
          %2555 = vmatprep.subr.bf16.mxu0 0
          %2556 = vmatpush2.bf16.msra.mxu0 0
          %2557 = vmatprep.subr.bf16.mxu0 0
          %2558 = vmatpush2.bf16.msra.mxu0 0
          %2559 = vmatprep.subr.bf16.mxu0 0
          %2560 = vmatpush2.bf16.msra.mxu0 0
          %2561 = vmatprep.subr.bf16.mxu0 0
          %2562 = vmatpush2.bf16.msra.mxu0 0
          %2563 = vmatprep.subr.bf16.mxu0 0
          %2564 = vmatpush2.bf16.msra.mxu0 0
          %2565 = vmatprep.subr.bf16.mxu0 0
          %2566 = vmatpush2.bf16.msra.mxu0 0
          %2567 = vmatprep.mubr.bf16.mxu0 0
          %2568 = vmatmul.mubr.bf16.gmra.mxu0 %v2493
          %v2569 = vpop.f32.mrf.mxu0
          %v2570 = vadd.f32 0.0, %v2569
          %v2571 = vpop.f32.mrf.mxu0
          %v2572 = vadd.f32 0.0, %v2571
          %v2573 = vpop.f32.mrf.mxu0
          %v2574 = vpop.f32.mrf.mxu0
          %2575 = vdwg.mxu0
          %v2576 = vadd.f32 %v2489, %v2529
          %v2577 = vadd.f32 %v2490, %v2531
          %v2578 = vadd.f32 %v2491, %v2570
          %v2579 = vadd.f32 %v2492, %v2572
          %v2580 = vxor.u32 %v2576, 2147483648
          %v2581 = vmul.f32 %v2580, 1.442695
          %v2582 = vpow.pop %v2581
          %v2583 = vadd.f32 %v2582, 1.0
          %v2584 = vrcp.pop %v2583
          %v2585 = vmul.f32 1.0, %v2584
          %v2586 = vxor.u32 %v2577, 2147483648
          %v2587 = vmul.f32 %v2586, 1.442695
          %v2588 = vpow.pop %v2587
          %v2589 = vadd.f32 %v2588, 1.0
          %v2590 = vrcp.pop %v2589
          %v2591 = vmul.f32 1.0, %v2590
          %v2592 = vtanh.pop %v2578
          %v2593 = vxor.u32 %v2579, 2147483648
          %v2594 = vmul.f32 %v2593, 1.442695
          %v2595 = vpow.pop %v2594
          %v2596 = vadd.f32 %v2595, 1.0
          %v2597 = vrcp.pop %v2596
          %v2598 = vmul.f32 1.0, %v2597
          %v2599 = vmul.f32 %v2591, %v2477
          %v2600 = vmul.f32 %v2585, %v2592
          %v2601 = vadd.f32 %v2599, %v2600
          %v2602 = vtanh.pop %v2601
          %v2603 = vmul.f32 %v2598, %v2602
          %v2604 = vrot.slane %v2603, 4
          %v2605 = vadd.f32 %v2603, %v2604
          %v2606 = vrot.slane %v2605, 2
          %v2607 = vadd.f32 %v2605, %v2606
          %v2608 = vrot.slane %v2607, 1
          %v2609 = vadd.f32 %v2607, %v2608
          %2610 = vst [vmem:[#allocation2] sm:$0xff] %v2603
          %2611 = vst [vmem:[#allocation3] sm:$0xff] %v2601
          %vm2612 = vcmask 1040384
          %v2613 = vsel %vm2612, %v1741, %v1865
          %vm2614 = vcmask 1041408
          %v2615 = vsel %vm2614, %v2613, %v1989
          %vm2616 = vcmask 1042432
          %v2617 = vsel %vm2616, %v2615, %v2113
          %vm2618 = vcmask 1043456
          %v2619 = vsel %vm2618, %v2617, %v2237
          %vm2620 = vcmask 1044480
          %v2621 = vsel %vm2620, %v2619, %v2361
          %vm2622 = vcmask 1045504
          %v2623 = vsel %vm2622, %v2621, %v2485
          %vm2624 = vcmask 1046528
          %v2625 = vsel %vm2624, %v2623, %v2609
          %2626 = vst [vmem:[%s193] sm:$0xff] %v2625
        $region89: #{deepfake_detector_forward.3} parent=42 // pred_fallthru
          _
        %p2627 = scmp.lt.s32.totalorder %s17, 1
        %s2628 = scalar_select %p2627, %s17, 1
        %p2629 = scmp.lt.s32.totalorder %s18, 1
        %s2630 = scalar_select %p2629, %s18, 1
        %s2631 = smul.addr %s2628, 2
        %s2632 = sadd.s32 %s2630, %s2631
        %s2633 = smul.addr %s2632, 8
        %s2634 = scalar_lea.vmem %s2, %s2633
        // Predicated region
        $region90: #{deepfake_detector_forward.3} parent=42 // pred_check
          %p2635 = pneg %p73
        $region91: #{deepfake_detector_forward.3} parent=42 // pred_check_branch
          %2637 = sbr.rel (%p2635) target = $region93
        $region92: #{deepfake_detector_forward.3} parent=42 // pred_region
          _
        $region93: #{deepfake_detector_forward.3} parent=42 // pred_fallthru
          _
      $region43: #{deepfake_detector_forward.3} parent=5 // pred_fallthru
        _
      %p2638 = scmp.le.s32.totalorder 2, %s8
      // Predicated region
      $region94: #{deepfake_detector_forward.3} parent=5 // pred_check
        %p2639 = pneg %p2638
      $region95: #{deepfake_detector_forward.3} parent=5 // pred_check_branch
        %2641 = sbr.rel (%p2639) target = $region97
      $region96: #{deepfake_detector_forward.3} parent=5 // pred_region
        %s2642 = ssub.s32 %s8, 2
        // Predicated region
        $region98: #{deepfake_detector_forward.3} parent=96 // pred_check
          %p2643 = pneg %p79
        $region99: #{deepfake_detector_forward.3} parent=96 // pred_check_branch
          %2645 = sbr.rel (%p2643) target = $region101
        $region100: #{deepfake_detector_forward.3} parent=96 // pred_region
          %p2646 = scmp.lt.s32.totalorder %s19, 1
          %s2647 = scalar_select %p2646, %s19, 1
          %p2648 = scmp.lt.s32.totalorder %s20, 1
          %s2649 = scalar_select %p2648, %s20, 1
          %s2650 = smul.addr %s2647, 2
          %s2651 = sadd.s32 %s2649, %s2650
          %s2652 = smul.addr %s2651, 8
          %s2653 = scalar_lea.vmem %s2, %s2652
        $region101: #{deepfake_detector_forward.3} parent=96 // pred_fallthru
          _
      $region97: #{deepfake_detector_forward.3} parent=5 // pred_fallthru
        _
    $region6: #{deepfake_detector_forward.3} parent=1 // loop_footer
      %s12 = sadd.s32 1, %s8
    $region7: #{deepfake_detector_forward.3} parent=1 // loop_footer_branch
      %7 = sbr.rel target = $region3
    $region8: #{deepfake_detector_forward.3} parent=1 // loop_exit
      _
  %2654 = vsyncmov [#allocation5]
  %s2655 = vpop.sfrf %2654
  %p2656 = scmp.eq.s32.totalorder %s2655, 0
  %p2657 = pneg %p2656
  %2659 = shalt.err (%p2657)

</llo_original>
